<compile_context>
chip_gen: v7x
topology: tpu7x:2x2x1
jax: 0.10.0
libtpu: 0.0.40
codegen_flags: <defaults>
</compile_context>

<pallas_src>
import jax
import jax.numpy as jnp
from jax.experimental import pallas as pl
from jax.experimental.pallas import tpu as pltpu

VMEM_SPEC = pl.BlockSpec(memory_space=pltpu.MemorySpace.VMEM)
BN_EPS = 1e-5
C_PAD = 128  # lane-dense channel padding


# ----------------------------- Pallas kernels ------------------------------

def _make_layer_kernel(do_relu: bool, has_residual: bool, has_shortcut: bool,
                       m_rows: int):
    """Fused conv-as-GEMM + BatchNorm(batch stats) [+res] [+1x1 shortcut GEMM] [+ReLU]."""
    inv_m = 1.0 / m_rows

    def kernel(*refs):
        it = iter(refs)
        p_ref = next(it)          # (M, Kp)    bf16 im2col patches
        w_ref = next(it)          # (Kp, 128)  bf16 conv weight (kernel-ready)
        g_ref = next(it)          # (1, 128)   f32 BN gamma (0 on padded lanes)
        b_ref = next(it)          # (1, 128)   f32 BN beta
        r_ref = next(it) if has_residual else None
        if has_shortcut:
            ps_ref = next(it)     # (M, 128)   bf16 shortcut (1x1, strided) patches
            ws_ref = next(it)     # (128, 128) bf16 shortcut weight
            bs_ref = next(it)     # (1, 128)   f32 shortcut conv bias
        o_ref = next(it)

        # conv as GEMM: bf16 operands, f32 accumulation on the MXU.
        y = jnp.dot(p_ref[...], w_ref[...], preferred_element_type=jnp.float32)

        # single-pass BatchNorm statistics over the M = N*H*W rows (training mode,
        # biased variance — matches a freshly constructed nn.BatchNorm2d).
        mean = jnp.sum(y, axis=0, keepdims=True) * inv_m
        var = jnp.sum(y * y, axis=0, keepdims=True) * inv_m - mean * mean
        out = (y - mean) * jax.lax.rsqrt(var + BN_EPS) * g_ref[...] + b_ref[...]

        if has_residual:
            out = out + r_ref[...].astype(jnp.float32)
        if has_shortcut:
            sc = jnp.dot(ps_ref[...], ws_ref[...],
                         preferred_element_type=jnp.float32) + bs_ref[...]
            out = out + sc
        if do_relu:
            out = jnp.maximum(out, 0.0)
        o_ref[...] = out.astype(o_ref.dtype)

    return kernel


def _maxpool_kernel(p_ref, o_ref):
    # p: (M, k*k, C) -> max over the window axis (f32 math, bf16 store).
    o_ref[...] = jnp.max(p_ref[...].astype(jnp.float32), axis=1).astype(o_ref.dtype)


def _gap_fc_kernel(pool_ref, x_ref, w_ref, b_ref, o_ref):
    # Global average pool as a tiny pooling matmul, fused with the final Linear.
    gap = jnp.dot(pool_ref[...], x_ref[...], preferred_element_type=jnp.float32)
    o_ref[...] = (jnp.dot(gap.astype(jnp.bfloat16), w_ref[...],
                          preferred_element_type=jnp.float32) + b_ref[...])


# ----------------------------- wrappers (glue) ------------------------------

def _extract_patches(xp, k, stride, ho, wo):
    # xp: (N, Hp, Wp, C) -> (N, ho, wo, k*k, C); cheap XLA strided slices.
    n, _, _, c = xp.shape
    cols = []
    for i in range(k):
        for j in range(k):
            cols.append(jax.lax.slice(
                xp, (0, i, j, 0),
                (n, i + stride * (ho - 1) + 1, j + stride * (wo - 1) + 1, c),
                (1, stride, stride, 1)))
    return jnp.stack(cols, axis=3)


def fused_conv_bn(x_nhwc, w_kc, gamma, beta, *, k, stride, pad, relu,
                  residual=None, shortcut=None):
    """One pallas_call: im2col GEMM + BN [+ residual] [+ shortcut GEMM] [+ ReLU]."""
    n, h, wd, c = x_nhwc.shape
    ho = (h + 2 * pad - k) // stride + 1
    wo = (wd + 2 * pad - k) // stride + 1
    m = n * ho * wo
    xp = jnp.pad(x_nhwc, ((0, 0), (pad, pad), (pad, pad), (0, 0)))
    patches = _extract_patches(xp, k, stride, ho, wo).reshape(m, k * k * c)
    kp = w_kc.shape[0]
    if patches.shape[1] != kp:                      # pad K to a multiple of 128
        patches = jnp.pad(patches, ((0, 0), (0, kp - patches.shape[1])))
    patches = patches.astype(jnp.bfloat16)

    args = [patches, w_kc, gamma, beta]
    if residual is not None:
        args.append(residual.reshape(m, C_PAD))
    if shortcut is not None:
        args.extend(shortcut)                       # (patches_sc, w_sc, b_sc)

    # Shapes are tiny -> single full-array VMEM block, no grid.
    # TODO(synk): at larger batch/resolution add a grid over M (>=512-row tiles,
    # dimension_semantics=("parallel",...)) and set vmem_limit_bytes for v7x's 64 MiB.
    out = pl.pallas_call(
        _make_layer_kernel(relu, residual is not None, shortcut is not None, m),
        out_shape=jax.ShapeDtypeStruct((m, C_PAD), jnp.bfloat16),
        in_specs=[VMEM_SPEC] * len(args),
        out_specs=VMEM_SPEC,
    )(*args)
    return out.reshape(n, ho, wo, C_PAD)


def maxpool(x_nhwc, *, k, stride, pad):
    n, h, wd, c = x_nhwc.shape
    ho = (h + 2 * pad - k) // stride + 1
    wo = (wd + 2 * pad - k) // stride + 1
    m = n * ho * wo
    xp = jnp.pad(x_nhwc, ((0, 0), (pad, pad), (pad, pad), (0, 0)),
                 constant_values=-jnp.inf)          # padding never wins the max
    patches = _extract_patches(xp, k, stride, ho, wo).reshape(m, k * k, c)
    out = pl.pallas_call(
        _maxpool_kernel,
        out_shape=jax.ShapeDtypeStruct((m, c), x_nhwc.dtype),
        in_specs=[VMEM_SPEC], out_specs=VMEM_SPEC,
    )(patches)
    return out.reshape(n, ho, wo, c)


def gap_fc(x_nhwc, fc_w, fc_b, out_channels):
    n, h, wd, c = x_nhwc.shape
    hw = h * wd
    x2 = x_nhwc.reshape(n * hw, c)
    # (n, n*hw) averaging matrix; constant-folded by XLA.
    pool = (jnp.repeat(jnp.eye(n, dtype=jnp.float32), hw, axis=1) / hw
            ).astype(jnp.bfloat16)
    out = pl.pallas_call(
        _gap_fc_kernel,
        out_shape=jax.ShapeDtypeStruct((n, C_PAD), jnp.float32),
        in_specs=[VMEM_SPEC] * 4, out_specs=VMEM_SPEC,
    )(pool, x2, fc_w, fc_b)
    return out[:, :out_channels]


# ----------------------------- model ------------------------------

def res_block(x, p, use_1x1conv, stride):
    y = fused_conv_bn(x, p["w1"], p["g1"], p["be1"],
                      k=3, stride=stride, pad=1, relu=True)
    if use_1x1conv:
        # 1x1 stride-s shortcut conv: its "patches" are just the strided subsample.
        ps = x[:, ::stride, ::stride, :].reshape(-1, C_PAD)
        return fused_conv_bn(y, p["w2"], p["g2"], p["be2"],
                             k=3, stride=1, pad=1, relu=True,
                             shortcut=(ps, p["w3"], p["b3"]))
    return fused_conv_bn(y, p["w2"], p["g2"], p["be2"],
                         k=3, stride=1, pad=1, relu=True, residual=x)


def resnet_forward(x_nchw, params, out_channels):
    x = jnp.transpose(x_nchw, (0, 2, 3, 1)).astype(jnp.bfloat16)  # NCHW -> NHWC
    y = fused_conv_bn(x, params["conv1_w"], params["bn1_g"], params["bn1_b"],
                      k=7, stride=2, pad=3, relu=True)
    y = maxpool(y, k=3, stride=2, pad=1)
    y = res_block(y, params["res1"], use_1x1conv=False, stride=1)
    y = res_block(y, params["res2"], use_1x1conv=True, stride=2)
    return gap_fc(y, params["fc_w"], params["fc_b"], out_channels)


# ----------------------------- params (kernel-ready) ------------------------------

def init_params(key, in_channels, out_channels):
    ks = iter(jax.random.split(key, 16))

    def conv_w(kh, kw, cin, cout):
        return jax.random.normal(next(ks), (kh, kw, cin, cout), jnp.float32) * 0.05

    def bias(c):
        return jax.random.normal(next(ks), (c,), jnp.float32) * 0.01

    def prep_conv_w(w, cin_pad):
        # (kh,kw,cin,cout) f32 -> kernel-ready (Kp, 128) bf16, zero-padded on
        # Cin (to match the 128-padded activations), Cout and K (K % 128 == 0).
        kh, kw, cin, cout = w.shape
        w = jnp.pad(w, ((0, 0), (0, 0), (0, cin_pad - cin), (0, C_PAD - cout)))
        w = w.reshape(kh * kw * cin_pad, C_PAD)
        kp = -(-w.shape[0] // 128) * 128
        w = jnp.pad(w, ((0, kp - w.shape[0]), (0, 0)))
        return w.astype(jnp.bfloat16)

    def bn_params(c):
        # gamma=1 / beta=0 on real channels, 0 on padded lanes (keeps them 0).
        g = jnp.pad(jnp.ones((1, c), jnp.float32), ((0, 0), (0, C_PAD - c)))
        return g, jnp.zeros((1, C_PAD), jnp.float32)

    def pad_row(v):
        return jnp.pad(v.reshape(1, -1), ((0, 0), (0, C_PAD - v.shape[0])))

    g1, b1 = bn_params(32)
    r1g1, r1b1 = bn_params(32)
    r1g2, r1b2 = bn_params(32)
    r2g1, r2b1 = bn_params(64)
    r2g2, r2b2 = bn_params(64)

    # NOTE: biases of convs followed by BatchNorm are omitted — they are exactly
    # cancelled by the BN mean subtraction, so the forward pass is unchanged.
    return {
        "conv1_w": prep_conv_w(conv_w(7, 7, in_channels, 32), cin_pad=in_channels),
        "bn1_g": g1, "bn1_b": b1,
        "res1": {
            "w1": prep_conv_w(conv_w(3, 3, 32, 32), cin_pad=C_PAD),
            "w2": prep_conv_w(conv_w(3, 3, 32, 32), cin_pad=C_PAD),
            "g1": r1g1, "be1": r1b1, "g2": r1g2, "be2": r1b2,
        },
        "res2": {
            "w1": prep_conv_w(conv_w(3, 3, 32, 64), cin_pad=C_PAD),
            "w2": prep_conv_w(conv_w(3, 3, 64, 64), cin_pad=C_PAD),
            "w3": prep_conv_w(conv_w(1, 1, 32, 64), cin_pad=C_PAD),
            "b3": pad_row(bias(64)),   # shortcut conv bias (no BN follows it)
            "g1": r2g1, "be1": r2b1, "g2": r2g2, "be2": r2b2,
        },
        # FC weight pre-transposed, padded and cast at init time.
        "fc_w": jnp.pad(
            (jax.random.normal(next(ks), (out_channels, 64), jnp.float32) * 0.05).T,
            ((0, C_PAD - 64), (0, C_PAD - out_channels))).astype(jnp.bfloat16),
        "fc_b": pad_row(bias(out_channels)),
    }


# TODO(synk): BatchNorm running-mean/var buffers (momentum bookkeeping) are not
# tracked; the forward uses batch statistics, matching nn.Module's default
# training mode.

if __name__ == "__main__":
    key = jax.random.PRNGKey(0)
    k_param, k_x = jax.random.split(key)
    in_channels, out_channels = 4, 10
    x = jax.random.normal(k_x, (2, in_channels, 16, 16), jnp.float32)  # NCHW
    params = init_params(k_param, in_channels, out_channels)

    fwd = jax.jit(resnet_forward, static_argnames="out_channels")
    out = fwd(x, params, out_channels=out_channels)
    jax.block_until_ready(out)
    assert out.shape == (2, out_channels), out.shape
    assert jnp.all(jnp.isfinite(out))
    print("KERNEL_OK")
</pallas_src>

<mosaic_0001>
module attributes {stable_mosaic.version = 11 : i64} {
  func.func @kernel(%arg0: memref<128x256xbf16, #tpu.memory_space<vmem>>, %arg1: memref<256x128xbf16, #tpu.memory_space<vmem>>, %arg2: memref<1x128xf32, #tpu.memory_space<vmem>>, %arg3: memref<1x128xf32, #tpu.memory_space<vmem>>, %arg4: memref<128x128xbf16, #tpu.memory_space<vmem>>) attributes {dimension_semantics = [], scalar_prefetch = 0 : i64, scratch_operands = 0 : i64, tpu.core_type = #tpu.core_type<tc>} {
    %c0 = arith.constant 0 : index
    %c0_0 = arith.constant 0 : index
    %0 = vector.load %arg0[%c0, %c0_0] : memref<128x256xbf16, #tpu.memory_space<vmem>>, vector<128x256xbf16>
    %c0_1 = arith.constant 0 : index
    %c0_2 = arith.constant 0 : index
    %1 = vector.load %arg1[%c0_1, %c0_2] : memref<256x128xbf16, #tpu.memory_space<vmem>>, vector<256x128xbf16>
    %cst = arith.constant dense<0.000000e+00> : vector<128x128xf32>
    %2 = tpu.matmul %0, %1, %cst {dimension_numbers = #tpu.dot_dimension_numbers<[1], [0], [0], [1], [0, 0, 1, 1], [], []>} : vector<128x256xbf16>, vector<256x128xbf16>, vector<128x128xf32> -> vector<128x128xf32>
    %cst_3 = arith.constant dense<0.000000e+00> : vector<128xf32>
    %3 = vector.multi_reduction <add>, %2, %cst_3 [0] : vector<128x128xf32> to vector<128xf32>
    %4 = vector.shape_cast %3 : vector<128xf32> to vector<1x128xf32>
    %cst_4 = arith.constant 7.812500e-03 : f32
    %5 = vector.broadcast %cst_4 : f32 to vector<1x128xf32>
    %6 = arith.mulf %4, %5 : vector<1x128xf32>
    %7 = arith.mulf %2, %2 : vector<128x128xf32>
    %cst_5 = arith.constant dense<0.000000e+00> : vector<128xf32>
    %8 = vector.multi_reduction <add>, %7, %cst_5 [0] : vector<128x128xf32> to vector<128xf32>
    %9 = vector.shape_cast %8 : vector<128xf32> to vector<1x128xf32>
    %cst_6 = arith.constant 7.812500e-03 : f32
    %10 = vector.broadcast %cst_6 : f32 to vector<1x128xf32>
    %11 = arith.mulf %9, %10 : vector<1x128xf32>
    %12 = arith.mulf %6, %6 : vector<1x128xf32>
    %13 = arith.subf %11, %12 : vector<1x128xf32>
    %14 = vector.broadcast %6 : vector<1x128xf32> to vector<128x128xf32>
    %15 = arith.subf %2, %14 : vector<128x128xf32>
    %cst_7 = arith.constant 9.99999974E-6 : f32
    %16 = vector.broadcast %cst_7 : f32 to vector<1x128xf32>
    %17 = arith.addf %13, %16 : vector<1x128xf32>
    %18 = math.rsqrt %17 : vector<1x128xf32>
    %19 = vector.broadcast %18 : vector<1x128xf32> to vector<128x128xf32>
    %20 = arith.mulf %15, %19 : vector<128x128xf32>
    %c0_8 = arith.constant 0 : index
    %c0_9 = arith.constant 0 : index
    %21 = vector.load %arg2[%c0_8, %c0_9] : memref<1x128xf32, #tpu.memory_space<vmem>>, vector<1x128xf32>
    %22 = vector.broadcast %21 : vector<1x128xf32> to vector<128x128xf32>
    %23 = arith.mulf %20, %22 : vector<128x128xf32>
    %c0_10 = arith.constant 0 : index
    %c0_11 = arith.constant 0 : index
    %24 = vector.load %arg3[%c0_10, %c0_11] : memref<1x128xf32, #tpu.memory_space<vmem>>, vector<1x128xf32>
    %25 = vector.broadcast %24 : vector<1x128xf32> to vector<128x128xf32>
    %26 = arith.addf %23, %25 : vector<128x128xf32>
    %cst_12 = arith.constant 0.000000e+00 : f32
    %27 = vector.broadcast %cst_12 : f32 to vector<128x128xf32>
    %28 = arith.maximumf %26, %27 : vector<128x128xf32>
    %29 = arith.truncf %28 : vector<128x128xf32> to vector<128x128xbf16>
    %c0_13 = arith.constant 0 : index
    %c0_14 = arith.constant 0 : index
    %30 = vector.load %arg4[%c0_13, %c0_14] : memref<128x128xbf16, #tpu.memory_space<vmem>>, vector<128x128xbf16>
    tpu.vector_store %arg4[%c0_13, %c0_14], %29 {strides = array<i32>} : memref<128x128xbf16, #tpu.memory_space<vmem>>, vector<128x128xbf16>,
    return
  }
}

module attributes {stable_mosaic.version = 11 : i64} {
  func.func @_maxpool_kernel(%arg0: memref<32x9x128xbf16, #tpu.memory_space<vmem>>, %arg1: memref<32x128xbf16, #tpu.memory_space<vmem>>) attributes {dimension_semantics = [], scalar_prefetch = 0 : i64, scratch_operands = 0 : i64, tpu.core_type = #tpu.core_type<tc>} {
    %c0 = arith.constant 0 : index
    %c0_0 = arith.constant 0 : index
    %c0_1 = arith.constant 0 : index
    %0 = vector.load %arg0[%c0, %c0_0, %c0_1] : memref<32x9x128xbf16, #tpu.memory_space<vmem>>, vector<32x9x128xbf16>
    %1 = arith.extf %0 : vector<32x9x128xbf16> to vector<32x9x128xf32>
    %cst = arith.constant dense<0xFF800000> : vector<32x128xf32>
    %2 = vector.multi_reduction <maximumf>, %1, %cst [1] : vector<32x9x128xf32> to vector<32x128xf32>
    %3 = arith.truncf %2 : vector<32x128xf32> to vector<32x128xbf16>
    %c0_2 = arith.constant 0 : index
    %c0_3 = arith.constant 0 : index
    %4 = vector.load %arg1[%c0_2, %c0_3] : memref<32x128xbf16, #tpu.memory_space<vmem>>, vector<32x128xbf16>
    tpu.vector_store %arg1[%c0_2, %c0_3], %3 {strides = array<i32>} : memref<32x128xbf16, #tpu.memory_space<vmem>>, vector<32x128xbf16>,
    return
  }
}

module attributes {stable_mosaic.version = 11 : i64} {
  func.func @kernel(%arg0: memref<32x1152xbf16, #tpu.memory_space<vmem>>, %arg1: memref<1152x128xbf16, #tpu.memory_space<vmem>>, %arg2: memref<1x128xf32, #tpu.memory_space<vmem>>, %arg3: memref<1x128xf32, #tpu.memory_space<vmem>>, %arg4: memref<32x128xbf16, #tpu.memory_space<vmem>>) attributes {dimension_semantics = [], scalar_prefetch = 0 : i64, scratch_operands = 0 : i64, tpu.core_type = #tpu.core_type<tc>} {
    %c0 = arith.constant 0 : index
    %c0_0 = arith.constant 0 : index
    %0 = vector.load %arg0[%c0, %c0_0] : memref<32x1152xbf16, #tpu.memory_space<vmem>>, vector<32x1152xbf16>
    %c0_1 = arith.constant 0 : index
    %c0_2 = arith.constant 0 : index
    %1 = vector.load %arg1[%c0_1, %c0_2] : memref<1152x128xbf16, #tpu.memory_space<vmem>>, vector<1152x128xbf16>
    %cst = arith.constant dense<0.000000e+00> : vector<32x128xf32>
    %2 = tpu.matmul %0, %1, %cst {dimension_numbers = #tpu.dot_dimension_numbers<[1], [0], [0], [1], [0, 0, 1, 1], [], []>} : vector<32x1152xbf16>, vector<1152x128xbf16>, vector<32x128xf32> -> vector<32x128xf32>
    %cst_3 = arith.constant dense<0.000000e+00> : vector<128xf32>
    %3 = vector.multi_reduction <add>, %2, %cst_3 [0] : vector<32x128xf32> to vector<128xf32>
    %4 = vector.shape_cast %3 : vector<128xf32> to vector<1x128xf32>
    %cst_4 = arith.constant 3.125000e-02 : f32
    %5 = vector.broadcast %cst_4 : f32 to vector<1x128xf32>
    %6 = arith.mulf %4, %5 : vector<1x128xf32>
    %7 = arith.mulf %2, %2 : vector<32x128xf32>
    %cst_5 = arith.constant dense<0.000000e+00> : vector<128xf32>
    %8 = vector.multi_reduction <add>, %7, %cst_5 [0] : vector<32x128xf32> to vector<128xf32>
    %9 = vector.shape_cast %8 : vector<128xf32> to vector<1x128xf32>
    %cst_6 = arith.constant 3.125000e-02 : f32
    %10 = vector.broadcast %cst_6 : f32 to vector<1x128xf32>
    %11 = arith.mulf %9, %10 : vector<1x128xf32>
    %12 = arith.mulf %6, %6 : vector<1x128xf32>
    %13 = arith.subf %11, %12 : vector<1x128xf32>
    %14 = vector.broadcast %6 : vector<1x128xf32> to vector<32x128xf32>
    %15 = arith.subf %2, %14 : vector<32x128xf32>
    %cst_7 = arith.constant 9.99999974E-6 : f32
    %16 = vector.broadcast %cst_7 : f32 to vector<1x128xf32>
    %17 = arith.addf %13, %16 : vector<1x128xf32>
    %18 = math.rsqrt %17 : vector<1x128xf32>
    %19 = vector.broadcast %18 : vector<1x128xf32> to vector<32x128xf32>
    %20 = arith.mulf %15, %19 : vector<32x128xf32>
    %c0_8 = arith.constant 0 : index
    %c0_9 = arith.constant 0 : index
    %21 = vector.load %arg2[%c0_8, %c0_9] : memref<1x128xf32, #tpu.memory_space<vmem>>, vector<1x128xf32>
    %22 = vector.broadcast %21 : vector<1x128xf32> to vector<32x128xf32>
    %23 = arith.mulf %20, %22 : vector<32x128xf32>
    %c0_10 = arith.constant 0 : index
    %c0_11 = arith.constant 0 : index
    %24 = vector.load %arg3[%c0_10, %c0_11] : memref<1x128xf32, #tpu.memory_space<vmem>>, vector<1x128xf32>
    %25 = vector.broadcast %24 : vector<1x128xf32> to vector<32x128xf32>
    %26 = arith.addf %23, %25 : vector<32x128xf32>
    %cst_12 = arith.constant 0.000000e+00 : f32
    %27 = vector.broadcast %cst_12 : f32 to vector<32x128xf32>
    %28 = arith.maximumf %26, %27 : vector<32x128xf32>
    %29 = arith.truncf %28 : vector<32x128xf32> to vector<32x128xbf16>
    %c0_13 = arith.constant 0 : index
    %c0_14 = arith.constant 0 : index
    %30 = vector.load %arg4[%c0_13, %c0_14] : memref<32x128xbf16, #tpu.memory_space<vmem>>, vector<32x128xbf16>
    tpu.vector_store %arg4[%c0_13, %c0_14], %29 {strides = array<i32>} : memref<32x128xbf16, #tpu.memory_space<vmem>>, vector<32x128xbf16>,
    return
  }
}

module attributes {stable_mosaic.version = 11 : i64} {
  func.func @kernel(%arg0: memref<32x1152xbf16, #tpu.memory_space<vmem>>, %arg1: memref<1152x128xbf16, #tpu.memory_space<vmem>>, %arg2: memref<1x128xf32, #tpu.memory_space<vmem>>, %arg3: memref<1x128xf32, #tpu.memory_space<vmem>>, %arg4: memref<32x128xbf16, #tpu.memory_space<vmem>>, %arg5: memref<32x128xbf16, #tpu.memory_space<vmem>>) attributes {dimension_semantics = [], scalar_prefetch = 0 : i64, scratch_operands = 0 : i64, tpu.core_type = #tpu.core_type<tc>} {
    %c0 = arith.constant 0 : index
    %c0_0 = arith.constant 0 : index
    %0 = vector.load %arg0[%c0, %c0_0] : memref<32x1152xbf16, #tpu.memory_space<vmem>>, vector<32x1152xbf16>
    %c0_1 = arith.constant 0 : index
    %c0_2 = arith.constant 0 : index
    %1 = vector.load %arg1[%c0_1, %c0_2] : memref<1152x128xbf16, #tpu.memory_space<vmem>>, vector<1152x128xbf16>
    %cst = arith.constant dense<0.000000e+00> : vector<32x128xf32>
    %2 = tpu.matmul %0, %1, %cst {dimension_numbers = #tpu.dot_dimension_numbers<[1], [0], [0], [1], [0, 0, 1, 1], [], []>} : vector<32x1152xbf16>, vector<1152x128xbf16>, vector<32x128xf32> -> vector<32x128xf32>
    %cst_3 = arith.constant dense<0.000000e+00> : vector<128xf32>
    %3 = vector.multi_reduction <add>, %2, %cst_3 [0] : vector<32x128xf32> to vector<128xf32>
    %4 = vector.shape_cast %3 : vector<128xf32> to vector<1x128xf32>
    %cst_4 = arith.constant 3.125000e-02 : f32
    %5 = vector.broadcast %cst_4 : f32 to vector<1x128xf32>
    %6 = arith.mulf %4, %5 : vector<1x128xf32>
    %7 = arith.mulf %2, %2 : vector<32x128xf32>
    %cst_5 = arith.constant dense<0.000000e+00> : vector<128xf32>
    %8 = vector.multi_reduction <add>, %7, %cst_5 [0] : vector<32x128xf32> to vector<128xf32>
    %9 = vector.shape_cast %8 : vector<128xf32> to vector<1x128xf32>
    %cst_6 = arith.constant 3.125000e-02 : f32
    %10 = vector.broadcast %cst_6 : f32 to vector<1x128xf32>
    %11 = arith.mulf %9, %10 : vector<1x128xf32>
    %12 = arith.mulf %6, %6 : vector<1x128xf32>
    %13 = arith.subf %11, %12 : vector<1x128xf32>
    %14 = vector.broadcast %6 : vector<1x128xf32> to vector<32x128xf32>
    %15 = arith.subf %2, %14 : vector<32x128xf32>
    %cst_7 = arith.constant 9.99999974E-6 : f32
    %16 = vector.broadcast %cst_7 : f32 to vector<1x128xf32>
    %17 = arith.addf %13, %16 : vector<1x128xf32>
    %18 = math.rsqrt %17 : vector<1x128xf32>
    %19 = vector.broadcast %18 : vector<1x128xf32> to vector<32x128xf32>
    %20 = arith.mulf %15, %19 : vector<32x128xf32>
    %c0_8 = arith.constant 0 : index
    %c0_9 = arith.constant 0 : index
    %21 = vector.load %arg2[%c0_8, %c0_9] : memref<1x128xf32, #tpu.memory_space<vmem>>, vector<1x128xf32>
    %22 = vector.broadcast %21 : vector<1x128xf32> to vector<32x128xf32>
    %23 = arith.mulf %20, %22 : vector<32x128xf32>
    %c0_10 = arith.constant 0 : index
    %c0_11 = arith.constant 0 : index
    %24 = vector.load %arg3[%c0_10, %c0_11] : memref<1x128xf32, #tpu.memory_space<vmem>>, vector<1x128xf32>
    %25 = vector.broadcast %24 : vector<1x128xf32> to vector<32x128xf32>
    %26 = arith.addf %23, %25 : vector<32x128xf32>
    %c0_12 = arith.constant 0 : index
    %c0_13 = arith.constant 0 : index
    %27 = vector.load %arg4[%c0_12, %c0_13] : memref<32x128xbf16, #tpu.memory_space<vmem>>, vector<32x128xbf16>
    %28 = arith.extf %27 : vector<32x128xbf16> to vector<32x128xf32>
    %29 = arith.addf %26, %28 : vector<32x128xf32>
    %cst_14 = arith.constant 0.000000e+00 : f32
    %30 = vector.broadcast %cst_14 : f32 to vector<32x128xf32>
    %31 = arith.maximumf %29, %30 : vector<32x128xf32>
    %32 = arith.truncf %31 : vector<32x128xf32> to vector<32x128xbf16>
    %c0_15 = arith.constant 0 : index
    %c0_16 = arith.constant 0 : index
    %33 = vector.load %arg5[%c0_15, %c0_16] : memref<32x128xbf16, #tpu.memory_space<vmem>>, vector<32x128xbf16>
    tpu.vector_store %arg5[%c0_15, %c0_16], %32 {strides = array<i32>} : memref<32x128xbf16, #tpu.memory_space<vmem>>, vector<32x128xbf16>,
    return
  }
}

module attributes {stable_mosaic.version = 11 : i64} {
  func.func @kernel(%arg0: memref<8x1152xbf16, #tpu.memory_space<vmem>>, %arg1: memref<1152x128xbf16, #tpu.memory_space<vmem>>, %arg2: memref<1x128xf32, #tpu.memory_space<vmem>>, %arg3: memref<1x128xf32, #tpu.memory_space<vmem>>, %arg4: memref<8x128xbf16, #tpu.memory_space<vmem>>) attributes {dimension_semantics = [], scalar_prefetch = 0 : i64, scratch_operands = 0 : i64, tpu.core_type = #tpu.core_type<tc>} {
    %c0 = arith.constant 0 : index
    %c0_0 = arith.constant 0 : index
    %0 = vector.load %arg0[%c0, %c0_0] : memref<8x1152xbf16, #tpu.memory_space<vmem>>, vector<8x1152xbf16>
    %c0_1 = arith.constant 0 : index
    %c0_2 = arith.constant 0 : index
    %1 = vector.load %arg1[%c0_1, %c0_2] : memref<1152x128xbf16, #tpu.memory_space<vmem>>, vector<1152x128xbf16>
    %cst = arith.constant dense<0.000000e+00> : vector<8x128xf32>
    %2 = tpu.matmul %0, %1, %cst {dimension_numbers = #tpu.dot_dimension_numbers<[1], [0], [0], [1], [0, 0, 1, 1], [], []>} : vector<8x1152xbf16>, vector<1152x128xbf16>, vector<8x128xf32> -> vector<8x128xf32>
    %cst_3 = arith.constant dense<0.000000e+00> : vector<128xf32>
    %3 = vector.multi_reduction <add>, %2, %cst_3 [0] : vector<8x128xf32> to vector<128xf32>
    %4 = vector.shape_cast %3 : vector<128xf32> to vector<1x128xf32>
    %cst_4 = arith.constant 1.250000e-01 : f32
    %5 = vector.broadcast %cst_4 : f32 to vector<1x128xf32>
    %6 = arith.mulf %4, %5 : vector<1x128xf32>
    %7 = arith.mulf %2, %2 : vector<8x128xf32>
    %cst_5 = arith.constant dense<0.000000e+00> : vector<128xf32>
    %8 = vector.multi_reduction <add>, %7, %cst_5 [0] : vector<8x128xf32> to vector<128xf32>
    %9 = vector.shape_cast %8 : vector<128xf32> to vector<1x128xf32>
    %cst_6 = arith.constant 1.250000e-01 : f32
    %10 = vector.broadcast %cst_6 : f32 to vector<1x128xf32>
    %11 = arith.mulf %9, %10 : vector<1x128xf32>
    %12 = arith.mulf %6, %6 : vector<1x128xf32>
    %13 = arith.subf %11, %12 : vector<1x128xf32>
    %14 = vector.broadcast %6 : vector<1x128xf32> to vector<8x128xf32>
    %15 = arith.subf %2, %14 : vector<8x128xf32>
    %cst_7 = arith.constant 9.99999974E-6 : f32
    %16 = vector.broadcast %cst_7 : f32 to vector<1x128xf32>
    %17 = arith.addf %13, %16 : vector<1x128xf32>
    %18 = math.rsqrt %17 : vector<1x128xf32>
    %19 = vector.broadcast %18 : vector<1x128xf32> to vector<8x128xf32>
    %20 = arith.mulf %15, %19 : vector<8x128xf32>
    %c0_8 = arith.constant 0 : index
    %c0_9 = arith.constant 0 : index
    %21 = vector.load %arg2[%c0_8, %c0_9] : memref<1x128xf32, #tpu.memory_space<vmem>>, vector<1x128xf32>
    %22 = vector.broadcast %21 : vector<1x128xf32> to vector<8x128xf32>
    %23 = arith.mulf %20, %22 : vector<8x128xf32>
    %c0_10 = arith.constant 0 : index
    %c0_11 = arith.constant 0 : index
    %24 = vector.load %arg3[%c0_10, %c0_11] : memref<1x128xf32, #tpu.memory_space<vmem>>, vector<1x128xf32>
    %25 = vector.broadcast %24 : vector<1x128xf32> to vector<8x128xf32>
    %26 = arith.addf %23, %25 : vector<8x128xf32>
    %cst_12 = arith.constant 0.000000e+00 : f32
    %27 = vector.broadcast %cst_12 : f32 to vector<8x128xf32>
    %28 = arith.maximumf %26, %27 : vector<8x128xf32>
    %29 = arith.truncf %28 : vector<8x128xf32> to vector<8x128xbf16>
    %c0_13 = arith.constant 0 : index
    %c0_14 = arith.constant 0 : index
    %30 = vector.load %arg4[%c0_13, %c0_14] : memref<8x128xbf16, #tpu.memory_space<vmem>>, vector<8x128xbf16>
    tpu.vector_store %arg4[%c0_13, %c0_14], %29 {strides = array<i32>} : memref<8x128xbf16, #tpu.memory_space<vmem>>, vector<8x128xbf16>,
    return
  }
}

module attributes {stable_mosaic.version = 11 : i64} {
  func.func @kernel(%arg0: memref<8x1152xbf16, #tpu.memory_space<vmem>>, %arg1: memref<1152x128xbf16, #tpu.memory_space<vmem>>, %arg2: memref<1x128xf32, #tpu.memory_space<vmem>>, %arg3: memref<1x128xf32, #tpu.memory_space<vmem>>, %arg4: memref<8x128xbf16, #tpu.memory_space<vmem>>, %arg5: memref<128x128xbf16, #tpu.memory_space<vmem>>, %arg6: memref<1x128xf32, #tpu.memory_space<vmem>>, %arg7: memref<8x128xbf16, #tpu.memory_space<vmem>>) attributes {dimension_semantics = [], scalar_prefetch = 0 : i64, scratch_operands = 0 : i64, tpu.core_type = #tpu.core_type<tc>} {
    %c0 = arith.constant 0 : index
    %c0_0 = arith.constant 0 : index
    %0 = vector.load %arg0[%c0, %c0_0] : memref<8x1152xbf16, #tpu.memory_space<vmem>>, vector<8x1152xbf16>
    %c0_1 = arith.constant 0 : index
    %c0_2 = arith.constant 0 : index
    %1 = vector.load %arg1[%c0_1, %c0_2] : memref<1152x128xbf16, #tpu.memory_space<vmem>>, vector<1152x128xbf16>
    %cst = arith.constant dense<0.000000e+00> : vector<8x128xf32>
    %2 = tpu.matmul %0, %1, %cst {dimension_numbers = #tpu.dot_dimension_numbers<[1], [0], [0], [1], [0, 0, 1, 1], [], []>} : vector<8x1152xbf16>, vector<1152x128xbf16>, vector<8x128xf32> -> vector<8x128xf32>
    %cst_3 = arith.constant dense<0.000000e+00> : vector<128xf32>
    %3 = vector.multi_reduction <add>, %2, %cst_3 [0] : vector<8x128xf32> to vector<128xf32>
    %4 = vector.shape_cast %3 : vector<128xf32> to vector<1x128xf32>
    %cst_4 = arith.constant 1.250000e-01 : f32
    %5 = vector.broadcast %cst_4 : f32 to vector<1x128xf32>
    %6 = arith.mulf %4, %5 : vector<1x128xf32>
    %7 = arith.mulf %2, %2 : vector<8x128xf32>
    %cst_5 = arith.constant dense<0.000000e+00> : vector<128xf32>
    %8 = vector.multi_reduction <add>, %7, %cst_5 [0] : vector<8x128xf32> to vector<128xf32>
    %9 = vector.shape_cast %8 : vector<128xf32> to vector<1x128xf32>
    %cst_6 = arith.constant 1.250000e-01 : f32
    %10 = vector.broadcast %cst_6 : f32 to vector<1x128xf32>
    %11 = arith.mulf %9, %10 : vector<1x128xf32>
    %12 = arith.mulf %6, %6 : vector<1x128xf32>
    %13 = arith.subf %11, %12 : vector<1x128xf32>
    %14 = vector.broadcast %6 : vector<1x128xf32> to vector<8x128xf32>
    %15 = arith.subf %2, %14 : vector<8x128xf32>
    %cst_7 = arith.constant 9.99999974E-6 : f32
    %16 = vector.broadcast %cst_7 : f32 to vector<1x128xf32>
    %17 = arith.addf %13, %16 : vector<1x128xf32>
    %18 = math.rsqrt %17 : vector<1x128xf32>
    %19 = vector.broadcast %18 : vector<1x128xf32> to vector<8x128xf32>
    %20 = arith.mulf %15, %19 : vector<8x128xf32>
    %c0_8 = arith.constant 0 : index
    %c0_9 = arith.constant 0 : index
    %21 = vector.load %arg2[%c0_8, %c0_9] : memref<1x128xf32, #tpu.memory_space<vmem>>, vector<1x128xf32>
    %22 = vector.broadcast %21 : vector<1x128xf32> to vector<8x128xf32>
    %23 = arith.mulf %20, %22 : vector<8x128xf32>
    %c0_10 = arith.constant 0 : index
    %c0_11 = arith.constant 0 : index
    %24 = vector.load %arg3[%c0_10, %c0_11] : memref<1x128xf32, #tpu.memory_space<vmem>>, vector<1x128xf32>
    %25 = vector.broadcast %24 : vector<1x128xf32> to vector<8x128xf32>
    %26 = arith.addf %23, %25 : vector<8x128xf32>
    %c0_12 = arith.constant 0 : index
    %c0_13 = arith.constant 0 : index
    %27 = vector.load %arg4[%c0_12, %c0_13] : memref<8x128xbf16, #tpu.memory_space<vmem>>, vector<8x128xbf16>
    %c0_14 = arith.constant 0 : index
    %c0_15 = arith.constant 0 : index
    %28 = vector.load %arg5[%c0_14, %c0_15] : memref<128x128xbf16, #tpu.memory_space<vmem>>, vector<128x128xbf16>
    %cst_16 = arith.constant dense<0.000000e+00> : vector<8x128xf32>
    %29 = tpu.matmul %27, %28, %cst_16 {dimension_numbers = #tpu.dot_dimension_numbers<[1], [0], [0], [1], [0, 0, 1, 1], [], []>} : vector<8x128xbf16>, vector<128x128xbf16>, vector<8x128xf32> -> vector<8x128xf32>
    %c0_17 = arith.constant 0 : index
    %c0_18 = arith.constant 0 : index
    %30 = vector.load %arg6[%c0_17, %c0_18] : memref<1x128xf32, #tpu.memory_space<vmem>>, vector<1x128xf32>
    %31 = vector.broadcast %30 : vector<1x128xf32> to vector<8x128xf32>
    %32 = arith.addf %29, %31 : vector<8x128xf32>
    %33 = arith.addf %26, %32 : vector<8x128xf32>
    %cst_19 = arith.constant 0.000000e+00 : f32
    %34 = vector.broadcast %cst_19 : f32 to vector<8x128xf32>
    %35 = arith.maximumf %33, %34 : vector<8x128xf32>
    %36 = arith.truncf %35 : vector<8x128xf32> to vector<8x128xbf16>
    %c0_20 = arith.constant 0 : index
    %c0_21 = arith.constant 0 : index
    %37 = vector.load %arg7[%c0_20, %c0_21] : memref<8x128xbf16, #tpu.memory_space<vmem>>, vector<8x128xbf16>
    tpu.vector_store %arg7[%c0_20, %c0_21], %36 {strides = array<i32>} : memref<8x128xbf16, #tpu.memory_space<vmem>>, vector<8x128xbf16>,
    return
  }
}

module attributes {stable_mosaic.version = 11 : i64} {
  func.func @_gap_fc_kernel(%arg0: memref<2x8xbf16, #tpu.memory_space<vmem>>, %arg1: memref<8x128xbf16, #tpu.memory_space<vmem>>, %arg2: memref<128x128xbf16, #tpu.memory_space<vmem>>, %arg3: memref<1x128xf32, #tpu.memory_space<vmem>>, %arg4: memref<2x128xf32, #tpu.memory_space<vmem>>) attributes {dimension_semantics = [], scalar_prefetch = 0 : i64, scratch_operands = 0 : i64, tpu.core_type = #tpu.core_type<tc>} {
    %c0 = arith.constant 0 : index
    %c0_0 = arith.constant 0 : index
    %0 = vector.load %arg0[%c0, %c0_0] : memref<2x8xbf16, #tpu.memory_space<vmem>>, vector<2x8xbf16>
    %c0_1 = arith.constant 0 : index
    %c0_2 = arith.constant 0 : index
    %1 = vector.load %arg1[%c0_1, %c0_2] : memref<8x128xbf16, #tpu.memory_space<vmem>>, vector<8x128xbf16>
    %cst = arith.constant dense<0.000000e+00> : vector<2x128xf32>
    %2 = tpu.matmul %0, %1, %cst {dimension_numbers = #tpu.dot_dimension_numbers<[1], [0], [0], [1], [0, 0, 1, 1], [], []>} : vector<2x8xbf16>, vector<8x128xbf16>, vector<2x128xf32> -> vector<2x128xf32>
    %3 = arith.truncf %2 : vector<2x128xf32> to vector<2x128xbf16>
    %c0_3 = arith.constant 0 : index
    %c0_4 = arith.constant 0 : index
    %4 = vector.load %arg2[%c0_3, %c0_4] : memref<128x128xbf16, #tpu.memory_space<vmem>>, vector<128x128xbf16>
    %cst_5 = arith.constant dense<0.000000e+00> : vector<2x128xf32>
    %5 = tpu.matmul %3, %4, %cst_5 {dimension_numbers = #tpu.dot_dimension_numbers<[1], [0], [0], [1], [0, 0, 1, 1], [], []>} : vector<2x128xbf16>, vector<128x128xbf16>, vector<2x128xf32> -> vector<2x128xf32>
    %c0_6 = arith.constant 0 : index
    %c0_7 = arith.constant 0 : index
    %6 = vector.load %arg3[%c0_6, %c0_7] : memref<1x128xf32, #tpu.memory_space<vmem>>, vector<1x128xf32>
    %7 = vector.broadcast %6 : vector<1x128xf32> to vector<2x128xf32>
    %8 = arith.addf %5, %7 : vector<2x128xf32>
    %c0_8 = arith.constant 0 : index
    %c0_9 = arith.constant 0 : index
    %9 = vector.load %arg4[%c0_8, %c0_9] : memref<2x128xf32, #tpu.memory_space<vmem>>, vector<2x128xf32>
    tpu.vector_store %arg4[%c0_8, %c0_9], %8 {strides = array<i32>} : memref<2x128xf32, #tpu.memory_space<vmem>>, vector<2x128xf32>,
    return
  }
}

</mosaic_0001>

<llo_original>
// kernel: resnet_forward.7
$region0: #{resnet_forward.7}
  #allocation0 [shape = 'u32[]', space=smem, size = 0x4, offset = 0x4, fixed_abs, tag = 'smem constant byte address 0x4 - core index']
  #allocation1 [shape = 'u32[144,128]{1,0:T(1,128)}', space=vmem, size = 0x12000, scoped, tag = 'internal scratch']
  %s0 = inlined_call_operand.vmem [shape: bf16[128,256], index: 0, kind: input, shape index: {}]
  %s1 = inlined_call_operand.vmem [shape: bf16[256,128], index: 1, kind: input, shape index: {}]
  %s2 = inlined_call_operand.vmem [shape: f32[1,128], index: 2, kind: input, shape index: {}]
  %s3 = inlined_call_operand.vmem [shape: f32[1,128], index: 3, kind: input, shape index: {}]
  %s4 = inlined_call_operand.vmem [shape: bf16[128,128], index: 4, kind: output, shape index: {}]
  %s5 = sld [smem:[#allocation0]]
  $region26: #{resnet_forward.7} parent=0
    _
  %s7 = ssub.s32 1, %s5
  %s8 = scalar_select 0, %s7, %s5
  // Predicated region
  $region2: #{resnet_forward.7} parent=0 // pred_check
    _
  $region3: #{resnet_forward.7} parent=0 // pred_check_branch
    %10 = sbr.rel (0) target = $region5
  $region4: #{resnet_forward.7} parent=0 // pred_region
    _
  $region5: #{resnet_forward.7} parent=0 // pred_fallthru
    _
  // Predicated region
  $region6: #{resnet_forward.7} parent=0 // pred_check
    _
  $region7: #{resnet_forward.7} parent=0 // pred_check_branch
    %12 = sbr.rel (0) target = $region9
  $region8: #{resnet_forward.7} parent=0 // pred_region
    _
  $region9: #{resnet_forward.7} parent=0 // pred_fallthru
    _
  // Predicated region
  $region10: #{resnet_forward.7} parent=0 // pred_check
    _
  $region11: #{resnet_forward.7} parent=0 // pred_check_branch
    %14 = sbr.rel (0) target = $region13
  $region12: #{resnet_forward.7} parent=0 // pred_region
    _
  $region13: #{resnet_forward.7} parent=0 // pred_fallthru
    _
  // Predicated region
  $region14: #{resnet_forward.7} parent=0 // pred_check
    _
  $region15: #{resnet_forward.7} parent=0 // pred_check_branch
    %16 = sbr.rel (0) target = $region17
  $region16: #{resnet_forward.7} parent=0 // pred_region
    _
  $region17: #{resnet_forward.7} parent=0 // pred_fallthru
    _
  %v18 = vld [vmem:[%s0] sm:$0xff]
  %v19 = vld [vmem:[%s0 + $0x8] sm:$0xff]
  %v20 = vld [vmem:[%s0 + $0x10] sm:$0xff]
  %v21 = vld [vmem:[%s0 + $0x18] sm:$0xff]
  %v22 = vld [vmem:[%s0 + $0x20] sm:$0xff]
  %v23 = vld [vmem:[%s0 + $0x28] sm:$0xff]
  %v24 = vld [vmem:[%s0 + $0x30] sm:$0xff]
  %v25 = vld [vmem:[%s0 + $0x38] sm:$0xff]
  %v26 = vld [vmem:[%s0 + $0x40] sm:$0xff]
  %v27 = vld [vmem:[%s0 + $0x48] sm:$0xff]
  %v28 = vld [vmem:[%s0 + $0x50] sm:$0xff]
  %v29 = vld [vmem:[%s0 + $0x58] sm:$0xff]
  %v30 = vld [vmem:[%s0 + $0x60] sm:$0xff]
  %v31 = vld [vmem:[%s0 + $0x68] sm:$0xff]
  %v32 = vld [vmem:[%s0 + $0x70] sm:$0xff]
  %v33 = vld [vmem:[%s0 + $0x78] sm:$0xff]
  %v34 = vld [vmem:[%s1] sm:$0xf]
  %v35 = vld [vmem:[%s1 + $0x4] sm:$0xf]
  %v36 = vld [vmem:[%s1 + $0x8] sm:$0xf]
  %v37 = vld [vmem:[%s1 + $0xc] sm:$0xf]
  %v38 = vld [vmem:[%s1 + $0x10] sm:$0xf]
  %v39 = vld [vmem:[%s1 + $0x14] sm:$0xf]
  %v40 = vld [vmem:[%s1 + $0x18] sm:$0xf]
  %v41 = vld [vmem:[%s1 + $0x1c] sm:$0xf]
  %v42 = vld [vmem:[%s1 + $0x20] sm:$0xf]
  %v43 = vld [vmem:[%s1 + $0x24] sm:$0xf]
  %v44 = vld [vmem:[%s1 + $0x28] sm:$0xf]
  %v45 = vld [vmem:[%s1 + $0x2c] sm:$0xf]
  %v46 = vld [vmem:[%s1 + $0x30] sm:$0xf]
  %v47 = vld [vmem:[%s1 + $0x34] sm:$0xf]
  %v48 = vld [vmem:[%s1 + $0x38] sm:$0xf]
  %v49 = vld [vmem:[%s1 + $0x3c] sm:$0xf]
  %v50 = vld [vmem:[%s1 + $0x40] sm:$0xf]
  %v51 = vld [vmem:[%s1 + $0x44] sm:$0xf]
  %v52 = vld [vmem:[%s1 + $0x48] sm:$0xf]
  %v53 = vld [vmem:[%s1 + $0x4c] sm:$0xf]
  %v54 = vld [vmem:[%s1 + $0x50] sm:$0xf]
  %v55 = vld [vmem:[%s1 + $0x54] sm:$0xf]
  %v56 = vld [vmem:[%s1 + $0x58] sm:$0xf]
  %v57 = vld [vmem:[%s1 + $0x5c] sm:$0xf]
  %v58 = vld [vmem:[%s1 + $0x60] sm:$0xf]
  %v59 = vld [vmem:[%s1 + $0x64] sm:$0xf]
  %v60 = vld [vmem:[%s1 + $0x68] sm:$0xf]
  %v61 = vld [vmem:[%s1 + $0x6c] sm:$0xf]
  %v62 = vld [vmem:[%s1 + $0x70] sm:$0xf]
  %v63 = vld [vmem:[%s1 + $0x74] sm:$0xf]
  %v64 = vld [vmem:[%s1 + $0x78] sm:$0xf]
  %v65 = vld [vmem:[%s1 + $0x7c] sm:$0xf]
  %v82 = vunpack.c.l.b16 %v18
  %v83 = vunpack.c.h.b16 %v18
  %v84 = vunpack.c.l.b16 %v19
  %v85 = vunpack.c.h.b16 %v19
  %v86 = vunpack.c.l.b16 %v20
  %v87 = vunpack.c.h.b16 %v20
  %v88 = vunpack.c.l.b16 %v21
  %v89 = vunpack.c.h.b16 %v21
  %v90 = vunpack.c.l.b16 %v22
  %v91 = vunpack.c.h.b16 %v22
  %v92 = vunpack.c.l.b16 %v23
  %v93 = vunpack.c.h.b16 %v23
  %v94 = vunpack.c.l.b16 %v24
  %v95 = vunpack.c.h.b16 %v24
  %v96 = vunpack.c.l.b16 %v25
  %v97 = vunpack.c.h.b16 %v25
  %v98 = vunpack.c.l.b16 %v26
  %v99 = vunpack.c.h.b16 %v26
  %v100 = vunpack.c.l.b16 %v27
  %v101 = vunpack.c.h.b16 %v27
  %v102 = vunpack.c.l.b16 %v28
  %v103 = vunpack.c.h.b16 %v28
  %v104 = vunpack.c.l.b16 %v29
  %v105 = vunpack.c.h.b16 %v29
  %v106 = vunpack.c.l.b16 %v30
  %v107 = vunpack.c.h.b16 %v30
  %v108 = vunpack.c.l.b16 %v31
  %v109 = vunpack.c.h.b16 %v31
  %v110 = vunpack.c.l.b16 %v32
  %v111 = vunpack.c.h.b16 %v32
  %v112 = vunpack.c.l.b16 %v33
  %v113 = vunpack.c.h.b16 %v33
  %v114 = vpack.c.b16 %v84, %v82
  %v115 = vpack.c.b16 %v85, %v83
  %v116 = vpack.c.b16 %v88, %v86
  %v117 = vpack.c.b16 %v89, %v87
  %v118 = vpack.c.b16 %v92, %v90
  %v119 = vpack.c.b16 %v93, %v91
  %v120 = vpack.c.b16 %v96, %v94
  %v121 = vpack.c.b16 %v97, %v95
  %v122 = vpack.c.b16 %v100, %v98
  %v123 = vpack.c.b16 %v101, %v99
  %v124 = vpack.c.b16 %v104, %v102
  %v125 = vpack.c.b16 %v105, %v103
  %v126 = vpack.c.b16 %v108, %v106
  %v127 = vpack.c.b16 %v109, %v107
  %v128 = vpack.c.b16 %v112, %v110
  %v129 = vpack.c.b16 %v113, %v111
  %v178 = vunpack.c.l.b16 %v34
  %v179 = vunpack.c.l.b16 %v35
  %v180 = vunpack.c.l.b16 %v36
  %v181 = vunpack.c.l.b16 %v37
  %v182 = vunpack.c.l.b16 %v38
  %v183 = vunpack.c.l.b16 %v39
  %v184 = vunpack.c.l.b16 %v40
  %v185 = vunpack.c.l.b16 %v41
  %v186 = vunpack.c.l.b16 %v42
  %v187 = vunpack.c.l.b16 %v43
  %v188 = vunpack.c.l.b16 %v44
  %v189 = vunpack.c.l.b16 %v45
  %v190 = vunpack.c.l.b16 %v46
  %v191 = vunpack.c.l.b16 %v47
  %v192 = vunpack.c.l.b16 %v48
  %v193 = vunpack.c.l.b16 %v49
  %v194 = vunpack.c.l.b16 %v50
  %v195 = vunpack.c.l.b16 %v51
  %v196 = vunpack.c.l.b16 %v52
  %v197 = vunpack.c.l.b16 %v53
  %v198 = vunpack.c.l.b16 %v54
  %v199 = vunpack.c.l.b16 %v55
  %v200 = vunpack.c.l.b16 %v56
  %v201 = vunpack.c.l.b16 %v57
  %v202 = vunpack.c.l.b16 %v58
  %v203 = vunpack.c.l.b16 %v59
  %v204 = vunpack.c.l.b16 %v60
  %v205 = vunpack.c.l.b16 %v61
  %v206 = vunpack.c.l.b16 %v62
  %v207 = vunpack.c.l.b16 %v63
  %v208 = vunpack.c.l.b16 %v64
  %v209 = vunpack.c.l.b16 %v65
  %v210 = vpack.c.b16 %v179, %v178
  %v211 = vpack.c.b16 %v181, %v180
  %v212 = vpack.c.b16 %v183, %v182
  %v213 = vpack.c.b16 %v185, %v184
  %v214 = vpack.c.b16 %v187, %v186
  %v215 = vpack.c.b16 %v189, %v188
  %v216 = vpack.c.b16 %v191, %v190
  %v217 = vpack.c.b16 %v193, %v192
  %v218 = vpack.c.b16 %v195, %v194
  %v219 = vpack.c.b16 %v197, %v196
  %v220 = vpack.c.b16 %v199, %v198
  %v221 = vpack.c.b16 %v201, %v200
  %v222 = vpack.c.b16 %v203, %v202
  %v223 = vpack.c.b16 %v205, %v204
  %v224 = vpack.c.b16 %v207, %v206
  %v225 = vpack.c.b16 %v209, %v208
  %242 = vmatprep.subr.bf16.mxu0 0
  %243 = vmatpush1.bf16.msra.mxu0 %v210
  %244 = vmatprep.subr.bf16.mxu0 0
  %245 = vmatpush1.bf16.msra.mxu0 %v211
  %246 = vmatprep.subr.bf16.mxu0 0
  %247 = vmatpush1.bf16.msra.mxu0 %v212
  %248 = vmatprep.subr.bf16.mxu0 0
  %249 = vmatpush1.bf16.msra.mxu0 %v213
  %250 = vmatprep.subr.bf16.mxu0 0
  %251 = vmatpush1.bf16.msra.mxu0 %v214
  %252 = vmatprep.subr.bf16.mxu0 0
  %253 = vmatpush1.bf16.msra.mxu0 %v215
  %254 = vmatprep.subr.bf16.mxu0 0
  %255 = vmatpush1.bf16.msra.mxu0 %v216
  %256 = vmatprep.subr.bf16.mxu0 0
  %257 = vmatpush1.bf16.msra.mxu0 %v217
  %258 = vmatprep.subr.bf16.mxu0 0
  %259 = vmatpush1.bf16.msra.mxu0 %v218
  %260 = vmatprep.subr.bf16.mxu0 0
  %261 = vmatpush1.bf16.msra.mxu0 %v219
  %262 = vmatprep.subr.bf16.mxu0 0
  %263 = vmatpush1.bf16.msra.mxu0 %v220
  %264 = vmatprep.subr.bf16.mxu0 0
  %265 = vmatpush1.bf16.msra.mxu0 %v221
  %266 = vmatprep.subr.bf16.mxu0 0
  %267 = vmatpush1.bf16.msra.mxu0 %v222
  %268 = vmatprep.subr.bf16.mxu0 0
  %269 = vmatpush1.bf16.msra.mxu0 %v223
  %270 = vmatprep.subr.bf16.mxu0 0
  %271 = vmatpush1.bf16.msra.mxu0 %v224
  %272 = vmatprep.subr.bf16.mxu0 0
  %273 = vmatpush1.bf16.msra.mxu0 %v225
  %274 = vmatprep.mubr.bf16.mxu0 %v115
  %275 = vmatmul.mubr.bf16.gmra.mrb[0].mxu0 %v114
  %v276 = vpop.f32.mrb[0].mxu0
  %v277 = vadd.f32 0.0, %v276
  %v278 = vpop.f32.mrb[0].mxu0
  %v279 = vpop.f32.mrb[0].mxu0
  %v280 = vadd.f32 0.0, %v279
  %v281 = vpop.f32.mrb[0].mxu0
  %282 = vmatprep.mubr.bf16.mxu0 %v117
  %283 = vmatmul.mubr.bf16.gmra.mrb[0].mxu0 %v116
  %v284 = vpop.f32.mrb[0].mxu0
  %v285 = vadd.f32 0.0, %v284
  %v286 = vpop.f32.mrb[0].mxu0
  %v287 = vpop.f32.mrb[0].mxu0
  %v288 = vadd.f32 0.0, %v287
  %v289 = vpop.f32.mrb[0].mxu0
  %290 = vmatprep.mubr.bf16.mxu0 %v119
  %291 = vmatmul.mubr.bf16.gmra.mrb[0].mxu0 %v118
  %v292 = vpop.f32.mrb[0].mxu0
  %v293 = vadd.f32 0.0, %v292
  %v294 = vpop.f32.mrb[0].mxu0
  %v295 = vpop.f32.mrb[0].mxu0
  %v296 = vadd.f32 0.0, %v295
  %v297 = vpop.f32.mrb[0].mxu0
  %298 = vmatprep.mubr.bf16.mxu0 %v121
  %299 = vmatmul.mubr.bf16.gmra.mrb[0].mxu0 %v120
  %v300 = vpop.f32.mrb[0].mxu0
  %v301 = vadd.f32 0.0, %v300
  %v302 = vpop.f32.mrb[0].mxu0
  %v303 = vpop.f32.mrb[0].mxu0
  %v304 = vadd.f32 0.0, %v303
  %v305 = vpop.f32.mrb[0].mxu0
  %306 = vmatprep.mubr.bf16.mxu0 %v123
  %307 = vmatmul.mubr.bf16.gmra.mrb[0].mxu0 %v122
  %v308 = vpop.f32.mrb[0].mxu0
  %v309 = vadd.f32 0.0, %v308
  %v310 = vpop.f32.mrb[0].mxu0
  %v311 = vpop.f32.mrb[0].mxu0
  %v312 = vadd.f32 0.0, %v311
  %v313 = vpop.f32.mrb[0].mxu0
  %314 = vmatprep.mubr.bf16.mxu0 %v125
  %315 = vmatmul.mubr.bf16.gmra.mrb[0].mxu0 %v124
  %v316 = vpop.f32.mrb[0].mxu0
  %v317 = vadd.f32 0.0, %v316
  %v318 = vpop.f32.mrb[0].mxu0
  %v319 = vpop.f32.mrb[0].mxu0
  %v320 = vadd.f32 0.0, %v319
  %v321 = vpop.f32.mrb[0].mxu0
  %322 = vmatprep.mubr.bf16.mxu0 %v127
  %323 = vmatmul.mubr.bf16.gmra.mrb[0].mxu0 %v126
  %v324 = vpop.f32.mrb[0].mxu0
  %v325 = vadd.f32 0.0, %v324
  %v326 = vpop.f32.mrb[0].mxu0
  %v327 = vpop.f32.mrb[0].mxu0
  %v328 = vadd.f32 0.0, %v327
  %v329 = vpop.f32.mrb[0].mxu0
  %330 = vmatprep.mubr.bf16.mxu0 %v129
  %331 = vmatmul.mubr.bf16.gmra.mrb[0].mxu0 %v128
  %v332 = vpop.f32.mrb[0].mxu0
  %v333 = vadd.f32 0.0, %v332
  %v334 = vpop.f32.mrb[0].mxu0
  %v335 = vpop.f32.mrb[0].mxu0
  %v336 = vadd.f32 0.0, %v335
  %v337 = vpop.f32.mrb[0].mxu0
  %338 = vdwg.mxu0
  %v339 = vadd.f32 %v277, %v280
  %v340 = vadd.f32 %v339, %v285
  %v341 = vadd.f32 %v340, %v288
  %v342 = vadd.f32 %v341, %v293
  %v343 = vadd.f32 %v342, %v296
  %v344 = vadd.f32 %v343, %v301
  %v345 = vadd.f32 %v344, %v304
  %v346 = vadd.f32 %v345, %v309
  %v347 = vadd.f32 %v346, %v312
  %v348 = vadd.f32 %v347, %v317
  %v349 = vadd.f32 %v348, %v320
  %v350 = vadd.f32 %v349, %v325
  %v351 = vadd.f32 %v350, %v328
  %v352 = vadd.f32 %v351, %v333
  %v353 = vadd.f32 %v352, %v336
  %v354 = vrot.slane %v353, 4
  %v355 = vadd.f32 %v353, %v354
  %v356 = vrot.slane %v355, 2
  %v357 = vadd.f32 %v355, %v356
  %v358 = vrot.slane %v357, 1
  %v359 = vadd.f32 %v357, %v358
  %v360 = vmul.f32 %v359, 0.0078125
  %v361 = vmul.f32 %v277, %v277
  %v362 = vmul.f32 %v280, %v280
  %v363 = vmul.f32 %v285, %v285
  %v364 = vmul.f32 %v288, %v288
  %v365 = vmul.f32 %v293, %v293
  %v366 = vmul.f32 %v296, %v296
  %v367 = vmul.f32 %v301, %v301
  %v368 = vmul.f32 %v304, %v304
  %v369 = vmul.f32 %v309, %v309
  %v370 = vmul.f32 %v312, %v312
  %v371 = vmul.f32 %v317, %v317
  %v372 = vmul.f32 %v320, %v320
  %v373 = vmul.f32 %v325, %v325
  %v374 = vmul.f32 %v328, %v328
  %v375 = vmul.f32 %v333, %v333
  %v376 = vmul.f32 %v336, %v336
  %v377 = vadd.f32 %v361, %v362
  %v378 = vadd.f32 %v377, %v363
  %v379 = vadd.f32 %v378, %v364
  %v380 = vadd.f32 %v379, %v365
  %v381 = vadd.f32 %v380, %v366
  %v382 = vadd.f32 %v381, %v367
  %v383 = vadd.f32 %v382, %v368
  %v384 = vadd.f32 %v383, %v369
  %v385 = vadd.f32 %v384, %v370
  %v386 = vadd.f32 %v385, %v371
  %v387 = vadd.f32 %v386, %v372
  %v388 = vadd.f32 %v387, %v373
  %v389 = vadd.f32 %v388, %v374
  %v390 = vadd.f32 %v389, %v375
  %v391 = vadd.f32 %v390, %v376
  %v392 = vrot.slane %v391, 4
  %v393 = vadd.f32 %v391, %v392
  %v394 = vrot.slane %v393, 2
  %v395 = vadd.f32 %v393, %v394
  %v396 = vrot.slane %v395, 1
  %v397 = vadd.f32 %v395, %v396
  %v398 = vmul.f32 %v397, 0.0078125
  %v399 = vmul.f32 %v360, %v360
  %v400 = vsub.f32 %v398, %v399
  %v401 = vsub.f32 %v277, %v360
  %v402 = vsub.f32 %v280, %v360
  %v403 = vsub.f32 %v285, %v360
  %v404 = vsub.f32 %v288, %v360
  %v405 = vsub.f32 %v293, %v360
  %v406 = vsub.f32 %v296, %v360
  %v407 = vsub.f32 %v301, %v360
  %v408 = vsub.f32 %v304, %v360
  %v409 = vsub.f32 %v309, %v360
  %v410 = vsub.f32 %v312, %v360
  %v411 = vsub.f32 %v317, %v360
  %v412 = vsub.f32 %v320, %v360
  %v413 = vsub.f32 %v325, %v360
  %v414 = vsub.f32 %v328, %v360
  %v415 = vsub.f32 %v333, %v360
  %v416 = vsub.f32 %v336, %v360
  %v417 = vadd.f32 %v400, 1e-05
  %v418 = vrsqrt.pop %v417
  %v419 = vmul.f32 %v401, %v418
  %v420 = vmul.f32 %v402, %v418
  %v421 = vmul.f32 %v403, %v418
  %v422 = vmul.f32 %v404, %v418
  %v423 = vmul.f32 %v405, %v418
  %v424 = vmul.f32 %v406, %v418
  %v425 = vmul.f32 %v407, %v418
  %v426 = vmul.f32 %v408, %v418
  %v427 = vmul.f32 %v409, %v418
  %v428 = vmul.f32 %v410, %v418
  %v429 = vmul.f32 %v411, %v418
  %v430 = vmul.f32 %v412, %v418
  %v431 = vmul.f32 %v413, %v418
  %v432 = vmul.f32 %v414, %v418
  %v433 = vmul.f32 %v415, %v418
  %v434 = vmul.f32 %v416, %v418
  %v435 = vld [vmem:[%s2] sm:$0x1]
  %v437 = vlaneseq
  %v438 = vshrl.u32 %v437, 7
  %v439 = vsub.s32 0, %v438
  %v440 = vrot.slane %v435, %v439
  %v442 = vmul.f32 %v419, %v440
  %v443 = vmul.f32 %v420, %v440
  %v444 = vmul.f32 %v421, %v440
  %v445 = vmul.f32 %v422, %v440
  %v446 = vmul.f32 %v423, %v440
  %v447 = vmul.f32 %v424, %v440
  %v448 = vmul.f32 %v425, %v440
  %v449 = vmul.f32 %v426, %v440
  %v450 = vmul.f32 %v427, %v440
  %v451 = vmul.f32 %v428, %v440
  %v452 = vmul.f32 %v429, %v440
  %v453 = vmul.f32 %v430, %v440
  %v454 = vmul.f32 %v431, %v440
  %v455 = vmul.f32 %v432, %v440
  %v456 = vmul.f32 %v433, %v440
  %v457 = vmul.f32 %v434, %v440
  %v458 = vld [vmem:[%s3] sm:$0x1]
  %v460 = vlaneseq
  %v461 = vshrl.u32 %v460, 7
  %v462 = vsub.s32 0, %v461
  %v463 = vrot.slane %v458, %v462
  %v465 = vadd.f32 %v442, %v463
  %v466 = vadd.f32 %v443, %v463
  %v467 = vadd.f32 %v444, %v463
  %v468 = vadd.f32 %v445, %v463
  %v469 = vadd.f32 %v446, %v463
  %v470 = vadd.f32 %v447, %v463
  %v471 = vadd.f32 %v448, %v463
  %v472 = vadd.f32 %v449, %v463
  %v473 = vadd.f32 %v450, %v463
  %v474 = vadd.f32 %v451, %v463
  %v475 = vadd.f32 %v452, %v463
  %v476 = vadd.f32 %v453, %v463
  %v477 = vadd.f32 %v454, %v463
  %v478 = vadd.f32 %v455, %v463
  %v479 = vadd.f32 %v456, %v463
  %v480 = vadd.f32 %v457, %v463
  %v481 = vmax.f32 %v465, 0.0
  %v482 = vmax.f32 %v466, 0.0
  %v483 = vmax.f32 %v467, 0.0
  %v484 = vmax.f32 %v468, 0.0
  %v485 = vmax.f32 %v469, 0.0
  %v486 = vmax.f32 %v470, 0.0
  %v487 = vmax.f32 %v471, 0.0
  %v488 = vmax.f32 %v472, 0.0
  %v489 = vmax.f32 %v473, 0.0
  %v490 = vmax.f32 %v474, 0.0
  %v491 = vmax.f32 %v475, 0.0
  %v492 = vmax.f32 %v476, 0.0
  %v493 = vmax.f32 %v477, 0.0
  %v494 = vmax.f32 %v478, 0.0
  %v495 = vmax.f32 %v479, 0.0
  %v496 = vmax.f32 %v480, 0.0
  %v497 = vpack.c.bf16 %v482, %v481
  %v498 = vpack.c.bf16 %v484, %v483
  %v499 = vpack.c.bf16 %v486, %v485
  %v500 = vpack.c.bf16 %v488, %v487
  %v501 = vpack.c.bf16 %v490, %v489
  %v502 = vpack.c.bf16 %v492, %v491
  %v503 = vpack.c.bf16 %v494, %v493
  %v504 = vpack.c.bf16 %v496, %v495
  %v513 = vunpack.c.l.b16 %v497
  %v514 = vunpack.c.h.b16 %v497
  %v515 = vunpack.c.l.b16 %v498
  %v516 = vunpack.c.h.b16 %v498
  %v517 = vunpack.c.l.b16 %v499
  %v518 = vunpack.c.h.b16 %v499
  %v519 = vunpack.c.l.b16 %v500
  %v520 = vunpack.c.h.b16 %v500
  %v521 = vunpack.c.l.b16 %v501
  %v522 = vunpack.c.h.b16 %v501
  %v523 = vunpack.c.l.b16 %v502
  %v524 = vunpack.c.h.b16 %v502
  %v525 = vunpack.c.l.b16 %v503
  %v526 = vunpack.c.h.b16 %v503
  %v527 = vunpack.c.l.b16 %v504
  %v528 = vunpack.c.h.b16 %v504
  %v529 = vpack.c.b16 %v513, %v513
  %v530 = vpack.c.b16 %v514, %v514
  %v531 = vpack.c.b16 %v515, %v515
  %v532 = vpack.c.b16 %v516, %v516
  %v533 = vpack.c.b16 %v517, %v517
  %v534 = vpack.c.b16 %v518, %v518
  %v535 = vpack.c.b16 %v519, %v519
  %v536 = vpack.c.b16 %v520, %v520
  %v537 = vpack.c.b16 %v521, %v521
  %v538 = vpack.c.b16 %v522, %v522
  %v539 = vpack.c.b16 %v523, %v523
  %v540 = vpack.c.b16 %v524, %v524
  %v541 = vpack.c.b16 %v525, %v525
  %v542 = vpack.c.b16 %v526, %v526
  %v543 = vpack.c.b16 %v527, %v527
  %v544 = vpack.c.b16 %v528, %v528
  %561 = vst [vmem:[%s4] sm:$0xf] %v529
  %562 = vst [vmem:[%s4 + $0x4] sm:$0xf] %v530
  %563 = vst [vmem:[%s4 + $0x8] sm:$0xf] %v531
  %564 = vst [vmem:[%s4 + $0xc] sm:$0xf] %v532
  %565 = vst [vmem:[%s4 + $0x10] sm:$0xf] %v533
  %566 = vst [vmem:[%s4 + $0x14] sm:$0xf] %v534
  %567 = vst [vmem:[%s4 + $0x18] sm:$0xf] %v535
  %568 = vst [vmem:[%s4 + $0x1c] sm:$0xf] %v536
  %569 = vst [vmem:[%s4 + $0x20] sm:$0xf] %v537
  %570 = vst [vmem:[%s4 + $0x24] sm:$0xf] %v538
  %571 = vst [vmem:[%s4 + $0x28] sm:$0xf] %v539
  %572 = vst [vmem:[%s4 + $0x2c] sm:$0xf] %v540
  %573 = vst [vmem:[%s4 + $0x30] sm:$0xf] %v541
  %574 = vst [vmem:[%s4 + $0x34] sm:$0xf] %v542
  %575 = vst [vmem:[%s4 + $0x38] sm:$0xf] %v543
  %576 = vst [vmem:[%s4 + $0x3c] sm:$0xf] %v544
  // Predicated region
  $region18: #{resnet_forward.7} parent=0 // pred_check
    _
  $region19: #{resnet_forward.7} parent=0 // pred_check_branch
    %578 = sbr.rel (0) target = $region21
  $region20: #{resnet_forward.7} parent=0 // pred_region
    _
  $region21: #{resnet_forward.7} parent=0 // pred_fallthru
    _
  // Predicated region
  $region22: #{resnet_forward.7} parent=0 // pred_check
    _
  $region23: #{resnet_forward.7} parent=0 // pred_check_branch
    %580 = sbr.rel (0) target = $region25
  $region24: #{resnet_forward.7} parent=0 // pred_region
    _
  $region25: #{resnet_forward.7} parent=0 // pred_fallthru
    _

// kernel: resnet_forward.8
$region0: #{resnet_forward.8}
  #allocation0 [shape = 'u32[]', space=smem, size = 0x4, offset = 0x4, fixed_abs, tag = 'smem constant byte address 0x4 - core index']
  #allocation1 [shape = 'u32[144,128]{1,0:T(1,128)}', space=vmem, size = 0x12000, scoped, tag = 'internal scratch']
  %s0 = inlined_call_operand.vmem [shape: bf16[32,9,128], index: 0, kind: input, shape index: {}]
  %s1 = inlined_call_operand.vmem [shape: bf16[32,128], index: 1, kind: output, shape index: {}]
  %s2 = sld [smem:[#allocation0]]
  $region14: #{resnet_forward.8} parent=0
    _
  %s4 = ssub.s32 1, %s2
  %s5 = scalar_select 0, %s4, %s2
  // Predicated region
  $region2: #{resnet_forward.8} parent=0 // pred_check
    _
  $region3: #{resnet_forward.8} parent=0 // pred_check_branch
    %7 = sbr.rel (0) target = $region5
  $region4: #{resnet_forward.8} parent=0 // pred_region
    _
  $region5: #{resnet_forward.8} parent=0 // pred_fallthru
    _
  %v8 = vld [vmem:[%s0] sm:$0xf]
  %v9 = vld [vmem:[%s0 + $0x4] sm:$0x1]
  %v10 = vld [vmem:[%s0 + $0x8] sm:$0xf]
  %v11 = vld [vmem:[%s0 + $0xc] sm:$0x1]
  %v12 = vld [vmem:[%s0 + $0x10] sm:$0xf]
  %v13 = vld [vmem:[%s0 + $0x14] sm:$0x1]
  %v14 = vld [vmem:[%s0 + $0x18] sm:$0xf]
  %v15 = vld [vmem:[%s0 + $0x1c] sm:$0x1]
  %v16 = vld [vmem:[%s0 + $0x20] sm:$0xf]
  %v17 = vld [vmem:[%s0 + $0x24] sm:$0x1]
  %v18 = vld [vmem:[%s0 + $0x28] sm:$0xf]
  %v19 = vld [vmem:[%s0 + $0x2c] sm:$0x1]
  %v20 = vld [vmem:[%s0 + $0x30] sm:$0xf]
  %v21 = vld [vmem:[%s0 + $0x34] sm:$0x1]
  %v22 = vld [vmem:[%s0 + $0x38] sm:$0xf]
  %v23 = vld [vmem:[%s0 + $0x3c] sm:$0x1]
  %v24 = vld [vmem:[%s0 + $0x40] sm:$0xf]
  %v25 = vld [vmem:[%s0 + $0x44] sm:$0x1]
  %v26 = vld [vmem:[%s0 + $0x48] sm:$0xf]
  %v27 = vld [vmem:[%s0 + $0x4c] sm:$0x1]
  %v28 = vld [vmem:[%s0 + $0x50] sm:$0xf]
  %v29 = vld [vmem:[%s0 + $0x54] sm:$0x1]
  %v30 = vld [vmem:[%s0 + $0x58] sm:$0xf]
  %v31 = vld [vmem:[%s0 + $0x5c] sm:$0x1]
  %v32 = vld [vmem:[%s0 + $0x60] sm:$0xf]
  %v33 = vld [vmem:[%s0 + $0x64] sm:$0x1]
  %v34 = vld [vmem:[%s0 + $0x68] sm:$0xf]
  %v35 = vld [vmem:[%s0 + $0x6c] sm:$0x1]
  %v36 = vld [vmem:[%s0 + $0x70] sm:$0xf]
  %v37 = vld [vmem:[%s0 + $0x74] sm:$0x1]
  %v38 = vld [vmem:[%s0 + $0x78] sm:$0xf]
  %v39 = vld [vmem:[%s0 + $0x7c] sm:$0x1]
  %v40 = vld [vmem:[%s0 + $0x80] sm:$0xf]
  %v41 = vld [vmem:[%s0 + $0x84] sm:$0x1]
  %v42 = vld [vmem:[%s0 + $0x88] sm:$0xf]
  %v43 = vld [vmem:[%s0 + $0x8c] sm:$0x1]
  %v44 = vld [vmem:[%s0 + $0x90] sm:$0xf]
  %v45 = vld [vmem:[%s0 + $0x94] sm:$0x1]
  %v46 = vld [vmem:[%s0 + $0x98] sm:$0xf]
  %v47 = vld [vmem:[%s0 + $0x9c] sm:$0x1]
  %v48 = vld [vmem:[%s0 + $0xa0] sm:$0xf]
  %v49 = vld [vmem:[%s0 + $0xa4] sm:$0x1]
  %v50 = vld [vmem:[%s0 + $0xa8] sm:$0xf]
  %v51 = vld [vmem:[%s0 + $0xac] sm:$0x1]
  %v52 = vld [vmem:[%s0 + $0xb0] sm:$0xf]
  %v53 = vld [vmem:[%s0 + $0xb4] sm:$0x1]
  %v54 = vld [vmem:[%s0 + $0xb8] sm:$0xf]
  %v55 = vld [vmem:[%s0 + $0xbc] sm:$0x1]
  %v56 = vld [vmem:[%s0 + $0xc0] sm:$0xf]
  %v57 = vld [vmem:[%s0 + $0xc4] sm:$0x1]
  %v58 = vld [vmem:[%s0 + $0xc8] sm:$0xf]
  %v59 = vld [vmem:[%s0 + $0xcc] sm:$0x1]
  %v60 = vld [vmem:[%s0 + $0xd0] sm:$0xf]
  %v61 = vld [vmem:[%s0 + $0xd4] sm:$0x1]
  %v62 = vld [vmem:[%s0 + $0xd8] sm:$0xf]
  %v63 = vld [vmem:[%s0 + $0xdc] sm:$0x1]
  %v64 = vld [vmem:[%s0 + $0xe0] sm:$0xf]
  %v65 = vld [vmem:[%s0 + $0xe4] sm:$0x1]
  %v66 = vld [vmem:[%s0 + $0xe8] sm:$0xf]
  %v67 = vld [vmem:[%s0 + $0xec] sm:$0x1]
  %v68 = vld [vmem:[%s0 + $0xf0] sm:$0xf]
  %v69 = vld [vmem:[%s0 + $0xf4] sm:$0x1]
  %v70 = vld [vmem:[%s0 + $0xf8] sm:$0xf]
  %v71 = vld [vmem:[%s0 + $0xfc] sm:$0x1]
  %v72 = vunpack.c.l.bf16 %v8
  %v73 = vunpack.c.l.bf16 %v9
  %v74 = vunpack.c.l.bf16 %v10
  %v75 = vunpack.c.l.bf16 %v11
  %v76 = vunpack.c.l.bf16 %v12
  %v77 = vunpack.c.l.bf16 %v13
  %v78 = vunpack.c.l.bf16 %v14
  %v79 = vunpack.c.l.bf16 %v15
  %v80 = vunpack.c.l.bf16 %v16
  %v81 = vunpack.c.l.bf16 %v17
  %v82 = vunpack.c.l.bf16 %v18
  %v83 = vunpack.c.l.bf16 %v19
  %v84 = vunpack.c.l.bf16 %v20
  %v85 = vunpack.c.l.bf16 %v21
  %v86 = vunpack.c.l.bf16 %v22
  %v87 = vunpack.c.l.bf16 %v23
  %v88 = vunpack.c.l.bf16 %v24
  %v89 = vunpack.c.l.bf16 %v25
  %v90 = vunpack.c.l.bf16 %v26
  %v91 = vunpack.c.l.bf16 %v27
  %v92 = vunpack.c.l.bf16 %v28
  %v93 = vunpack.c.l.bf16 %v29
  %v94 = vunpack.c.l.bf16 %v30
  %v95 = vunpack.c.l.bf16 %v31
  %v96 = vunpack.c.l.bf16 %v32
  %v97 = vunpack.c.l.bf16 %v33
  %v98 = vunpack.c.l.bf16 %v34
  %v99 = vunpack.c.l.bf16 %v35
  %v100 = vunpack.c.l.bf16 %v36
  %v101 = vunpack.c.l.bf16 %v37
  %v102 = vunpack.c.l.bf16 %v38
  %v103 = vunpack.c.l.bf16 %v39
  %v104 = vunpack.c.l.bf16 %v40
  %v105 = vunpack.c.l.bf16 %v41
  %v106 = vunpack.c.l.bf16 %v42
  %v107 = vunpack.c.l.bf16 %v43
  %v108 = vunpack.c.l.bf16 %v44
  %v109 = vunpack.c.l.bf16 %v45
  %v110 = vunpack.c.l.bf16 %v46
  %v111 = vunpack.c.l.bf16 %v47
  %v112 = vunpack.c.l.bf16 %v48
  %v113 = vunpack.c.l.bf16 %v49
  %v114 = vunpack.c.l.bf16 %v50
  %v115 = vunpack.c.l.bf16 %v51
  %v116 = vunpack.c.l.bf16 %v52
  %v117 = vunpack.c.l.bf16 %v53
  %v118 = vunpack.c.l.bf16 %v54
  %v119 = vunpack.c.l.bf16 %v55
  %v120 = vunpack.c.l.bf16 %v56
  %v121 = vunpack.c.l.bf16 %v57
  %v122 = vunpack.c.l.bf16 %v58
  %v123 = vunpack.c.l.bf16 %v59
  %v124 = vunpack.c.l.bf16 %v60
  %v125 = vunpack.c.l.bf16 %v61
  %v126 = vunpack.c.l.bf16 %v62
  %v127 = vunpack.c.l.bf16 %v63
  %v128 = vunpack.c.l.bf16 %v64
  %v129 = vunpack.c.l.bf16 %v65
  %v130 = vunpack.c.l.bf16 %v66
  %v131 = vunpack.c.l.bf16 %v67
  %v132 = vunpack.c.l.bf16 %v68
  %v133 = vunpack.c.l.bf16 %v69
  %v134 = vunpack.c.l.bf16 %v70
  %v135 = vunpack.c.l.bf16 %v71
  %vm136 = vcmask 1040384
  %v137 = vsel %vm136, %v73, -inf
  %v138 = vmax.f32 %v72, %v137
  %v139 = vrot.slane %v138, 4
  %v140 = vmax.f32 %v138, %v139
  %v141 = vrot.slane %v140, 2
  %v142 = vmax.f32 %v140, %v141
  %v143 = vrot.slane %v142, 1
  %v144 = vmax.f32 %v142, %v143
  %v145 = vsel %vm136, %v75, -inf
  %v146 = vmax.f32 %v74, %v145
  %v147 = vrot.slane %v146, 4
  %v148 = vmax.f32 %v146, %v147
  %v149 = vrot.slane %v148, 2
  %v150 = vmax.f32 %v148, %v149
  %v151 = vrot.slane %v150, 1
  %v152 = vmax.f32 %v150, %v151
  %v153 = vsel %vm136, %v77, -inf
  %v154 = vmax.f32 %v76, %v153
  %v155 = vrot.slane %v154, 4
  %v156 = vmax.f32 %v154, %v155
  %v157 = vrot.slane %v156, 2
  %v158 = vmax.f32 %v156, %v157
  %v159 = vrot.slane %v158, 1
  %v160 = vmax.f32 %v158, %v159
  %v161 = vsel %vm136, %v79, -inf
  %v162 = vmax.f32 %v78, %v161
  %v163 = vrot.slane %v162, 4
  %v164 = vmax.f32 %v162, %v163
  %v165 = vrot.slane %v164, 2
  %v166 = vmax.f32 %v164, %v165
  %v167 = vrot.slane %v166, 1
  %v168 = vmax.f32 %v166, %v167
  %v169 = vsel %vm136, %v81, -inf
  %v170 = vmax.f32 %v80, %v169
  %v171 = vrot.slane %v170, 4
  %v172 = vmax.f32 %v170, %v171
  %v173 = vrot.slane %v172, 2
  %v174 = vmax.f32 %v172, %v173
  %v175 = vrot.slane %v174, 1
  %v176 = vmax.f32 %v174, %v175
  %v177 = vsel %vm136, %v83, -inf
  %v178 = vmax.f32 %v82, %v177
  %v179 = vrot.slane %v178, 4
  %v180 = vmax.f32 %v178, %v179
  %v181 = vrot.slane %v180, 2
  %v182 = vmax.f32 %v180, %v181
  %v183 = vrot.slane %v182, 1
  %v184 = vmax.f32 %v182, %v183
  %v185 = vsel %vm136, %v85, -inf
  %v186 = vmax.f32 %v84, %v185
  %v187 = vrot.slane %v186, 4
  %v188 = vmax.f32 %v186, %v187
  %v189 = vrot.slane %v188, 2
  %v190 = vmax.f32 %v188, %v189
  %v191 = vrot.slane %v190, 1
  %v192 = vmax.f32 %v190, %v191
  %v193 = vsel %vm136, %v87, -inf
  %v194 = vmax.f32 %v86, %v193
  %v195 = vrot.slane %v194, 4
  %v196 = vmax.f32 %v194, %v195
  %v197 = vrot.slane %v196, 2
  %v198 = vmax.f32 %v196, %v197
  %v199 = vrot.slane %v198, 1
  %v200 = vmax.f32 %v198, %v199
  %v201 = vsel %vm136, %v89, -inf
  %v202 = vmax.f32 %v88, %v201
  %v203 = vrot.slane %v202, 4
  %v204 = vmax.f32 %v202, %v203
  %v205 = vrot.slane %v204, 2
  %v206 = vmax.f32 %v204, %v205
  %v207 = vrot.slane %v206, 1
  %v208 = vmax.f32 %v206, %v207
  %v209 = vsel %vm136, %v91, -inf
  %v210 = vmax.f32 %v90, %v209
  %v211 = vrot.slane %v210, 4
  %v212 = vmax.f32 %v210, %v211
  %v213 = vrot.slane %v212, 2
  %v214 = vmax.f32 %v212, %v213
  %v215 = vrot.slane %v214, 1
  %v216 = vmax.f32 %v214, %v215
  %v217 = vsel %vm136, %v93, -inf
  %v218 = vmax.f32 %v92, %v217
  %v219 = vrot.slane %v218, 4
  %v220 = vmax.f32 %v218, %v219
  %v221 = vrot.slane %v220, 2
  %v222 = vmax.f32 %v220, %v221
  %v223 = vrot.slane %v222, 1
  %v224 = vmax.f32 %v222, %v223
  %v225 = vsel %vm136, %v95, -inf
  %v226 = vmax.f32 %v94, %v225
  %v227 = vrot.slane %v226, 4
  %v228 = vmax.f32 %v226, %v227
  %v229 = vrot.slane %v228, 2
  %v230 = vmax.f32 %v228, %v229
  %v231 = vrot.slane %v230, 1
  %v232 = vmax.f32 %v230, %v231
  %v233 = vsel %vm136, %v97, -inf
  %v234 = vmax.f32 %v96, %v233
  %v235 = vrot.slane %v234, 4
  %v236 = vmax.f32 %v234, %v235
  %v237 = vrot.slane %v236, 2
  %v238 = vmax.f32 %v236, %v237
  %v239 = vrot.slane %v238, 1
  %v240 = vmax.f32 %v238, %v239
  %v241 = vsel %vm136, %v99, -inf
  %v242 = vmax.f32 %v98, %v241
  %v243 = vrot.slane %v242, 4
  %v244 = vmax.f32 %v242, %v243
  %v245 = vrot.slane %v244, 2
  %v246 = vmax.f32 %v244, %v245
  %v247 = vrot.slane %v246, 1
  %v248 = vmax.f32 %v246, %v247
  %v249 = vsel %vm136, %v101, -inf
  %v250 = vmax.f32 %v100, %v249
  %v251 = vrot.slane %v250, 4
  %v252 = vmax.f32 %v250, %v251
  %v253 = vrot.slane %v252, 2
  %v254 = vmax.f32 %v252, %v253
  %v255 = vrot.slane %v254, 1
  %v256 = vmax.f32 %v254, %v255
  %v257 = vsel %vm136, %v103, -inf
  %v258 = vmax.f32 %v102, %v257
  %v259 = vrot.slane %v258, 4
  %v260 = vmax.f32 %v258, %v259
  %v261 = vrot.slane %v260, 2
  %v262 = vmax.f32 %v260, %v261
  %v263 = vrot.slane %v262, 1
  %v264 = vmax.f32 %v262, %v263
  %v265 = vsel %vm136, %v105, -inf
  %v266 = vmax.f32 %v104, %v265
  %v267 = vrot.slane %v266, 4
  %v268 = vmax.f32 %v266, %v267
  %v269 = vrot.slane %v268, 2
  %v270 = vmax.f32 %v268, %v269
  %v271 = vrot.slane %v270, 1
  %v272 = vmax.f32 %v270, %v271
  %v273 = vsel %vm136, %v107, -inf
  %v274 = vmax.f32 %v106, %v273
  %v275 = vrot.slane %v274, 4
  %v276 = vmax.f32 %v274, %v275
  %v277 = vrot.slane %v276, 2
  %v278 = vmax.f32 %v276, %v277
  %v279 = vrot.slane %v278, 1
  %v280 = vmax.f32 %v278, %v279
  %v281 = vsel %vm136, %v109, -inf
  %v282 = vmax.f32 %v108, %v281
  %v283 = vrot.slane %v282, 4
  %v284 = vmax.f32 %v282, %v283
  %v285 = vrot.slane %v284, 2
  %v286 = vmax.f32 %v284, %v285
  %v287 = vrot.slane %v286, 1
  %v288 = vmax.f32 %v286, %v287
  %v289 = vsel %vm136, %v111, -inf
  %v290 = vmax.f32 %v110, %v289
  %v291 = vrot.slane %v290, 4
  %v292 = vmax.f32 %v290, %v291
  %v293 = vrot.slane %v292, 2
  %v294 = vmax.f32 %v292, %v293
  %v295 = vrot.slane %v294, 1
  %v296 = vmax.f32 %v294, %v295
  %v297 = vsel %vm136, %v113, -inf
  %v298 = vmax.f32 %v112, %v297
  %v299 = vrot.slane %v298, 4
  %v300 = vmax.f32 %v298, %v299
  %v301 = vrot.slane %v300, 2
  %v302 = vmax.f32 %v300, %v301
  %v303 = vrot.slane %v302, 1
  %v304 = vmax.f32 %v302, %v303
  %v305 = vsel %vm136, %v115, -inf
  %v306 = vmax.f32 %v114, %v305
  %v307 = vrot.slane %v306, 4
  %v308 = vmax.f32 %v306, %v307
  %v309 = vrot.slane %v308, 2
  %v310 = vmax.f32 %v308, %v309
  %v311 = vrot.slane %v310, 1
  %v312 = vmax.f32 %v310, %v311
  %v313 = vsel %vm136, %v117, -inf
  %v314 = vmax.f32 %v116, %v313
  %v315 = vrot.slane %v314, 4
  %v316 = vmax.f32 %v314, %v315
  %v317 = vrot.slane %v316, 2
  %v318 = vmax.f32 %v316, %v317
  %v319 = vrot.slane %v318, 1
  %v320 = vmax.f32 %v318, %v319
  %v321 = vsel %vm136, %v119, -inf
  %v322 = vmax.f32 %v118, %v321
  %v323 = vrot.slane %v322, 4
  %v324 = vmax.f32 %v322, %v323
  %v325 = vrot.slane %v324, 2
  %v326 = vmax.f32 %v324, %v325
  %v327 = vrot.slane %v326, 1
  %v328 = vmax.f32 %v326, %v327
  %v329 = vsel %vm136, %v121, -inf
  %v330 = vmax.f32 %v120, %v329
  %v331 = vrot.slane %v330, 4
  %v332 = vmax.f32 %v330, %v331
  %v333 = vrot.slane %v332, 2
  %v334 = vmax.f32 %v332, %v333
  %v335 = vrot.slane %v334, 1
  %v336 = vmax.f32 %v334, %v335
  %v337 = vsel %vm136, %v123, -inf
  %v338 = vmax.f32 %v122, %v337
  %v339 = vrot.slane %v338, 4
  %v340 = vmax.f32 %v338, %v339
  %v341 = vrot.slane %v340, 2
  %v342 = vmax.f32 %v340, %v341
  %v343 = vrot.slane %v342, 1
  %v344 = vmax.f32 %v342, %v343
  %v345 = vsel %vm136, %v125, -inf
  %v346 = vmax.f32 %v124, %v345
  %v347 = vrot.slane %v346, 4
  %v348 = vmax.f32 %v346, %v347
  %v349 = vrot.slane %v348, 2
  %v350 = vmax.f32 %v348, %v349
  %v351 = vrot.slane %v350, 1
  %v352 = vmax.f32 %v350, %v351
  %v353 = vsel %vm136, %v127, -inf
  %v354 = vmax.f32 %v126, %v353
  %v355 = vrot.slane %v354, 4
  %v356 = vmax.f32 %v354, %v355
  %v357 = vrot.slane %v356, 2
  %v358 = vmax.f32 %v356, %v357
  %v359 = vrot.slane %v358, 1
  %v360 = vmax.f32 %v358, %v359
  %v361 = vsel %vm136, %v129, -inf
  %v362 = vmax.f32 %v128, %v361
  %v363 = vrot.slane %v362, 4
  %v364 = vmax.f32 %v362, %v363
  %v365 = vrot.slane %v364, 2
  %v366 = vmax.f32 %v364, %v365
  %v367 = vrot.slane %v366, 1
  %v368 = vmax.f32 %v366, %v367
  %v369 = vsel %vm136, %v131, -inf
  %v370 = vmax.f32 %v130, %v369
  %v371 = vrot.slane %v370, 4
  %v372 = vmax.f32 %v370, %v371
  %v373 = vrot.slane %v372, 2
  %v374 = vmax.f32 %v372, %v373
  %v375 = vrot.slane %v374, 1
  %v376 = vmax.f32 %v374, %v375
  %v377 = vsel %vm136, %v133, -inf
  %v378 = vmax.f32 %v132, %v377
  %v379 = vrot.slane %v378, 4
  %v380 = vmax.f32 %v378, %v379
  %v381 = vrot.slane %v380, 2
  %v382 = vmax.f32 %v380, %v381
  %v383 = vrot.slane %v382, 1
  %v384 = vmax.f32 %v382, %v383
  %v385 = vsel %vm136, %v135, -inf
  %v386 = vmax.f32 %v134, %v385
  %v387 = vrot.slane %v386, 4
  %v388 = vmax.f32 %v386, %v387
  %v389 = vrot.slane %v388, 2
  %v390 = vmax.f32 %v388, %v389
  %v391 = vrot.slane %v390, 1
  %v392 = vmax.f32 %v390, %v391
  %v393 = vpack.c.bf16 %v144, %v144
  %v394 = vpack.c.bf16 %v152, %v152
  %v395 = vpack.c.bf16 %v160, %v160
  %v396 = vpack.c.bf16 %v168, %v168
  %v397 = vpack.c.bf16 %v176, %v176
  %v398 = vpack.c.bf16 %v184, %v184
  %v399 = vpack.c.bf16 %v192, %v192
  %v400 = vpack.c.bf16 %v200, %v200
  %v401 = vpack.c.bf16 %v208, %v208
  %v402 = vpack.c.bf16 %v216, %v216
  %v403 = vpack.c.bf16 %v224, %v224
  %v404 = vpack.c.bf16 %v232, %v232
  %v405 = vpack.c.bf16 %v240, %v240
  %v406 = vpack.c.bf16 %v248, %v248
  %v407 = vpack.c.bf16 %v256, %v256
  %v408 = vpack.c.bf16 %v264, %v264
  %v409 = vpack.c.bf16 %v272, %v272
  %v410 = vpack.c.bf16 %v280, %v280
  %v411 = vpack.c.bf16 %v288, %v288
  %v412 = vpack.c.bf16 %v296, %v296
  %v413 = vpack.c.bf16 %v304, %v304
  %v414 = vpack.c.bf16 %v312, %v312
  %v415 = vpack.c.bf16 %v320, %v320
  %v416 = vpack.c.bf16 %v328, %v328
  %v417 = vpack.c.bf16 %v336, %v336
  %v418 = vpack.c.bf16 %v344, %v344
  %v419 = vpack.c.bf16 %v352, %v352
  %v420 = vpack.c.bf16 %v360, %v360
  %v421 = vpack.c.bf16 %v368, %v368
  %v422 = vpack.c.bf16 %v376, %v376
  %v423 = vpack.c.bf16 %v384, %v384
  %v424 = vpack.c.bf16 %v392, %v392
  %v457 = vunpack.c.l.b16 %v393
  %v458 = vunpack.c.l.b16 %v394
  %v459 = vunpack.c.l.b16 %v395
  %v460 = vunpack.c.l.b16 %v396
  %v461 = vunpack.c.l.b16 %v397
  %v462 = vunpack.c.l.b16 %v398
  %v463 = vunpack.c.l.b16 %v399
  %v464 = vunpack.c.l.b16 %v400
  %v465 = vunpack.c.l.b16 %v401
  %v466 = vunpack.c.l.b16 %v402
  %v467 = vunpack.c.l.b16 %v403
  %v468 = vunpack.c.l.b16 %v404
  %v469 = vunpack.c.l.b16 %v405
  %v470 = vunpack.c.l.b16 %v406
  %v471 = vunpack.c.l.b16 %v407
  %v472 = vunpack.c.l.b16 %v408
  %v473 = vunpack.c.l.b16 %v409
  %v474 = vunpack.c.l.b16 %v410
  %v475 = vunpack.c.l.b16 %v411
  %v476 = vunpack.c.l.b16 %v412
  %v477 = vunpack.c.l.b16 %v413
  %v478 = vunpack.c.l.b16 %v414
  %v479 = vunpack.c.l.b16 %v415
  %v480 = vunpack.c.l.b16 %v416
  %v481 = vunpack.c.l.b16 %v417
  %v482 = vunpack.c.l.b16 %v418
  %v483 = vunpack.c.l.b16 %v419
  %v484 = vunpack.c.l.b16 %v420
  %v485 = vunpack.c.l.b16 %v421
  %v486 = vunpack.c.l.b16 %v422
  %v487 = vunpack.c.l.b16 %v423
  %v488 = vunpack.c.l.b16 %v424
  %v489 = vpack.c.b16 %v457, %v457
  %v490 = vpack.c.b16 %v458, %v458
  %v491 = vpack.c.b16 %v459, %v459
  %v492 = vpack.c.b16 %v460, %v460
  %v493 = vpack.c.b16 %v461, %v461
  %v494 = vpack.c.b16 %v462, %v462
  %v495 = vpack.c.b16 %v463, %v463
  %v496 = vpack.c.b16 %v464, %v464
  %v497 = vpack.c.b16 %v465, %v465
  %v498 = vpack.c.b16 %v466, %v466
  %v499 = vpack.c.b16 %v467, %v467
  %v500 = vpack.c.b16 %v468, %v468
  %v501 = vpack.c.b16 %v469, %v469
  %v502 = vpack.c.b16 %v470, %v470
  %v503 = vpack.c.b16 %v471, %v471
  %v504 = vpack.c.b16 %v472, %v472
  %v505 = vpack.c.b16 %v473, %v473
  %v506 = vpack.c.b16 %v474, %v474
  %v507 = vpack.c.b16 %v475, %v475
  %v508 = vpack.c.b16 %v476, %v476
  %v509 = vpack.c.b16 %v477, %v477
  %v510 = vpack.c.b16 %v478, %v478
  %v511 = vpack.c.b16 %v479, %v479
  %v512 = vpack.c.b16 %v480, %v480
  %v513 = vpack.c.b16 %v481, %v481
  %v514 = vpack.c.b16 %v482, %v482
  %v515 = vpack.c.b16 %v483, %v483
  %v516 = vpack.c.b16 %v484, %v484
  %v517 = vpack.c.b16 %v485, %v485
  %v518 = vpack.c.b16 %v486, %v486
  %v519 = vpack.c.b16 %v487, %v487
  %v520 = vpack.c.b16 %v488, %v488
  %v521 = vunpack.c.l.b16 %v489
  %v522 = vunpack.c.l.b16 %v490
  %v523 = vunpack.c.l.b16 %v491
  %v524 = vunpack.c.l.b16 %v492
  %v525 = vunpack.c.l.b16 %v493
  %v526 = vunpack.c.l.b16 %v494
  %v527 = vunpack.c.l.b16 %v495
  %v528 = vunpack.c.l.b16 %v496
  %v529 = vunpack.c.l.b16 %v497
  %v530 = vunpack.c.l.b16 %v498
  %v531 = vunpack.c.l.b16 %v499
  %v532 = vunpack.c.l.b16 %v500
  %v533 = vunpack.c.l.b16 %v501
  %v534 = vunpack.c.l.b16 %v502
  %v535 = vunpack.c.l.b16 %v503
  %v536 = vunpack.c.l.b16 %v504
  %v537 = vunpack.c.l.b16 %v505
  %v538 = vunpack.c.l.b16 %v506
  %v539 = vunpack.c.l.b16 %v507
  %v540 = vunpack.c.l.b16 %v508
  %v541 = vunpack.c.l.b16 %v509
  %v542 = vunpack.c.l.b16 %v510
  %v543 = vunpack.c.l.b16 %v511
  %v544 = vunpack.c.l.b16 %v512
  %v545 = vunpack.c.l.b16 %v513
  %v546 = vunpack.c.l.b16 %v514
  %v547 = vunpack.c.l.b16 %v515
  %v548 = vunpack.c.l.b16 %v516
  %v549 = vunpack.c.l.b16 %v517
  %v550 = vunpack.c.l.b16 %v518
  %v551 = vunpack.c.l.b16 %v519
  %v552 = vunpack.c.l.b16 %v520
  %vm553 = vcmask 1041409
  %v554 = vsel %vm553, %v522, %v521
  %vm555 = vcmask 1042434
  %v556 = vsel %vm555, %v523, %v554
  %vm557 = vcmask 1043459
  %v558 = vsel %vm557, %v524, %v556
  %vm559 = vcmask 1044484
  %v560 = vsel %vm559, %v525, %v558
  %vm561 = vcmask 1045509
  %v562 = vsel %vm561, %v526, %v560
  %vm563 = vcmask 1046534
  %v564 = vsel %vm563, %v527, %v562
  %vm565 = vcmask 1047559
  %v566 = vsel %vm565, %v528, %v564
  %v567 = vsel %vm553, %v530, %v529
  %v568 = vsel %vm555, %v531, %v567
  %v569 = vsel %vm557, %v532, %v568
  %v570 = vsel %vm559, %v533, %v569
  %v571 = vsel %vm561, %v534, %v570
  %v572 = vsel %vm563, %v535, %v571
  %v573 = vsel %vm565, %v536, %v572
  %v574 = vsel %vm553, %v538, %v537
  %v575 = vsel %vm555, %v539, %v574
  %v576 = vsel %vm557, %v540, %v575
  %v577 = vsel %vm559, %v541, %v576
  %v578 = vsel %vm561, %v542, %v577
  %v579 = vsel %vm563, %v543, %v578
  %v580 = vsel %vm565, %v544, %v579
  %v581 = vsel %vm553, %v546, %v545
  %v582 = vsel %vm555, %v547, %v581
  %v583 = vsel %vm557, %v548, %v582
  %v584 = vsel %vm559, %v549, %v583
  %v585 = vsel %vm561, %v550, %v584
  %v586 = vsel %vm563, %v551, %v585
  %v587 = vsel %vm565, %v552, %v586
  %v588 = vpack.c.b16 %v566, %v566
  %v589 = vpack.c.b16 %v573, %v573
  %v590 = vpack.c.b16 %v580, %v580
  %v591 = vpack.c.b16 %v587, %v587
  %596 = vst [vmem:[%s1] sm:$0xf] %v588
  %597 = vst [vmem:[%s1 + $0x4] sm:$0xf] %v589
  %598 = vst [vmem:[%s1 + $0x8] sm:$0xf] %v590
  %599 = vst [vmem:[%s1 + $0xc] sm:$0xf] %v591
  // Predicated region
  $region6: #{resnet_forward.8} parent=0 // pred_check
    _
  $region7: #{resnet_forward.8} parent=0 // pred_check_branch
    %601 = sbr.rel (0) target = $region9
  $region8: #{resnet_forward.8} parent=0 // pred_region
    _
  $region9: #{resnet_forward.8} parent=0 // pred_fallthru
    _
  // Predicated region
  $region10: #{resnet_forward.8} parent=0 // pred_check
    _
  $region11: #{resnet_forward.8} parent=0 // pred_check_branch
    %603 = sbr.rel (0) target = $region13
  $region12: #{resnet_forward.8} parent=0 // pred_region
    _
  $region13: #{resnet_forward.8} parent=0 // pred_fallthru
    _

// kernel: resnet_forward.10
$region0: #{resnet_forward.10}
  #allocation0 [shape = 'u32[]', space=smem, size = 0x4, offset = 0x4, fixed_abs, tag = 'smem constant byte address 0x4 - core index']
  #allocation1 [shape = 'u32[144,128]{1,0:T(1,128)}', space=vmem, size = 0x12000, scoped, tag = 'internal scratch']
  %s0 = inlined_call_operand.vmem [shape: bf16[32,1152], index: 0, kind: input, shape index: {}]
  %s1 = inlined_call_operand.vmem [shape: bf16[1152,128], index: 1, kind: input, shape index: {}]
  %s2 = inlined_call_operand.vmem [shape: f32[1,128], index: 2, kind: input, shape index: {}]
  %s3 = inlined_call_operand.vmem [shape: f32[1,128], index: 3, kind: input, shape index: {}]
  %s4 = inlined_call_operand.vmem [shape: bf16[32,128], index: 4, kind: input, shape index: {}]
  %s5 = inlined_call_operand.vmem [shape: bf16[32,128], index: 5, kind: output, shape index: {}]
  %s6 = sld [smem:[#allocation0]]
  $region30: #{resnet_forward.10} parent=0
    _
  %s8 = ssub.s32 1, %s6
  %s9 = scalar_select 0, %s8, %s6
  // Predicated region
  $region2: #{resnet_forward.10} parent=0 // pred_check
    _
  $region3: #{resnet_forward.10} parent=0 // pred_check_branch
    %11 = sbr.rel (0) target = $region5
  $region4: #{resnet_forward.10} parent=0 // pred_region
    _
  $region5: #{resnet_forward.10} parent=0 // pred_fallthru
    _
  // Predicated region
  $region6: #{resnet_forward.10} parent=0 // pred_check
    _
  $region7: #{resnet_forward.10} parent=0 // pred_check_branch
    %13 = sbr.rel (0) target = $region9
  $region8: #{resnet_forward.10} parent=0 // pred_region
    _
  $region9: #{resnet_forward.10} parent=0 // pred_fallthru
    _
  // Predicated region
  $region10: #{resnet_forward.10} parent=0 // pred_check
    _
  $region11: #{resnet_forward.10} parent=0 // pred_check_branch
    %15 = sbr.rel (0) target = $region13
  $region12: #{resnet_forward.10} parent=0 // pred_region
    _
  $region13: #{resnet_forward.10} parent=0 // pred_fallthru
    _
  // Predicated region
  $region14: #{resnet_forward.10} parent=0 // pred_check
    _
  $region15: #{resnet_forward.10} parent=0 // pred_check_branch
    %17 = sbr.rel (0) target = $region17
  $region16: #{resnet_forward.10} parent=0 // pred_region
    _
  $region17: #{resnet_forward.10} parent=0 // pred_fallthru
    _
  // Predicated region
  $region18: #{resnet_forward.10} parent=0 // pred_check
    _
  $region19: #{resnet_forward.10} parent=0 // pred_check_branch
    %19 = sbr.rel (0) target = $region21
  $region20: #{resnet_forward.10} parent=0 // pred_region
    _
  $region21: #{resnet_forward.10} parent=0 // pred_fallthru
    _
  %v21 = vld [vmem:[%s0] sm:$0xff]
  %v22 = vld [vmem:[%s0 + $0x8] sm:$0xff]
  %v23 = vld [vmem:[%s0 + $0x10] sm:$0xff]
  %v24 = vld [vmem:[%s0 + $0x18] sm:$0xff]
  %v25 = vld [vmem:[%s0 + $0x20] sm:$0xf]
  %v26 = vld [vmem:[%s0 + $0x24] sm:$0xff]
  %v27 = vld [vmem:[%s0 + $0x2c] sm:$0xff]
  %v28 = vld [vmem:[%s0 + $0x34] sm:$0xff]
  %v29 = vld [vmem:[%s0 + $0x3c] sm:$0xff]
  %v30 = vld [vmem:[%s0 + $0x44] sm:$0xf]
  %v31 = vld [vmem:[%s0 + $0x48] sm:$0xff]
  %v32 = vld [vmem:[%s0 + $0x50] sm:$0xff]
  %v33 = vld [vmem:[%s0 + $0x58] sm:$0xff]
  %v34 = vld [vmem:[%s0 + $0x60] sm:$0xff]
  %v35 = vld [vmem:[%s0 + $0x68] sm:$0xf]
  %v36 = vld [vmem:[%s0 + $0x6c] sm:$0xff]
  %v37 = vld [vmem:[%s0 + $0x74] sm:$0xff]
  %v38 = vld [vmem:[%s0 + $0x7c] sm:$0xff]
  %v39 = vld [vmem:[%s0 + $0x84] sm:$0xff]
  %v40 = vld [vmem:[%s0 + $0x8c] sm:$0xf]
  %v41 = vld [vmem:[%s1] sm:$0xf]
  %v42 = vld [vmem:[%s1 + $0x4] sm:$0xf]
  %v43 = vld [vmem:[%s1 + $0x8] sm:$0xf]
  %v44 = vld [vmem:[%s1 + $0xc] sm:$0xf]
  %v45 = vld [vmem:[%s1 + $0x10] sm:$0xf]
  %v46 = vld [vmem:[%s1 + $0x14] sm:$0xf]
  %v47 = vld [vmem:[%s1 + $0x18] sm:$0xf]
  %v48 = vld [vmem:[%s1 + $0x1c] sm:$0xf]
  %v49 = vld [vmem:[%s1 + $0x20] sm:$0xf]
  %v50 = vld [vmem:[%s1 + $0x24] sm:$0xf]
  %v51 = vld [vmem:[%s1 + $0x28] sm:$0xf]
  %v52 = vld [vmem:[%s1 + $0x2c] sm:$0xf]
  %v53 = vld [vmem:[%s1 + $0x30] sm:$0xf]
  %v54 = vld [vmem:[%s1 + $0x34] sm:$0xf]
  %v55 = vld [vmem:[%s1 + $0x38] sm:$0xf]
  %v56 = vld [vmem:[%s1 + $0x3c] sm:$0xf]
  %v57 = vld [vmem:[%s1 + $0x40] sm:$0xf]
  %v58 = vld [vmem:[%s1 + $0x44] sm:$0xf]
  %v59 = vld [vmem:[%s1 + $0x48] sm:$0xf]
  %v60 = vld [vmem:[%s1 + $0x4c] sm:$0xf]
  %v61 = vld [vmem:[%s1 + $0x50] sm:$0xf]
  %v62 = vld [vmem:[%s1 + $0x54] sm:$0xf]
  %v63 = vld [vmem:[%s1 + $0x58] sm:$0xf]
  %v64 = vld [vmem:[%s1 + $0x5c] sm:$0xf]
  %v65 = vld [vmem:[%s1 + $0x60] sm:$0xf]
  %v66 = vld [vmem:[%s1 + $0x64] sm:$0xf]
  %v67 = vld [vmem:[%s1 + $0x68] sm:$0xf]
  %v68 = vld [vmem:[%s1 + $0x6c] sm:$0xf]
  %v69 = vld [vmem:[%s1 + $0x70] sm:$0xf]
  %v70 = vld [vmem:[%s1 + $0x74] sm:$0xf]
  %v71 = vld [vmem:[%s1 + $0x78] sm:$0xf]
  %v72 = vld [vmem:[%s1 + $0x7c] sm:$0xf]
  %v73 = vld [vmem:[%s1 + $0x80] sm:$0xf]
  %v74 = vld [vmem:[%s1 + $0x84] sm:$0xf]
  %v75 = vld [vmem:[%s1 + $0x88] sm:$0xf]
  %v76 = vld [vmem:[%s1 + $0x8c] sm:$0xf]
  %v77 = vld [vmem:[%s1 + $0x90] sm:$0xf]
  %v78 = vld [vmem:[%s1 + $0x94] sm:$0xf]
  %v79 = vld [vmem:[%s1 + $0x98] sm:$0xf]
  %v80 = vld [vmem:[%s1 + $0x9c] sm:$0xf]
  %v81 = vld [vmem:[%s1 + $0xa0] sm:$0xf]
  %v82 = vld [vmem:[%s1 + $0xa4] sm:$0xf]
  %v83 = vld [vmem:[%s1 + $0xa8] sm:$0xf]
  %v84 = vld [vmem:[%s1 + $0xac] sm:$0xf]
  %v85 = vld [vmem:[%s1 + $0xb0] sm:$0xf]
  %v86 = vld [vmem:[%s1 + $0xb4] sm:$0xf]
  %v87 = vld [vmem:[%s1 + $0xb8] sm:$0xf]
  %v88 = vld [vmem:[%s1 + $0xbc] sm:$0xf]
  %v89 = vld [vmem:[%s1 + $0xc0] sm:$0xf]
  %v90 = vld [vmem:[%s1 + $0xc4] sm:$0xf]
  %v91 = vld [vmem:[%s1 + $0xc8] sm:$0xf]
  %v92 = vld [vmem:[%s1 + $0xcc] sm:$0xf]
  %v93 = vld [vmem:[%s1 + $0xd0] sm:$0xf]
  %v94 = vld [vmem:[%s1 + $0xd4] sm:$0xf]
  %v95 = vld [vmem:[%s1 + $0xd8] sm:$0xf]
  %v96 = vld [vmem:[%s1 + $0xdc] sm:$0xf]
  %v97 = vld [vmem:[%s1 + $0xe0] sm:$0xf]
  %v98 = vld [vmem:[%s1 + $0xe4] sm:$0xf]
  %v99 = vld [vmem:[%s1 + $0xe8] sm:$0xf]
  %v100 = vld [vmem:[%s1 + $0xec] sm:$0xf]
  %v101 = vld [vmem:[%s1 + $0xf0] sm:$0xf]
  %v102 = vld [vmem:[%s1 + $0xf4] sm:$0xf]
  %v103 = vld [vmem:[%s1 + $0xf8] sm:$0xf]
  %v104 = vld [vmem:[%s1 + $0xfc] sm:$0xf]
  %v105 = vld [vmem:[%s1 + $0x100] sm:$0xf]
  %v106 = vld [vmem:[%s1 + $0x104] sm:$0xf]
  %v107 = vld [vmem:[%s1 + $0x108] sm:$0xf]
  %v108 = vld [vmem:[%s1 + $0x10c] sm:$0xf]
  %v109 = vld [vmem:[%s1 + $0x110] sm:$0xf]
  %v110 = vld [vmem:[%s1 + $0x114] sm:$0xf]
  %v111 = vld [vmem:[%s1 + $0x118] sm:$0xf]
  %v112 = vld [vmem:[%s1 + $0x11c] sm:$0xf]
  %v113 = vld [vmem:[%s1 + $0x120] sm:$0xf]
  %v114 = vld [vmem:[%s1 + $0x124] sm:$0xf]
  %v115 = vld [vmem:[%s1 + $0x128] sm:$0xf]
  %v116 = vld [vmem:[%s1 + $0x12c] sm:$0xf]
  %v117 = vld [vmem:[%s1 + $0x130] sm:$0xf]
  %v118 = vld [vmem:[%s1 + $0x134] sm:$0xf]
  %v119 = vld [vmem:[%s1 + $0x138] sm:$0xf]
  %v120 = vld [vmem:[%s1 + $0x13c] sm:$0xf]
  %v121 = vld [vmem:[%s1 + $0x140] sm:$0xf]
  %v122 = vld [vmem:[%s1 + $0x144] sm:$0xf]
  %v123 = vld [vmem:[%s1 + $0x148] sm:$0xf]
  %v124 = vld [vmem:[%s1 + $0x14c] sm:$0xf]
  %v125 = vld [vmem:[%s1 + $0x150] sm:$0xf]
  %v126 = vld [vmem:[%s1 + $0x154] sm:$0xf]
  %v127 = vld [vmem:[%s1 + $0x158] sm:$0xf]
  %v128 = vld [vmem:[%s1 + $0x15c] sm:$0xf]
  %v129 = vld [vmem:[%s1 + $0x160] sm:$0xf]
  %v130 = vld [vmem:[%s1 + $0x164] sm:$0xf]
  %v131 = vld [vmem:[%s1 + $0x168] sm:$0xf]
  %v132 = vld [vmem:[%s1 + $0x16c] sm:$0xf]
  %v133 = vld [vmem:[%s1 + $0x170] sm:$0xf]
  %v134 = vld [vmem:[%s1 + $0x174] sm:$0xf]
  %v135 = vld [vmem:[%s1 + $0x178] sm:$0xf]
  %v136 = vld [vmem:[%s1 + $0x17c] sm:$0xf]
  %v137 = vld [vmem:[%s1 + $0x180] sm:$0xf]
  %v138 = vld [vmem:[%s1 + $0x184] sm:$0xf]
  %v139 = vld [vmem:[%s1 + $0x188] sm:$0xf]
  %v140 = vld [vmem:[%s1 + $0x18c] sm:$0xf]
  %v141 = vld [vmem:[%s1 + $0x190] sm:$0xf]
  %v142 = vld [vmem:[%s1 + $0x194] sm:$0xf]
  %v143 = vld [vmem:[%s1 + $0x198] sm:$0xf]
  %v144 = vld [vmem:[%s1 + $0x19c] sm:$0xf]
  %v145 = vld [vmem:[%s1 + $0x1a0] sm:$0xf]
  %v146 = vld [vmem:[%s1 + $0x1a4] sm:$0xf]
  %v147 = vld [vmem:[%s1 + $0x1a8] sm:$0xf]
  %v148 = vld [vmem:[%s1 + $0x1ac] sm:$0xf]
  %v149 = vld [vmem:[%s1 + $0x1b0] sm:$0xf]
  %v150 = vld [vmem:[%s1 + $0x1b4] sm:$0xf]
  %v151 = vld [vmem:[%s1 + $0x1b8] sm:$0xf]
  %v152 = vld [vmem:[%s1 + $0x1bc] sm:$0xf]
  %v153 = vld [vmem:[%s1 + $0x1c0] sm:$0xf]
  %v154 = vld [vmem:[%s1 + $0x1c4] sm:$0xf]
  %v155 = vld [vmem:[%s1 + $0x1c8] sm:$0xf]
  %v156 = vld [vmem:[%s1 + $0x1cc] sm:$0xf]
  %v157 = vld [vmem:[%s1 + $0x1d0] sm:$0xf]
  %v158 = vld [vmem:[%s1 + $0x1d4] sm:$0xf]
  %v159 = vld [vmem:[%s1 + $0x1d8] sm:$0xf]
  %v160 = vld [vmem:[%s1 + $0x1dc] sm:$0xf]
  %v161 = vld [vmem:[%s1 + $0x1e0] sm:$0xf]
  %v162 = vld [vmem:[%s1 + $0x1e4] sm:$0xf]
  %v163 = vld [vmem:[%s1 + $0x1e8] sm:$0xf]
  %v164 = vld [vmem:[%s1 + $0x1ec] sm:$0xf]
  %v165 = vld [vmem:[%s1 + $0x1f0] sm:$0xf]
  %v166 = vld [vmem:[%s1 + $0x1f4] sm:$0xf]
  %v167 = vld [vmem:[%s1 + $0x1f8] sm:$0xf]
  %v168 = vld [vmem:[%s1 + $0x1fc] sm:$0xf]
  %v169 = vld [vmem:[%s1 + $0x200] sm:$0xf]
  %v170 = vld [vmem:[%s1 + $0x204] sm:$0xf]
  %v171 = vld [vmem:[%s1 + $0x208] sm:$0xf]
  %v172 = vld [vmem:[%s1 + $0x20c] sm:$0xf]
  %v173 = vld [vmem:[%s1 + $0x210] sm:$0xf]
  %v174 = vld [vmem:[%s1 + $0x214] sm:$0xf]
  %v175 = vld [vmem:[%s1 + $0x218] sm:$0xf]
  %v176 = vld [vmem:[%s1 + $0x21c] sm:$0xf]
  %v177 = vld [vmem:[%s1 + $0x220] sm:$0xf]
  %v178 = vld [vmem:[%s1 + $0x224] sm:$0xf]
  %v179 = vld [vmem:[%s1 + $0x228] sm:$0xf]
  %v180 = vld [vmem:[%s1 + $0x22c] sm:$0xf]
  %v181 = vld [vmem:[%s1 + $0x230] sm:$0xf]
  %v182 = vld [vmem:[%s1 + $0x234] sm:$0xf]
  %v183 = vld [vmem:[%s1 + $0x238] sm:$0xf]
  %v184 = vld [vmem:[%s1 + $0x23c] sm:$0xf]
  %v205 = vunpack.c.l.b16 %v21
  %v206 = vunpack.c.h.b16 %v21
  %v207 = vunpack.c.l.b16 %v22
  %v208 = vunpack.c.h.b16 %v22
  %v209 = vunpack.c.l.b16 %v23
  %v210 = vunpack.c.h.b16 %v23
  %v211 = vunpack.c.l.b16 %v24
  %v212 = vunpack.c.h.b16 %v24
  %v213 = vunpack.c.l.b16 %v25
  %v214 = vunpack.c.l.b16 %v26
  %v215 = vunpack.c.h.b16 %v26
  %v216 = vunpack.c.l.b16 %v27
  %v217 = vunpack.c.h.b16 %v27
  %v218 = vunpack.c.l.b16 %v28
  %v219 = vunpack.c.h.b16 %v28
  %v220 = vunpack.c.l.b16 %v29
  %v221 = vunpack.c.h.b16 %v29
  %v222 = vunpack.c.l.b16 %v30
  %v223 = vunpack.c.l.b16 %v31
  %v224 = vunpack.c.h.b16 %v31
  %v225 = vunpack.c.l.b16 %v32
  %v226 = vunpack.c.h.b16 %v32
  %v227 = vunpack.c.l.b16 %v33
  %v228 = vunpack.c.h.b16 %v33
  %v229 = vunpack.c.l.b16 %v34
  %v230 = vunpack.c.h.b16 %v34
  %v231 = vunpack.c.l.b16 %v35
  %v232 = vunpack.c.l.b16 %v36
  %v233 = vunpack.c.h.b16 %v36
  %v234 = vunpack.c.l.b16 %v37
  %v235 = vunpack.c.h.b16 %v37
  %v236 = vunpack.c.l.b16 %v38
  %v237 = vunpack.c.h.b16 %v38
  %v238 = vunpack.c.l.b16 %v39
  %v239 = vunpack.c.h.b16 %v39
  %v240 = vunpack.c.l.b16 %v40
  %v241 = vpack.c.b16 %v214, %v205
  %v242 = vpack.c.b16 %v215, %v206
  %v243 = vpack.c.b16 %v216, %v207
  %v244 = vpack.c.b16 %v217, %v208
  %v245 = vpack.c.b16 %v218, %v209
  %v246 = vpack.c.b16 %v219, %v210
  %v247 = vpack.c.b16 %v220, %v211
  %v248 = vpack.c.b16 %v221, %v212
  %v249 = vpack.c.b16 %v222, %v213
  %v250 = vpack.c.b16 %v232, %v223
  %v251 = vpack.c.b16 %v233, %v224
  %v252 = vpack.c.b16 %v234, %v225
  %v253 = vpack.c.b16 %v235, %v226
  %v254 = vpack.c.b16 %v236, %v227
  %v255 = vpack.c.b16 %v237, %v228
  %v256 = vpack.c.b16 %v238, %v229
  %v257 = vpack.c.b16 %v239, %v230
  %v258 = vpack.c.b16 %v240, %v231
  %v421 = vunpack.c.l.b16 %v41
  %v422 = vunpack.c.l.b16 %v42
  %v423 = vunpack.c.l.b16 %v43
  %v424 = vunpack.c.l.b16 %v44
  %v425 = vunpack.c.l.b16 %v45
  %v426 = vunpack.c.l.b16 %v46
  %v427 = vunpack.c.l.b16 %v47
  %v428 = vunpack.c.l.b16 %v48
  %v429 = vunpack.c.l.b16 %v49
  %v430 = vunpack.c.l.b16 %v50
  %v431 = vunpack.c.l.b16 %v51
  %v432 = vunpack.c.l.b16 %v52
  %v433 = vunpack.c.l.b16 %v53
  %v434 = vunpack.c.l.b16 %v54
  %v435 = vunpack.c.l.b16 %v55
  %v436 = vunpack.c.l.b16 %v56
  %v437 = vunpack.c.l.b16 %v57
  %v438 = vunpack.c.l.b16 %v58
  %v439 = vunpack.c.l.b16 %v59
  %v440 = vunpack.c.l.b16 %v60
  %v441 = vunpack.c.l.b16 %v61
  %v442 = vunpack.c.l.b16 %v62
  %v443 = vunpack.c.l.b16 %v63
  %v444 = vunpack.c.l.b16 %v64
  %v445 = vunpack.c.l.b16 %v65
  %v446 = vunpack.c.l.b16 %v66
  %v447 = vunpack.c.l.b16 %v67
  %v448 = vunpack.c.l.b16 %v68
  %v449 = vunpack.c.l.b16 %v69
  %v450 = vunpack.c.l.b16 %v70
  %v451 = vunpack.c.l.b16 %v71
  %v452 = vunpack.c.l.b16 %v72
  %v453 = vunpack.c.l.b16 %v73
  %v454 = vunpack.c.l.b16 %v74
  %v455 = vunpack.c.l.b16 %v75
  %v456 = vunpack.c.l.b16 %v76
  %v457 = vunpack.c.l.b16 %v77
  %v458 = vunpack.c.l.b16 %v78
  %v459 = vunpack.c.l.b16 %v79
  %v460 = vunpack.c.l.b16 %v80
  %v461 = vunpack.c.l.b16 %v81
  %v462 = vunpack.c.l.b16 %v82
  %v463 = vunpack.c.l.b16 %v83
  %v464 = vunpack.c.l.b16 %v84
  %v465 = vunpack.c.l.b16 %v85
  %v466 = vunpack.c.l.b16 %v86
  %v467 = vunpack.c.l.b16 %v87
  %v468 = vunpack.c.l.b16 %v88
  %v469 = vunpack.c.l.b16 %v89
  %v470 = vunpack.c.l.b16 %v90
  %v471 = vunpack.c.l.b16 %v91
  %v472 = vunpack.c.l.b16 %v92
  %v473 = vunpack.c.l.b16 %v93
  %v474 = vunpack.c.l.b16 %v94
  %v475 = vunpack.c.l.b16 %v95
  %v476 = vunpack.c.l.b16 %v96
  %v477 = vunpack.c.l.b16 %v97
  %v478 = vunpack.c.l.b16 %v98
  %v479 = vunpack.c.l.b16 %v99
  %v480 = vunpack.c.l.b16 %v100
  %v481 = vunpack.c.l.b16 %v101
  %v482 = vunpack.c.l.b16 %v102
  %v483 = vunpack.c.l.b16 %v103
  %v484 = vunpack.c.l.b16 %v104
  %v485 = vunpack.c.l.b16 %v105
  %v486 = vunpack.c.l.b16 %v106
  %v487 = vunpack.c.l.b16 %v107
  %v488 = vunpack.c.l.b16 %v108
  %v489 = vunpack.c.l.b16 %v109
  %v490 = vunpack.c.l.b16 %v110
  %v491 = vunpack.c.l.b16 %v111
  %v492 = vunpack.c.l.b16 %v112
  %v493 = vunpack.c.l.b16 %v113
  %v494 = vunpack.c.l.b16 %v114
  %v495 = vunpack.c.l.b16 %v115
  %v496 = vunpack.c.l.b16 %v116
  %v497 = vunpack.c.l.b16 %v117
  %v498 = vunpack.c.l.b16 %v118
  %v499 = vunpack.c.l.b16 %v119
  %v500 = vunpack.c.l.b16 %v120
  %v501 = vunpack.c.l.b16 %v121
  %v502 = vunpack.c.l.b16 %v122
  %v503 = vunpack.c.l.b16 %v123
  %v504 = vunpack.c.l.b16 %v124
  %v505 = vunpack.c.l.b16 %v125
  %v506 = vunpack.c.l.b16 %v126
  %v507 = vunpack.c.l.b16 %v127
  %v508 = vunpack.c.l.b16 %v128
  %v509 = vunpack.c.l.b16 %v129
  %v510 = vunpack.c.l.b16 %v130
  %v511 = vunpack.c.l.b16 %v131
  %v512 = vunpack.c.l.b16 %v132
  %v513 = vunpack.c.l.b16 %v133
  %v514 = vunpack.c.l.b16 %v134
  %v515 = vunpack.c.l.b16 %v135
  %v516 = vunpack.c.l.b16 %v136
  %v517 = vunpack.c.l.b16 %v137
  %v518 = vunpack.c.l.b16 %v138
  %v519 = vunpack.c.l.b16 %v139
  %v520 = vunpack.c.l.b16 %v140
  %v521 = vunpack.c.l.b16 %v141
  %v522 = vunpack.c.l.b16 %v142
  %v523 = vunpack.c.l.b16 %v143
  %v524 = vunpack.c.l.b16 %v144
  %v525 = vunpack.c.l.b16 %v145
  %v526 = vunpack.c.l.b16 %v146
  %v527 = vunpack.c.l.b16 %v147
  %v528 = vunpack.c.l.b16 %v148
  %v529 = vunpack.c.l.b16 %v149
  %v530 = vunpack.c.l.b16 %v150
  %v531 = vunpack.c.l.b16 %v151
  %v532 = vunpack.c.l.b16 %v152
  %v533 = vunpack.c.l.b16 %v153
  %v534 = vunpack.c.l.b16 %v154
  %v535 = vunpack.c.l.b16 %v155
  %v536 = vunpack.c.l.b16 %v156
  %v537 = vunpack.c.l.b16 %v157
  %v538 = vunpack.c.l.b16 %v158
  %v539 = vunpack.c.l.b16 %v159
  %v540 = vunpack.c.l.b16 %v160
  %v541 = vunpack.c.l.b16 %v161
  %v542 = vunpack.c.l.b16 %v162
  %v543 = vunpack.c.l.b16 %v163
  %v544 = vunpack.c.l.b16 %v164
  %v545 = vunpack.c.l.b16 %v165
  %v546 = vunpack.c.l.b16 %v166
  %v547 = vunpack.c.l.b16 %v167
  %v548 = vunpack.c.l.b16 %v168
  %v549 = vunpack.c.l.b16 %v169
  %v550 = vunpack.c.l.b16 %v170
  %v551 = vunpack.c.l.b16 %v171
  %v552 = vunpack.c.l.b16 %v172
  %v553 = vunpack.c.l.b16 %v173
  %v554 = vunpack.c.l.b16 %v174
  %v555 = vunpack.c.l.b16 %v175
  %v556 = vunpack.c.l.b16 %v176
  %v557 = vunpack.c.l.b16 %v177
  %v558 = vunpack.c.l.b16 %v178
  %v559 = vunpack.c.l.b16 %v179
  %v560 = vunpack.c.l.b16 %v180
  %v561 = vunpack.c.l.b16 %v181
  %v562 = vunpack.c.l.b16 %v182
  %v563 = vunpack.c.l.b16 %v183
  %v564 = vunpack.c.l.b16 %v184
  %v565 = vpack.c.b16 %v422, %v421
  %v566 = vpack.c.b16 %v424, %v423
  %v567 = vpack.c.b16 %v426, %v425
  %v568 = vpack.c.b16 %v428, %v427
  %v569 = vpack.c.b16 %v430, %v429
  %v570 = vpack.c.b16 %v432, %v431
  %v571 = vpack.c.b16 %v434, %v433
  %v572 = vpack.c.b16 %v436, %v435
  %v573 = vpack.c.b16 %v438, %v437
  %v574 = vpack.c.b16 %v440, %v439
  %v575 = vpack.c.b16 %v442, %v441
  %v576 = vpack.c.b16 %v444, %v443
  %v577 = vpack.c.b16 %v446, %v445
  %v578 = vpack.c.b16 %v448, %v447
  %v579 = vpack.c.b16 %v450, %v449
  %v580 = vpack.c.b16 %v452, %v451
  %v581 = vpack.c.b16 %v454, %v453
  %v582 = vpack.c.b16 %v456, %v455
  %v583 = vpack.c.b16 %v458, %v457
  %v584 = vpack.c.b16 %v460, %v459
  %v585 = vpack.c.b16 %v462, %v461
  %v586 = vpack.c.b16 %v464, %v463
  %v587 = vpack.c.b16 %v466, %v465
  %v588 = vpack.c.b16 %v468, %v467
  %v589 = vpack.c.b16 %v470, %v469
  %v590 = vpack.c.b16 %v472, %v471
  %v591 = vpack.c.b16 %v474, %v473
  %v592 = vpack.c.b16 %v476, %v475
  %v593 = vpack.c.b16 %v478, %v477
  %v594 = vpack.c.b16 %v480, %v479
  %v595 = vpack.c.b16 %v482, %v481
  %v596 = vpack.c.b16 %v484, %v483
  %v597 = vpack.c.b16 %v486, %v485
  %v598 = vpack.c.b16 %v488, %v487
  %v599 = vpack.c.b16 %v490, %v489
  %v600 = vpack.c.b16 %v492, %v491
  %v601 = vpack.c.b16 %v494, %v493
  %v602 = vpack.c.b16 %v496, %v495
  %v603 = vpack.c.b16 %v498, %v497
  %v604 = vpack.c.b16 %v500, %v499
  %v605 = vpack.c.b16 %v502, %v501
  %v606 = vpack.c.b16 %v504, %v503
  %v607 = vpack.c.b16 %v506, %v505
  %v608 = vpack.c.b16 %v508, %v507
  %v609 = vpack.c.b16 %v510, %v509
  %v610 = vpack.c.b16 %v512, %v511
  %v611 = vpack.c.b16 %v514, %v513
  %v612 = vpack.c.b16 %v516, %v515
  %v613 = vpack.c.b16 %v518, %v517
  %v614 = vpack.c.b16 %v520, %v519
  %v615 = vpack.c.b16 %v522, %v521
  %v616 = vpack.c.b16 %v524, %v523
  %v617 = vpack.c.b16 %v526, %v525
  %v618 = vpack.c.b16 %v528, %v527
  %v619 = vpack.c.b16 %v530, %v529
  %v620 = vpack.c.b16 %v532, %v531
  %v621 = vpack.c.b16 %v534, %v533
  %v622 = vpack.c.b16 %v536, %v535
  %v623 = vpack.c.b16 %v538, %v537
  %v624 = vpack.c.b16 %v540, %v539
  %v625 = vpack.c.b16 %v542, %v541
  %v626 = vpack.c.b16 %v544, %v543
  %v627 = vpack.c.b16 %v546, %v545
  %v628 = vpack.c.b16 %v548, %v547
  %v629 = vpack.c.b16 %v550, %v549
  %v630 = vpack.c.b16 %v552, %v551
  %v631 = vpack.c.b16 %v554, %v553
  %v632 = vpack.c.b16 %v556, %v555
  %v633 = vpack.c.b16 %v558, %v557
  %v634 = vpack.c.b16 %v560, %v559
  %v635 = vpack.c.b16 %v562, %v561
  %v636 = vpack.c.b16 %v564, %v563
  %709 = vmatprep.subr.bf16.mxu0 0
  %710 = vmatpush1.bf16.msra.mxu0 %v565
  %711 = vmatprep.subr.bf16.mxu0 0
  %712 = vmatpush1.bf16.msra.mxu0 %v566
  %713 = vmatprep.subr.bf16.mxu0 0
  %714 = vmatpush1.bf16.msra.mxu0 %v567
  %715 = vmatprep.subr.bf16.mxu0 0
  %716 = vmatpush1.bf16.msra.mxu0 %v568
  %717 = vmatprep.subr.bf16.mxu0 0
  %718 = vmatpush1.bf16.msra.mxu0 %v569
  %719 = vmatprep.subr.bf16.mxu0 0
  %720 = vmatpush1.bf16.msra.mxu0 %v570
  %721 = vmatprep.subr.bf16.mxu0 0
  %722 = vmatpush1.bf16.msra.mxu0 %v571
  %723 = vmatprep.subr.bf16.mxu0 0
  %724 = vmatpush1.bf16.msra.mxu0 %v572
  %725 = vmatprep.subr.bf16.mxu0 0
  %726 = vmatpush1.bf16.msra.mxu0 %v573
  %727 = vmatprep.subr.bf16.mxu0 0
  %728 = vmatpush1.bf16.msra.mxu0 %v574
  %729 = vmatprep.subr.bf16.mxu0 0
  %730 = vmatpush1.bf16.msra.mxu0 %v575
  %731 = vmatprep.subr.bf16.mxu0 0
  %732 = vmatpush1.bf16.msra.mxu0 %v576
  %733 = vmatprep.subr.bf16.mxu0 0
  %734 = vmatpush1.bf16.msra.mxu0 %v577
  %735 = vmatprep.subr.bf16.mxu0 0
  %736 = vmatpush1.bf16.msra.mxu0 %v578
  %737 = vmatprep.subr.bf16.mxu0 0
  %738 = vmatpush1.bf16.msra.mxu0 %v579
  %739 = vmatprep.subr.bf16.mxu0 0
  %740 = vmatpush1.bf16.msra.mxu0 %v580
  %741 = vmatprep.mubr.bf16.mxu0 %v242
  %742 = vmatmul.mubr.bf16.gmra.mrb[0].mxu0 %v241
  %v743 = vpop.f32.mrb[0].mxu0
  %v744 = vadd.f32 0.0, %v743
  %v745 = vpop.f32.mrb[0].mxu0
  %v746 = vpop.f32.mrb[0].mxu0
  %v747 = vadd.f32 0.0, %v746
  %v748 = vpop.f32.mrb[0].mxu0
  %749 = vmatprep.mubr.bf16.mxu0 %v251
  %750 = vmatmul.mubr.bf16.gmra.mrb[0].mxu0 %v250
  %v751 = vpop.f32.mrb[0].mxu0
  %v752 = vadd.f32 0.0, %v751
  %v753 = vpop.f32.mrb[0].mxu0
  %v754 = vpop.f32.mrb[0].mxu0
  %v755 = vadd.f32 0.0, %v754
  %v756 = vpop.f32.mrb[0].mxu0
  %757 = vdwg.mxu0
  %758 = vmatprep.subr.bf16.mxu0 0
  %759 = vmatpush1.bf16.msra.mxu0 %v581
  %760 = vmatprep.subr.bf16.mxu0 0
  %761 = vmatpush1.bf16.msra.mxu0 %v582
  %762 = vmatprep.subr.bf16.mxu0 0
  %763 = vmatpush1.bf16.msra.mxu0 %v583
  %764 = vmatprep.subr.bf16.mxu0 0
  %765 = vmatpush1.bf16.msra.mxu0 %v584
  %766 = vmatprep.subr.bf16.mxu0 0
  %767 = vmatpush1.bf16.msra.mxu0 %v585
  %768 = vmatprep.subr.bf16.mxu0 0
  %769 = vmatpush1.bf16.msra.mxu0 %v586
  %770 = vmatprep.subr.bf16.mxu0 0
  %771 = vmatpush1.bf16.msra.mxu0 %v587
  %772 = vmatprep.subr.bf16.mxu0 0
  %773 = vmatpush1.bf16.msra.mxu0 %v588
  %774 = vmatprep.subr.bf16.mxu0 0
  %775 = vmatpush1.bf16.msra.mxu0 %v589
  %776 = vmatprep.subr.bf16.mxu0 0
  %777 = vmatpush1.bf16.msra.mxu0 %v590
  %778 = vmatprep.subr.bf16.mxu0 0
  %779 = vmatpush1.bf16.msra.mxu0 %v591
  %780 = vmatprep.subr.bf16.mxu0 0
  %781 = vmatpush1.bf16.msra.mxu0 %v592
  %782 = vmatprep.subr.bf16.mxu0 0
  %783 = vmatpush1.bf16.msra.mxu0 %v593
  %784 = vmatprep.subr.bf16.mxu0 0
  %785 = vmatpush1.bf16.msra.mxu0 %v594
  %786 = vmatprep.subr.bf16.mxu0 0
  %787 = vmatpush1.bf16.msra.mxu0 %v595
  %788 = vmatprep.subr.bf16.mxu0 0
  %789 = vmatpush1.bf16.msra.mxu0 %v596
  %790 = vmatprep.mubr.bf16.mxu0 %v244
  %791 = vmatmul.mubr.bf16.gmra.mrb[0].mxu0 %v243
  %v792 = vpop.f32.mrb[0].mxu0
  %v793 = vadd.f32 %v744, %v792
  %v794 = vpop.f32.mrb[0].mxu0
  %v795 = vpop.f32.mrb[0].mxu0
  %v796 = vadd.f32 %v747, %v795
  %v797 = vpop.f32.mrb[0].mxu0
  %798 = vmatprep.mubr.bf16.mxu0 %v253
  %799 = vmatmul.mubr.bf16.gmra.mrb[0].mxu0 %v252
  %v800 = vpop.f32.mrb[0].mxu0
  %v801 = vadd.f32 %v752, %v800
  %v802 = vpop.f32.mrb[0].mxu0
  %v803 = vpop.f32.mrb[0].mxu0
  %v804 = vadd.f32 %v755, %v803
  %v805 = vpop.f32.mrb[0].mxu0
  %806 = vdwg.mxu0
  %807 = vmatprep.subr.bf16.mxu0 0
  %808 = vmatpush1.bf16.msra.mxu0 %v597
  %809 = vmatprep.subr.bf16.mxu0 0
  %810 = vmatpush1.bf16.msra.mxu0 %v598
  %811 = vmatprep.subr.bf16.mxu0 0
  %812 = vmatpush1.bf16.msra.mxu0 %v599
  %813 = vmatprep.subr.bf16.mxu0 0
  %814 = vmatpush1.bf16.msra.mxu0 %v600
  %815 = vmatprep.subr.bf16.mxu0 0
  %816 = vmatpush1.bf16.msra.mxu0 %v601
  %817 = vmatprep.subr.bf16.mxu0 0
  %818 = vmatpush1.bf16.msra.mxu0 %v602
  %819 = vmatprep.subr.bf16.mxu0 0
  %820 = vmatpush1.bf16.msra.mxu0 %v603
  %821 = vmatprep.subr.bf16.mxu0 0
  %822 = vmatpush1.bf16.msra.mxu0 %v604
  %823 = vmatprep.subr.bf16.mxu0 0
  %824 = vmatpush1.bf16.msra.mxu0 %v605
  %825 = vmatprep.subr.bf16.mxu0 0
  %826 = vmatpush1.bf16.msra.mxu0 %v606
  %827 = vmatprep.subr.bf16.mxu0 0
  %828 = vmatpush1.bf16.msra.mxu0 %v607
  %829 = vmatprep.subr.bf16.mxu0 0
  %830 = vmatpush1.bf16.msra.mxu0 %v608
  %831 = vmatprep.subr.bf16.mxu0 0
  %832 = vmatpush1.bf16.msra.mxu0 %v609
  %833 = vmatprep.subr.bf16.mxu0 0
  %834 = vmatpush1.bf16.msra.mxu0 %v610
  %835 = vmatprep.subr.bf16.mxu0 0
  %836 = vmatpush1.bf16.msra.mxu0 %v611
  %837 = vmatprep.subr.bf16.mxu0 0
  %838 = vmatpush1.bf16.msra.mxu0 %v612
  %839 = vmatprep.mubr.bf16.mxu0 %v246
  %840 = vmatmul.mubr.bf16.gmra.mrb[0].mxu0 %v245
  %v841 = vpop.f32.mrb[0].mxu0
  %v842 = vadd.f32 %v793, %v841
  %v843 = vpop.f32.mrb[0].mxu0
  %v844 = vpop.f32.mrb[0].mxu0
  %v845 = vadd.f32 %v796, %v844
  %v846 = vpop.f32.mrb[0].mxu0
  %847 = vmatprep.mubr.bf16.mxu0 %v255
  %848 = vmatmul.mubr.bf16.gmra.mrb[0].mxu0 %v254
  %v849 = vpop.f32.mrb[0].mxu0
  %v850 = vadd.f32 %v801, %v849
  %v851 = vpop.f32.mrb[0].mxu0
  %v852 = vpop.f32.mrb[0].mxu0
  %v853 = vadd.f32 %v804, %v852
  %v854 = vpop.f32.mrb[0].mxu0
  %855 = vdwg.mxu0
  %856 = vmatprep.subr.bf16.mxu0 0
  %857 = vmatpush1.bf16.msra.mxu0 %v613
  %858 = vmatprep.subr.bf16.mxu0 0
  %859 = vmatpush1.bf16.msra.mxu0 %v614
  %860 = vmatprep.subr.bf16.mxu0 0
  %861 = vmatpush1.bf16.msra.mxu0 %v615
  %862 = vmatprep.subr.bf16.mxu0 0
  %863 = vmatpush1.bf16.msra.mxu0 %v616
  %864 = vmatprep.subr.bf16.mxu0 0
  %865 = vmatpush1.bf16.msra.mxu0 %v617
  %866 = vmatprep.subr.bf16.mxu0 0
  %867 = vmatpush1.bf16.msra.mxu0 %v618
  %868 = vmatprep.subr.bf16.mxu0 0
  %869 = vmatpush1.bf16.msra.mxu0 %v619
  %870 = vmatprep.subr.bf16.mxu0 0
  %871 = vmatpush1.bf16.msra.mxu0 %v620
  %872 = vmatprep.subr.bf16.mxu0 0
  %873 = vmatpush1.bf16.msra.mxu0 %v621
  %874 = vmatprep.subr.bf16.mxu0 0
  %875 = vmatpush1.bf16.msra.mxu0 %v622
  %876 = vmatprep.subr.bf16.mxu0 0
  %877 = vmatpush1.bf16.msra.mxu0 %v623
  %878 = vmatprep.subr.bf16.mxu0 0
  %879 = vmatpush1.bf16.msra.mxu0 %v624
  %880 = vmatprep.subr.bf16.mxu0 0
  %881 = vmatpush1.bf16.msra.mxu0 %v625
  %882 = vmatprep.subr.bf16.mxu0 0
  %883 = vmatpush1.bf16.msra.mxu0 %v626
  %884 = vmatprep.subr.bf16.mxu0 0
  %885 = vmatpush1.bf16.msra.mxu0 %v627
  %886 = vmatprep.subr.bf16.mxu0 0
  %887 = vmatpush1.bf16.msra.mxu0 %v628
  %888 = vmatprep.mubr.bf16.mxu0 %v248
  %889 = vmatmul.mubr.bf16.gmra.mrb[0].mxu0 %v247
  %v890 = vpop.f32.mrb[0].mxu0
  %v891 = vadd.f32 %v842, %v890
  %v892 = vpop.f32.mrb[0].mxu0
  %v893 = vpop.f32.mrb[0].mxu0
  %v894 = vadd.f32 %v845, %v893
  %v895 = vpop.f32.mrb[0].mxu0
  %896 = vmatprep.mubr.bf16.mxu0 %v257
  %897 = vmatmul.mubr.bf16.gmra.mrb[0].mxu0 %v256
  %v898 = vpop.f32.mrb[0].mxu0
  %v899 = vadd.f32 %v850, %v898
  %v900 = vpop.f32.mrb[0].mxu0
  %v901 = vpop.f32.mrb[0].mxu0
  %v902 = vadd.f32 %v853, %v901
  %v903 = vpop.f32.mrb[0].mxu0
  %904 = vdwg.mxu0
  %905 = vmatprep.subr.bf16.mxu0 0
  %906 = vmatpush1.bf16.msra.mxu0 %v629
  %907 = vmatprep.subr.bf16.mxu0 0
  %908 = vmatpush1.bf16.msra.mxu0 %v630
  %909 = vmatprep.subr.bf16.mxu0 0
  %910 = vmatpush1.bf16.msra.mxu0 %v631
  %911 = vmatprep.subr.bf16.mxu0 0
  %912 = vmatpush1.bf16.msra.mxu0 %v632
  %913 = vmatprep.subr.bf16.mxu0 0
  %914 = vmatpush1.bf16.msra.mxu0 %v633
  %915 = vmatprep.subr.bf16.mxu0 0
  %916 = vmatpush1.bf16.msra.mxu0 %v634
  %917 = vmatprep.subr.bf16.mxu0 0
  %918 = vmatpush1.bf16.msra.mxu0 %v635
  %919 = vmatprep.subr.bf16.mxu0 0
  %920 = vmatpush1.bf16.msra.mxu0 %v636
  %921 = vmatprep.subr.bf16.mxu0 0
  %922 = vmatpush1.bf16.msra.mxu0 0
  %923 = vmatprep.subr.bf16.mxu0 0
  %924 = vmatpush1.bf16.msra.mxu0 0
  %925 = vmatprep.subr.bf16.mxu0 0
  %926 = vmatpush1.bf16.msra.mxu0 0
  %927 = vmatprep.subr.bf16.mxu0 0
  %928 = vmatpush1.bf16.msra.mxu0 0
  %929 = vmatprep.subr.bf16.mxu0 0
  %930 = vmatpush1.bf16.msra.mxu0 0
  %931 = vmatprep.subr.bf16.mxu0 0
  %932 = vmatpush1.bf16.msra.mxu0 0
  %933 = vmatprep.subr.bf16.mxu0 0
  %934 = vmatpush1.bf16.msra.mxu0 0
  %935 = vmatprep.subr.bf16.mxu0 0
  %936 = vmatpush1.bf16.msra.mxu0 0
  %937 = vmatprep.mubr.bf16.mxu0 0
  %938 = vmatmul.mubr.bf16.gmra.mrb[0].mxu0 %v249
  %v939 = vpop.f32.mrb[0].mxu0
  %v940 = vadd.f32 %v891, %v939
  %v941 = vpop.f32.mrb[0].mxu0
  %v942 = vpop.f32.mrb[0].mxu0
  %v943 = vadd.f32 %v894, %v942
  %v944 = vpop.f32.mrb[0].mxu0
  %945 = vmatprep.mubr.bf16.mxu0 0
  %946 = vmatmul.mubr.bf16.gmra.mrb[0].mxu0 %v258
  %v947 = vpop.f32.mrb[0].mxu0
  %v948 = vadd.f32 %v899, %v947
  %v949 = vpop.f32.mrb[0].mxu0
  %v950 = vpop.f32.mrb[0].mxu0
  %v951 = vadd.f32 %v902, %v950
  %v952 = vpop.f32.mrb[0].mxu0
  %953 = vdwg.mxu0
  %v954 = vadd.f32 %v940, %v943
  %v955 = vadd.f32 %v954, %v948
  %v956 = vadd.f32 %v955, %v951
  %v957 = vrot.slane %v956, 4
  %v958 = vadd.f32 %v956, %v957
  %v959 = vrot.slane %v958, 2
  %v960 = vadd.f32 %v958, %v959
  %v961 = vrot.slane %v960, 1
  %v962 = vadd.f32 %v960, %v961
  %v963 = vmul.f32 %v962, 0.03125
  %v964 = vmul.f32 %v940, %v940
  %v965 = vmul.f32 %v943, %v943
  %v966 = vmul.f32 %v948, %v948
  %v967 = vmul.f32 %v951, %v951
  %v968 = vadd.f32 %v964, %v965
  %v969 = vadd.f32 %v968, %v966
  %v970 = vadd.f32 %v969, %v967
  %v971 = vrot.slane %v970, 4
  %v972 = vadd.f32 %v970, %v971
  %v973 = vrot.slane %v972, 2
  %v974 = vadd.f32 %v972, %v973
  %v975 = vrot.slane %v974, 1
  %v976 = vadd.f32 %v974, %v975
  %v977 = vmul.f32 %v976, 0.03125
  %v978 = vmul.f32 %v963, %v963
  %v979 = vsub.f32 %v977, %v978
  %v980 = vsub.f32 %v940, %v963
  %v981 = vsub.f32 %v943, %v963
  %v982 = vsub.f32 %v948, %v963
  %v983 = vsub.f32 %v951, %v963
  %v984 = vadd.f32 %v979, 1e-05
  %v985 = vrsqrt.pop %v984
  %v986 = vmul.f32 %v980, %v985
  %v987 = vmul.f32 %v981, %v985
  %v988 = vmul.f32 %v982, %v985
  %v989 = vmul.f32 %v983, %v985
  %v990 = vld [vmem:[%s2] sm:$0x1]
  %v992 = vlaneseq
  %v993 = vshrl.u32 %v992, 7
  %v994 = vsub.s32 0, %v993
  %v995 = vrot.slane %v990, %v994
  %v997 = vmul.f32 %v986, %v995
  %v998 = vmul.f32 %v987, %v995
  %v999 = vmul.f32 %v988, %v995
  %v1000 = vmul.f32 %v989, %v995
  %v1001 = vld [vmem:[%s3] sm:$0x1]
  %v1003 = vlaneseq
  %v1004 = vshrl.u32 %v1003, 7
  %v1005 = vsub.s32 0, %v1004
  %v1006 = vrot.slane %v1001, %v1005
  %v1008 = vadd.f32 %v997, %v1006
  %v1009 = vadd.f32 %v998, %v1006
  %v1010 = vadd.f32 %v999, %v1006
  %v1011 = vadd.f32 %v1000, %v1006
  %v1012 = vld [vmem:[%s4] sm:$0xf]
  %v1013 = vld [vmem:[%s4 + $0x4] sm:$0xf]
  %v1014 = vld [vmem:[%s4 + $0x8] sm:$0xf]
  %v1015 = vld [vmem:[%s4 + $0xc] sm:$0xf]
  %v1016 = vunpack.c.l.bf16 %v1012
  %v1017 = vunpack.c.l.bf16 %v1013
  %v1018 = vunpack.c.l.bf16 %v1014
  %v1019 = vunpack.c.l.bf16 %v1015
  %v1020 = vadd.f32 %v1008, %v1016
  %v1021 = vadd.f32 %v1009, %v1017
  %v1022 = vadd.f32 %v1010, %v1018
  %v1023 = vadd.f32 %v1011, %v1019
  %v1024 = vmax.f32 %v1020, 0.0
  %v1025 = vmax.f32 %v1021, 0.0
  %v1026 = vmax.f32 %v1022, 0.0
  %v1027 = vmax.f32 %v1023, 0.0
  %v1028 = vpack.c.bf16 %v1025, %v1024
  %v1029 = vpack.c.bf16 %v1027, %v1026
  %v1032 = vunpack.c.l.b16 %v1028
  %v1033 = vunpack.c.h.b16 %v1028
  %v1034 = vunpack.c.l.b16 %v1029
  %v1035 = vunpack.c.h.b16 %v1029
  %v1036 = vpack.c.b16 %v1032, %v1032
  %v1037 = vpack.c.b16 %v1033, %v1033
  %v1038 = vpack.c.b16 %v1034, %v1034
  %v1039 = vpack.c.b16 %v1035, %v1035
  %1044 = vst [vmem:[%s5] sm:$0xf] %v1036
  %1045 = vst [vmem:[%s5 + $0x4] sm:$0xf] %v1037
  %1046 = vst [vmem:[%s5 + $0x8] sm:$0xf] %v1038
  %1047 = vst [vmem:[%s5 + $0xc] sm:$0xf] %v1039
  // Predicated region
  $region22: #{resnet_forward.10} parent=0 // pred_check
    _
  $region23: #{resnet_forward.10} parent=0 // pred_check_branch
    %1049 = sbr.rel (0) target = $region25
  $region24: #{resnet_forward.10} parent=0 // pred_region
    _
  $region25: #{resnet_forward.10} parent=0 // pred_fallthru
    _
  // Predicated region
  $region26: #{resnet_forward.10} parent=0 // pred_check
    _
  $region27: #{resnet_forward.10} parent=0 // pred_check_branch
    %1051 = sbr.rel (0) target = $region29
  $region28: #{resnet_forward.10} parent=0 // pred_region
    _
  $region29: #{resnet_forward.10} parent=0 // pred_fallthru
    _

// kernel: resnet_forward.9
$region0: #{resnet_forward.9}
  #allocation0 [shape = 'u32[]', space=smem, size = 0x4, offset = 0x4, fixed_abs, tag = 'smem constant byte address 0x4 - core index']
  #allocation1 [shape = 'u32[144,128]{1,0:T(1,128)}', space=vmem, size = 0x12000, scoped, tag = 'internal scratch']
  %s0 = inlined_call_operand.vmem [shape: bf16[32,1152], index: 0, kind: input, shape index: {}]
  %s1 = inlined_call_operand.vmem [shape: bf16[1152,128], index: 1, kind: input, shape index: {}]
  %s2 = inlined_call_operand.vmem [shape: f32[1,128], index: 2, kind: input, shape index: {}]
  %s3 = inlined_call_operand.vmem [shape: f32[1,128], index: 3, kind: input, shape index: {}]
  %s4 = inlined_call_operand.vmem [shape: bf16[32,128], index: 4, kind: output, shape index: {}]
  %s5 = sld [smem:[#allocation0]]
  $region26: #{resnet_forward.9} parent=0
    _
  %s7 = ssub.s32 1, %s5
  %s8 = scalar_select 0, %s7, %s5
  // Predicated region
  $region2: #{resnet_forward.9} parent=0 // pred_check
    _
  $region3: #{resnet_forward.9} parent=0 // pred_check_branch
    %10 = sbr.rel (0) target = $region5
  $region4: #{resnet_forward.9} parent=0 // pred_region
    _
  $region5: #{resnet_forward.9} parent=0 // pred_fallthru
    _
  // Predicated region
  $region6: #{resnet_forward.9} parent=0 // pred_check
    _
  $region7: #{resnet_forward.9} parent=0 // pred_check_branch
    %12 = sbr.rel (0) target = $region9
  $region8: #{resnet_forward.9} parent=0 // pred_region
    _
  $region9: #{resnet_forward.9} parent=0 // pred_fallthru
    _
  // Predicated region
  $region10: #{resnet_forward.9} parent=0 // pred_check
    _
  $region11: #{resnet_forward.9} parent=0 // pred_check_branch
    %14 = sbr.rel (0) target = $region13
  $region12: #{resnet_forward.9} parent=0 // pred_region
    _
  $region13: #{resnet_forward.9} parent=0 // pred_fallthru
    _
  // Predicated region
  $region14: #{resnet_forward.9} parent=0 // pred_check
    _
  $region15: #{resnet_forward.9} parent=0 // pred_check_branch
    %16 = sbr.rel (0) target = $region17
  $region16: #{resnet_forward.9} parent=0 // pred_region
    _
  $region17: #{resnet_forward.9} parent=0 // pred_fallthru
    _
  %v18 = vld [vmem:[%s0] sm:$0xff]
  %v19 = vld [vmem:[%s0 + $0x8] sm:$0xff]
  %v20 = vld [vmem:[%s0 + $0x10] sm:$0xff]
  %v21 = vld [vmem:[%s0 + $0x18] sm:$0xff]
  %v22 = vld [vmem:[%s0 + $0x20] sm:$0xf]
  %v23 = vld [vmem:[%s0 + $0x24] sm:$0xff]
  %v24 = vld [vmem:[%s0 + $0x2c] sm:$0xff]
  %v25 = vld [vmem:[%s0 + $0x34] sm:$0xff]
  %v26 = vld [vmem:[%s0 + $0x3c] sm:$0xff]
  %v27 = vld [vmem:[%s0 + $0x44] sm:$0xf]
  %v28 = vld [vmem:[%s0 + $0x48] sm:$0xff]
  %v29 = vld [vmem:[%s0 + $0x50] sm:$0xff]
  %v30 = vld [vmem:[%s0 + $0x58] sm:$0xff]
  %v31 = vld [vmem:[%s0 + $0x60] sm:$0xff]
  %v32 = vld [vmem:[%s0 + $0x68] sm:$0xf]
  %v33 = vld [vmem:[%s0 + $0x6c] sm:$0xff]
  %v34 = vld [vmem:[%s0 + $0x74] sm:$0xff]
  %v35 = vld [vmem:[%s0 + $0x7c] sm:$0xff]
  %v36 = vld [vmem:[%s0 + $0x84] sm:$0xff]
  %v37 = vld [vmem:[%s0 + $0x8c] sm:$0xf]
  %v38 = vld [vmem:[%s1] sm:$0xf]
  %v39 = vld [vmem:[%s1 + $0x4] sm:$0xf]
  %v40 = vld [vmem:[%s1 + $0x8] sm:$0xf]
  %v41 = vld [vmem:[%s1 + $0xc] sm:$0xf]
  %v42 = vld [vmem:[%s1 + $0x10] sm:$0xf]
  %v43 = vld [vmem:[%s1 + $0x14] sm:$0xf]
  %v44 = vld [vmem:[%s1 + $0x18] sm:$0xf]
  %v45 = vld [vmem:[%s1 + $0x1c] sm:$0xf]
  %v46 = vld [vmem:[%s1 + $0x20] sm:$0xf]
  %v47 = vld [vmem:[%s1 + $0x24] sm:$0xf]
  %v48 = vld [vmem:[%s1 + $0x28] sm:$0xf]
  %v49 = vld [vmem:[%s1 + $0x2c] sm:$0xf]
  %v50 = vld [vmem:[%s1 + $0x30] sm:$0xf]
  %v51 = vld [vmem:[%s1 + $0x34] sm:$0xf]
  %v52 = vld [vmem:[%s1 + $0x38] sm:$0xf]
  %v53 = vld [vmem:[%s1 + $0x3c] sm:$0xf]
  %v54 = vld [vmem:[%s1 + $0x40] sm:$0xf]
  %v55 = vld [vmem:[%s1 + $0x44] sm:$0xf]
  %v56 = vld [vmem:[%s1 + $0x48] sm:$0xf]
  %v57 = vld [vmem:[%s1 + $0x4c] sm:$0xf]
  %v58 = vld [vmem:[%s1 + $0x50] sm:$0xf]
  %v59 = vld [vmem:[%s1 + $0x54] sm:$0xf]
  %v60 = vld [vmem:[%s1 + $0x58] sm:$0xf]
  %v61 = vld [vmem:[%s1 + $0x5c] sm:$0xf]
  %v62 = vld [vmem:[%s1 + $0x60] sm:$0xf]
  %v63 = vld [vmem:[%s1 + $0x64] sm:$0xf]
  %v64 = vld [vmem:[%s1 + $0x68] sm:$0xf]
  %v65 = vld [vmem:[%s1 + $0x6c] sm:$0xf]
  %v66 = vld [vmem:[%s1 + $0x70] sm:$0xf]
  %v67 = vld [vmem:[%s1 + $0x74] sm:$0xf]
  %v68 = vld [vmem:[%s1 + $0x78] sm:$0xf]
  %v69 = vld [vmem:[%s1 + $0x7c] sm:$0xf]
  %v70 = vld [vmem:[%s1 + $0x80] sm:$0xf]
  %v71 = vld [vmem:[%s1 + $0x84] sm:$0xf]
  %v72 = vld [vmem:[%s1 + $0x88] sm:$0xf]
  %v73 = vld [vmem:[%s1 + $0x8c] sm:$0xf]
  %v74 = vld [vmem:[%s1 + $0x90] sm:$0xf]
  %v75 = vld [vmem:[%s1 + $0x94] sm:$0xf]
  %v76 = vld [vmem:[%s1 + $0x98] sm:$0xf]
  %v77 = vld [vmem:[%s1 + $0x9c] sm:$0xf]
  %v78 = vld [vmem:[%s1 + $0xa0] sm:$0xf]
  %v79 = vld [vmem:[%s1 + $0xa4] sm:$0xf]
  %v80 = vld [vmem:[%s1 + $0xa8] sm:$0xf]
  %v81 = vld [vmem:[%s1 + $0xac] sm:$0xf]
  %v82 = vld [vmem:[%s1 + $0xb0] sm:$0xf]
  %v83 = vld [vmem:[%s1 + $0xb4] sm:$0xf]
  %v84 = vld [vmem:[%s1 + $0xb8] sm:$0xf]
  %v85 = vld [vmem:[%s1 + $0xbc] sm:$0xf]
  %v86 = vld [vmem:[%s1 + $0xc0] sm:$0xf]
  %v87 = vld [vmem:[%s1 + $0xc4] sm:$0xf]
  %v88 = vld [vmem:[%s1 + $0xc8] sm:$0xf]
  %v89 = vld [vmem:[%s1 + $0xcc] sm:$0xf]
  %v90 = vld [vmem:[%s1 + $0xd0] sm:$0xf]
  %v91 = vld [vmem:[%s1 + $0xd4] sm:$0xf]
  %v92 = vld [vmem:[%s1 + $0xd8] sm:$0xf]
  %v93 = vld [vmem:[%s1 + $0xdc] sm:$0xf]
  %v94 = vld [vmem:[%s1 + $0xe0] sm:$0xf]
  %v95 = vld [vmem:[%s1 + $0xe4] sm:$0xf]
  %v96 = vld [vmem:[%s1 + $0xe8] sm:$0xf]
  %v97 = vld [vmem:[%s1 + $0xec] sm:$0xf]
  %v98 = vld [vmem:[%s1 + $0xf0] sm:$0xf]
  %v99 = vld [vmem:[%s1 + $0xf4] sm:$0xf]
  %v100 = vld [vmem:[%s1 + $0xf8] sm:$0xf]
  %v101 = vld [vmem:[%s1 + $0xfc] sm:$0xf]
  %v102 = vld [vmem:[%s1 + $0x100] sm:$0xf]
  %v103 = vld [vmem:[%s1 + $0x104] sm:$0xf]
  %v104 = vld [vmem:[%s1 + $0x108] sm:$0xf]
  %v105 = vld [vmem:[%s1 + $0x10c] sm:$0xf]
  %v106 = vld [vmem:[%s1 + $0x110] sm:$0xf]
  %v107 = vld [vmem:[%s1 + $0x114] sm:$0xf]
  %v108 = vld [vmem:[%s1 + $0x118] sm:$0xf]
  %v109 = vld [vmem:[%s1 + $0x11c] sm:$0xf]
  %v110 = vld [vmem:[%s1 + $0x120] sm:$0xf]
  %v111 = vld [vmem:[%s1 + $0x124] sm:$0xf]
  %v112 = vld [vmem:[%s1 + $0x128] sm:$0xf]
  %v113 = vld [vmem:[%s1 + $0x12c] sm:$0xf]
  %v114 = vld [vmem:[%s1 + $0x130] sm:$0xf]
  %v115 = vld [vmem:[%s1 + $0x134] sm:$0xf]
  %v116 = vld [vmem:[%s1 + $0x138] sm:$0xf]
  %v117 = vld [vmem:[%s1 + $0x13c] sm:$0xf]
  %v118 = vld [vmem:[%s1 + $0x140] sm:$0xf]
  %v119 = vld [vmem:[%s1 + $0x144] sm:$0xf]
  %v120 = vld [vmem:[%s1 + $0x148] sm:$0xf]
  %v121 = vld [vmem:[%s1 + $0x14c] sm:$0xf]
  %v122 = vld [vmem:[%s1 + $0x150] sm:$0xf]
  %v123 = vld [vmem:[%s1 + $0x154] sm:$0xf]
  %v124 = vld [vmem:[%s1 + $0x158] sm:$0xf]
  %v125 = vld [vmem:[%s1 + $0x15c] sm:$0xf]
  %v126 = vld [vmem:[%s1 + $0x160] sm:$0xf]
  %v127 = vld [vmem:[%s1 + $0x164] sm:$0xf]
  %v128 = vld [vmem:[%s1 + $0x168] sm:$0xf]
  %v129 = vld [vmem:[%s1 + $0x16c] sm:$0xf]
  %v130 = vld [vmem:[%s1 + $0x170] sm:$0xf]
  %v131 = vld [vmem:[%s1 + $0x174] sm:$0xf]
  %v132 = vld [vmem:[%s1 + $0x178] sm:$0xf]
  %v133 = vld [vmem:[%s1 + $0x17c] sm:$0xf]
  %v134 = vld [vmem:[%s1 + $0x180] sm:$0xf]
  %v135 = vld [vmem:[%s1 + $0x184] sm:$0xf]
  %v136 = vld [vmem:[%s1 + $0x188] sm:$0xf]
  %v137 = vld [vmem:[%s1 + $0x18c] sm:$0xf]
  %v138 = vld [vmem:[%s1 + $0x190] sm:$0xf]
  %v139 = vld [vmem:[%s1 + $0x194] sm:$0xf]
  %v140 = vld [vmem:[%s1 + $0x198] sm:$0xf]
  %v141 = vld [vmem:[%s1 + $0x19c] sm:$0xf]
  %v142 = vld [vmem:[%s1 + $0x1a0] sm:$0xf]
  %v143 = vld [vmem:[%s1 + $0x1a4] sm:$0xf]
  %v144 = vld [vmem:[%s1 + $0x1a8] sm:$0xf]
  %v145 = vld [vmem:[%s1 + $0x1ac] sm:$0xf]
  %v146 = vld [vmem:[%s1 + $0x1b0] sm:$0xf]
  %v147 = vld [vmem:[%s1 + $0x1b4] sm:$0xf]
  %v148 = vld [vmem:[%s1 + $0x1b8] sm:$0xf]
  %v149 = vld [vmem:[%s1 + $0x1bc] sm:$0xf]
  %v150 = vld [vmem:[%s1 + $0x1c0] sm:$0xf]
  %v151 = vld [vmem:[%s1 + $0x1c4] sm:$0xf]
  %v152 = vld [vmem:[%s1 + $0x1c8] sm:$0xf]
  %v153 = vld [vmem:[%s1 + $0x1cc] sm:$0xf]
  %v154 = vld [vmem:[%s1 + $0x1d0] sm:$0xf]
  %v155 = vld [vmem:[%s1 + $0x1d4] sm:$0xf]
  %v156 = vld [vmem:[%s1 + $0x1d8] sm:$0xf]
  %v157 = vld [vmem:[%s1 + $0x1dc] sm:$0xf]
  %v158 = vld [vmem:[%s1 + $0x1e0] sm:$0xf]
  %v159 = vld [vmem:[%s1 + $0x1e4] sm:$0xf]
  %v160 = vld [vmem:[%s1 + $0x1e8] sm:$0xf]
  %v161 = vld [vmem:[%s1 + $0x1ec] sm:$0xf]
  %v162 = vld [vmem:[%s1 + $0x1f0] sm:$0xf]
  %v163 = vld [vmem:[%s1 + $0x1f4] sm:$0xf]
  %v164 = vld [vmem:[%s1 + $0x1f8] sm:$0xf]
  %v165 = vld [vmem:[%s1 + $0x1fc] sm:$0xf]
  %v166 = vld [vmem:[%s1 + $0x200] sm:$0xf]
  %v167 = vld [vmem:[%s1 + $0x204] sm:$0xf]
  %v168 = vld [vmem:[%s1 + $0x208] sm:$0xf]
  %v169 = vld [vmem:[%s1 + $0x20c] sm:$0xf]
  %v170 = vld [vmem:[%s1 + $0x210] sm:$0xf]
  %v171 = vld [vmem:[%s1 + $0x214] sm:$0xf]
  %v172 = vld [vmem:[%s1 + $0x218] sm:$0xf]
  %v173 = vld [vmem:[%s1 + $0x21c] sm:$0xf]
  %v174 = vld [vmem:[%s1 + $0x220] sm:$0xf]
  %v175 = vld [vmem:[%s1 + $0x224] sm:$0xf]
  %v176 = vld [vmem:[%s1 + $0x228] sm:$0xf]
  %v177 = vld [vmem:[%s1 + $0x22c] sm:$0xf]
  %v178 = vld [vmem:[%s1 + $0x230] sm:$0xf]
  %v179 = vld [vmem:[%s1 + $0x234] sm:$0xf]
  %v180 = vld [vmem:[%s1 + $0x238] sm:$0xf]
  %v181 = vld [vmem:[%s1 + $0x23c] sm:$0xf]
  %v202 = vunpack.c.l.b16 %v18
  %v203 = vunpack.c.h.b16 %v18
  %v204 = vunpack.c.l.b16 %v19
  %v205 = vunpack.c.h.b16 %v19
  %v206 = vunpack.c.l.b16 %v20
  %v207 = vunpack.c.h.b16 %v20
  %v208 = vunpack.c.l.b16 %v21
  %v209 = vunpack.c.h.b16 %v21
  %v210 = vunpack.c.l.b16 %v22
  %v211 = vunpack.c.l.b16 %v23
  %v212 = vunpack.c.h.b16 %v23
  %v213 = vunpack.c.l.b16 %v24
  %v214 = vunpack.c.h.b16 %v24
  %v215 = vunpack.c.l.b16 %v25
  %v216 = vunpack.c.h.b16 %v25
  %v217 = vunpack.c.l.b16 %v26
  %v218 = vunpack.c.h.b16 %v26
  %v219 = vunpack.c.l.b16 %v27
  %v220 = vunpack.c.l.b16 %v28
  %v221 = vunpack.c.h.b16 %v28
  %v222 = vunpack.c.l.b16 %v29
  %v223 = vunpack.c.h.b16 %v29
  %v224 = vunpack.c.l.b16 %v30
  %v225 = vunpack.c.h.b16 %v30
  %v226 = vunpack.c.l.b16 %v31
  %v227 = vunpack.c.h.b16 %v31
  %v228 = vunpack.c.l.b16 %v32
  %v229 = vunpack.c.l.b16 %v33
  %v230 = vunpack.c.h.b16 %v33
  %v231 = vunpack.c.l.b16 %v34
  %v232 = vunpack.c.h.b16 %v34
  %v233 = vunpack.c.l.b16 %v35
  %v234 = vunpack.c.h.b16 %v35
  %v235 = vunpack.c.l.b16 %v36
  %v236 = vunpack.c.h.b16 %v36
  %v237 = vunpack.c.l.b16 %v37
  %v238 = vpack.c.b16 %v211, %v202
  %v239 = vpack.c.b16 %v212, %v203
  %v240 = vpack.c.b16 %v213, %v204
  %v241 = vpack.c.b16 %v214, %v205
  %v242 = vpack.c.b16 %v215, %v206
  %v243 = vpack.c.b16 %v216, %v207
  %v244 = vpack.c.b16 %v217, %v208
  %v245 = vpack.c.b16 %v218, %v209
  %v246 = vpack.c.b16 %v219, %v210
  %v247 = vpack.c.b16 %v229, %v220
  %v248 = vpack.c.b16 %v230, %v221
  %v249 = vpack.c.b16 %v231, %v222
  %v250 = vpack.c.b16 %v232, %v223
  %v251 = vpack.c.b16 %v233, %v224
  %v252 = vpack.c.b16 %v234, %v225
  %v253 = vpack.c.b16 %v235, %v226
  %v254 = vpack.c.b16 %v236, %v227
  %v255 = vpack.c.b16 %v237, %v228
  %v418 = vunpack.c.l.b16 %v38
  %v419 = vunpack.c.l.b16 %v39
  %v420 = vunpack.c.l.b16 %v40
  %v421 = vunpack.c.l.b16 %v41
  %v422 = vunpack.c.l.b16 %v42
  %v423 = vunpack.c.l.b16 %v43
  %v424 = vunpack.c.l.b16 %v44
  %v425 = vunpack.c.l.b16 %v45
  %v426 = vunpack.c.l.b16 %v46
  %v427 = vunpack.c.l.b16 %v47
  %v428 = vunpack.c.l.b16 %v48
  %v429 = vunpack.c.l.b16 %v49
  %v430 = vunpack.c.l.b16 %v50
  %v431 = vunpack.c.l.b16 %v51
  %v432 = vunpack.c.l.b16 %v52
  %v433 = vunpack.c.l.b16 %v53
  %v434 = vunpack.c.l.b16 %v54
  %v435 = vunpack.c.l.b16 %v55
  %v436 = vunpack.c.l.b16 %v56
  %v437 = vunpack.c.l.b16 %v57
  %v438 = vunpack.c.l.b16 %v58
  %v439 = vunpack.c.l.b16 %v59
  %v440 = vunpack.c.l.b16 %v60
  %v441 = vunpack.c.l.b16 %v61
  %v442 = vunpack.c.l.b16 %v62
  %v443 = vunpack.c.l.b16 %v63
  %v444 = vunpack.c.l.b16 %v64
  %v445 = vunpack.c.l.b16 %v65
  %v446 = vunpack.c.l.b16 %v66
  %v447 = vunpack.c.l.b16 %v67
  %v448 = vunpack.c.l.b16 %v68
  %v449 = vunpack.c.l.b16 %v69
  %v450 = vunpack.c.l.b16 %v70
  %v451 = vunpack.c.l.b16 %v71
  %v452 = vunpack.c.l.b16 %v72
  %v453 = vunpack.c.l.b16 %v73
  %v454 = vunpack.c.l.b16 %v74
  %v455 = vunpack.c.l.b16 %v75
  %v456 = vunpack.c.l.b16 %v76
  %v457 = vunpack.c.l.b16 %v77
  %v458 = vunpack.c.l.b16 %v78
  %v459 = vunpack.c.l.b16 %v79
  %v460 = vunpack.c.l.b16 %v80
  %v461 = vunpack.c.l.b16 %v81
  %v462 = vunpack.c.l.b16 %v82
  %v463 = vunpack.c.l.b16 %v83
  %v464 = vunpack.c.l.b16 %v84
  %v465 = vunpack.c.l.b16 %v85
  %v466 = vunpack.c.l.b16 %v86
  %v467 = vunpack.c.l.b16 %v87
  %v468 = vunpack.c.l.b16 %v88
  %v469 = vunpack.c.l.b16 %v89
  %v470 = vunpack.c.l.b16 %v90
  %v471 = vunpack.c.l.b16 %v91
  %v472 = vunpack.c.l.b16 %v92
  %v473 = vunpack.c.l.b16 %v93
  %v474 = vunpack.c.l.b16 %v94
  %v475 = vunpack.c.l.b16 %v95
  %v476 = vunpack.c.l.b16 %v96
  %v477 = vunpack.c.l.b16 %v97
  %v478 = vunpack.c.l.b16 %v98
  %v479 = vunpack.c.l.b16 %v99
  %v480 = vunpack.c.l.b16 %v100
  %v481 = vunpack.c.l.b16 %v101
  %v482 = vunpack.c.l.b16 %v102
  %v483 = vunpack.c.l.b16 %v103
  %v484 = vunpack.c.l.b16 %v104
  %v485 = vunpack.c.l.b16 %v105
  %v486 = vunpack.c.l.b16 %v106
  %v487 = vunpack.c.l.b16 %v107
  %v488 = vunpack.c.l.b16 %v108
  %v489 = vunpack.c.l.b16 %v109
  %v490 = vunpack.c.l.b16 %v110
  %v491 = vunpack.c.l.b16 %v111
  %v492 = vunpack.c.l.b16 %v112
  %v493 = vunpack.c.l.b16 %v113
  %v494 = vunpack.c.l.b16 %v114
  %v495 = vunpack.c.l.b16 %v115
  %v496 = vunpack.c.l.b16 %v116
  %v497 = vunpack.c.l.b16 %v117
  %v498 = vunpack.c.l.b16 %v118
  %v499 = vunpack.c.l.b16 %v119
  %v500 = vunpack.c.l.b16 %v120
  %v501 = vunpack.c.l.b16 %v121
  %v502 = vunpack.c.l.b16 %v122
  %v503 = vunpack.c.l.b16 %v123
  %v504 = vunpack.c.l.b16 %v124
  %v505 = vunpack.c.l.b16 %v125
  %v506 = vunpack.c.l.b16 %v126
  %v507 = vunpack.c.l.b16 %v127
  %v508 = vunpack.c.l.b16 %v128
  %v509 = vunpack.c.l.b16 %v129
  %v510 = vunpack.c.l.b16 %v130
  %v511 = vunpack.c.l.b16 %v131
  %v512 = vunpack.c.l.b16 %v132
  %v513 = vunpack.c.l.b16 %v133
  %v514 = vunpack.c.l.b16 %v134
  %v515 = vunpack.c.l.b16 %v135
  %v516 = vunpack.c.l.b16 %v136
  %v517 = vunpack.c.l.b16 %v137
  %v518 = vunpack.c.l.b16 %v138
  %v519 = vunpack.c.l.b16 %v139
  %v520 = vunpack.c.l.b16 %v140
  %v521 = vunpack.c.l.b16 %v141
  %v522 = vunpack.c.l.b16 %v142
  %v523 = vunpack.c.l.b16 %v143
  %v524 = vunpack.c.l.b16 %v144
  %v525 = vunpack.c.l.b16 %v145
  %v526 = vunpack.c.l.b16 %v146
  %v527 = vunpack.c.l.b16 %v147
  %v528 = vunpack.c.l.b16 %v148
  %v529 = vunpack.c.l.b16 %v149
  %v530 = vunpack.c.l.b16 %v150
  %v531 = vunpack.c.l.b16 %v151
  %v532 = vunpack.c.l.b16 %v152
  %v533 = vunpack.c.l.b16 %v153
  %v534 = vunpack.c.l.b16 %v154
  %v535 = vunpack.c.l.b16 %v155
  %v536 = vunpack.c.l.b16 %v156
  %v537 = vunpack.c.l.b16 %v157
  %v538 = vunpack.c.l.b16 %v158
  %v539 = vunpack.c.l.b16 %v159
  %v540 = vunpack.c.l.b16 %v160
  %v541 = vunpack.c.l.b16 %v161
  %v542 = vunpack.c.l.b16 %v162
  %v543 = vunpack.c.l.b16 %v163
  %v544 = vunpack.c.l.b16 %v164
  %v545 = vunpack.c.l.b16 %v165
  %v546 = vunpack.c.l.b16 %v166
  %v547 = vunpack.c.l.b16 %v167
  %v548 = vunpack.c.l.b16 %v168
  %v549 = vunpack.c.l.b16 %v169
  %v550 = vunpack.c.l.b16 %v170
  %v551 = vunpack.c.l.b16 %v171
  %v552 = vunpack.c.l.b16 %v172
  %v553 = vunpack.c.l.b16 %v173
  %v554 = vunpack.c.l.b16 %v174
  %v555 = vunpack.c.l.b16 %v175
  %v556 = vunpack.c.l.b16 %v176
  %v557 = vunpack.c.l.b16 %v177
  %v558 = vunpack.c.l.b16 %v178
  %v559 = vunpack.c.l.b16 %v179
  %v560 = vunpack.c.l.b16 %v180
  %v561 = vunpack.c.l.b16 %v181
  %v562 = vpack.c.b16 %v419, %v418
  %v563 = vpack.c.b16 %v421, %v420
  %v564 = vpack.c.b16 %v423, %v422
  %v565 = vpack.c.b16 %v425, %v424
  %v566 = vpack.c.b16 %v427, %v426
  %v567 = vpack.c.b16 %v429, %v428
  %v568 = vpack.c.b16 %v431, %v430
  %v569 = vpack.c.b16 %v433, %v432
  %v570 = vpack.c.b16 %v435, %v434
  %v571 = vpack.c.b16 %v437, %v436
  %v572 = vpack.c.b16 %v439, %v438
  %v573 = vpack.c.b16 %v441, %v440
  %v574 = vpack.c.b16 %v443, %v442
  %v575 = vpack.c.b16 %v445, %v444
  %v576 = vpack.c.b16 %v447, %v446
  %v577 = vpack.c.b16 %v449, %v448
  %v578 = vpack.c.b16 %v451, %v450
  %v579 = vpack.c.b16 %v453, %v452
  %v580 = vpack.c.b16 %v455, %v454
  %v581 = vpack.c.b16 %v457, %v456
  %v582 = vpack.c.b16 %v459, %v458
  %v583 = vpack.c.b16 %v461, %v460
  %v584 = vpack.c.b16 %v463, %v462
  %v585 = vpack.c.b16 %v465, %v464
  %v586 = vpack.c.b16 %v467, %v466
  %v587 = vpack.c.b16 %v469, %v468
  %v588 = vpack.c.b16 %v471, %v470
  %v589 = vpack.c.b16 %v473, %v472
  %v590 = vpack.c.b16 %v475, %v474
  %v591 = vpack.c.b16 %v477, %v476
  %v592 = vpack.c.b16 %v479, %v478
  %v593 = vpack.c.b16 %v481, %v480
  %v594 = vpack.c.b16 %v483, %v482
  %v595 = vpack.c.b16 %v485, %v484
  %v596 = vpack.c.b16 %v487, %v486
  %v597 = vpack.c.b16 %v489, %v488
  %v598 = vpack.c.b16 %v491, %v490
  %v599 = vpack.c.b16 %v493, %v492
  %v600 = vpack.c.b16 %v495, %v494
  %v601 = vpack.c.b16 %v497, %v496
  %v602 = vpack.c.b16 %v499, %v498
  %v603 = vpack.c.b16 %v501, %v500
  %v604 = vpack.c.b16 %v503, %v502
  %v605 = vpack.c.b16 %v505, %v504
  %v606 = vpack.c.b16 %v507, %v506
  %v607 = vpack.c.b16 %v509, %v508
  %v608 = vpack.c.b16 %v511, %v510
  %v609 = vpack.c.b16 %v513, %v512
  %v610 = vpack.c.b16 %v515, %v514
  %v611 = vpack.c.b16 %v517, %v516
  %v612 = vpack.c.b16 %v519, %v518
  %v613 = vpack.c.b16 %v521, %v520
  %v614 = vpack.c.b16 %v523, %v522
  %v615 = vpack.c.b16 %v525, %v524
  %v616 = vpack.c.b16 %v527, %v526
  %v617 = vpack.c.b16 %v529, %v528
  %v618 = vpack.c.b16 %v531, %v530
  %v619 = vpack.c.b16 %v533, %v532
  %v620 = vpack.c.b16 %v535, %v534
  %v621 = vpack.c.b16 %v537, %v536
  %v622 = vpack.c.b16 %v539, %v538
  %v623 = vpack.c.b16 %v541, %v540
  %v624 = vpack.c.b16 %v543, %v542
  %v625 = vpack.c.b16 %v545, %v544
  %v626 = vpack.c.b16 %v547, %v546
  %v627 = vpack.c.b16 %v549, %v548
  %v628 = vpack.c.b16 %v551, %v550
  %v629 = vpack.c.b16 %v553, %v552
  %v630 = vpack.c.b16 %v555, %v554
  %v631 = vpack.c.b16 %v557, %v556
  %v632 = vpack.c.b16 %v559, %v558
  %v633 = vpack.c.b16 %v561, %v560
  %706 = vmatprep.subr.bf16.mxu0 0
  %707 = vmatpush1.bf16.msra.mxu0 %v562
  %708 = vmatprep.subr.bf16.mxu0 0
  %709 = vmatpush1.bf16.msra.mxu0 %v563
  %710 = vmatprep.subr.bf16.mxu0 0
  %711 = vmatpush1.bf16.msra.mxu0 %v564
  %712 = vmatprep.subr.bf16.mxu0 0
  %713 = vmatpush1.bf16.msra.mxu0 %v565
  %714 = vmatprep.subr.bf16.mxu0 0
  %715 = vmatpush1.bf16.msra.mxu0 %v566
  %716 = vmatprep.subr.bf16.mxu0 0
  %717 = vmatpush1.bf16.msra.mxu0 %v567
  %718 = vmatprep.subr.bf16.mxu0 0
  %719 = vmatpush1.bf16.msra.mxu0 %v568
  %720 = vmatprep.subr.bf16.mxu0 0
  %721 = vmatpush1.bf16.msra.mxu0 %v569
  %722 = vmatprep.subr.bf16.mxu0 0
  %723 = vmatpush1.bf16.msra.mxu0 %v570
  %724 = vmatprep.subr.bf16.mxu0 0
  %725 = vmatpush1.bf16.msra.mxu0 %v571
  %726 = vmatprep.subr.bf16.mxu0 0
  %727 = vmatpush1.bf16.msra.mxu0 %v572
  %728 = vmatprep.subr.bf16.mxu0 0
  %729 = vmatpush1.bf16.msra.mxu0 %v573
  %730 = vmatprep.subr.bf16.mxu0 0
  %731 = vmatpush1.bf16.msra.mxu0 %v574
  %732 = vmatprep.subr.bf16.mxu0 0
  %733 = vmatpush1.bf16.msra.mxu0 %v575
  %734 = vmatprep.subr.bf16.mxu0 0
  %735 = vmatpush1.bf16.msra.mxu0 %v576
  %736 = vmatprep.subr.bf16.mxu0 0
  %737 = vmatpush1.bf16.msra.mxu0 %v577
  %738 = vmatprep.mubr.bf16.mxu0 %v239
  %739 = vmatmul.mubr.bf16.gmra.mrb[0].mxu0 %v238
  %v740 = vpop.f32.mrb[0].mxu0
  %v741 = vadd.f32 0.0, %v740
  %v742 = vpop.f32.mrb[0].mxu0
  %v743 = vpop.f32.mrb[0].mxu0
  %v744 = vadd.f32 0.0, %v743
  %v745 = vpop.f32.mrb[0].mxu0
  %746 = vmatprep.mubr.bf16.mxu0 %v248
  %747 = vmatmul.mubr.bf16.gmra.mrb[0].mxu0 %v247
  %v748 = vpop.f32.mrb[0].mxu0
  %v749 = vadd.f32 0.0, %v748
  %v750 = vpop.f32.mrb[0].mxu0
  %v751 = vpop.f32.mrb[0].mxu0
  %v752 = vadd.f32 0.0, %v751
  %v753 = vpop.f32.mrb[0].mxu0
  %754 = vdwg.mxu0
  %755 = vmatprep.subr.bf16.mxu0 0
  %756 = vmatpush1.bf16.msra.mxu0 %v578
  %757 = vmatprep.subr.bf16.mxu0 0
  %758 = vmatpush1.bf16.msra.mxu0 %v579
  %759 = vmatprep.subr.bf16.mxu0 0
  %760 = vmatpush1.bf16.msra.mxu0 %v580
  %761 = vmatprep.subr.bf16.mxu0 0
  %762 = vmatpush1.bf16.msra.mxu0 %v581
  %763 = vmatprep.subr.bf16.mxu0 0
  %764 = vmatpush1.bf16.msra.mxu0 %v582
  %765 = vmatprep.subr.bf16.mxu0 0
  %766 = vmatpush1.bf16.msra.mxu0 %v583
  %767 = vmatprep.subr.bf16.mxu0 0
  %768 = vmatpush1.bf16.msra.mxu0 %v584
  %769 = vmatprep.subr.bf16.mxu0 0
  %770 = vmatpush1.bf16.msra.mxu0 %v585
  %771 = vmatprep.subr.bf16.mxu0 0
  %772 = vmatpush1.bf16.msra.mxu0 %v586
  %773 = vmatprep.subr.bf16.mxu0 0
  %774 = vmatpush1.bf16.msra.mxu0 %v587
  %775 = vmatprep.subr.bf16.mxu0 0
  %776 = vmatpush1.bf16.msra.mxu0 %v588
  %777 = vmatprep.subr.bf16.mxu0 0
  %778 = vmatpush1.bf16.msra.mxu0 %v589
  %779 = vmatprep.subr.bf16.mxu0 0
  %780 = vmatpush1.bf16.msra.mxu0 %v590
  %781 = vmatprep.subr.bf16.mxu0 0
  %782 = vmatpush1.bf16.msra.mxu0 %v591
  %783 = vmatprep.subr.bf16.mxu0 0
  %784 = vmatpush1.bf16.msra.mxu0 %v592
  %785 = vmatprep.subr.bf16.mxu0 0
  %786 = vmatpush1.bf16.msra.mxu0 %v593
  %787 = vmatprep.mubr.bf16.mxu0 %v241
  %788 = vmatmul.mubr.bf16.gmra.mrb[0].mxu0 %v240
  %v789 = vpop.f32.mrb[0].mxu0
  %v790 = vadd.f32 %v741, %v789
  %v791 = vpop.f32.mrb[0].mxu0
  %v792 = vpop.f32.mrb[0].mxu0
  %v793 = vadd.f32 %v744, %v792
  %v794 = vpop.f32.mrb[0].mxu0
  %795 = vmatprep.mubr.bf16.mxu0 %v250
  %796 = vmatmul.mubr.bf16.gmra.mrb[0].mxu0 %v249
  %v797 = vpop.f32.mrb[0].mxu0
  %v798 = vadd.f32 %v749, %v797
  %v799 = vpop.f32.mrb[0].mxu0
  %v800 = vpop.f32.mrb[0].mxu0
  %v801 = vadd.f32 %v752, %v800
  %v802 = vpop.f32.mrb[0].mxu0
  %803 = vdwg.mxu0
  %804 = vmatprep.subr.bf16.mxu0 0
  %805 = vmatpush1.bf16.msra.mxu0 %v594
  %806 = vmatprep.subr.bf16.mxu0 0
  %807 = vmatpush1.bf16.msra.mxu0 %v595
  %808 = vmatprep.subr.bf16.mxu0 0
  %809 = vmatpush1.bf16.msra.mxu0 %v596
  %810 = vmatprep.subr.bf16.mxu0 0
  %811 = vmatpush1.bf16.msra.mxu0 %v597
  %812 = vmatprep.subr.bf16.mxu0 0
  %813 = vmatpush1.bf16.msra.mxu0 %v598
  %814 = vmatprep.subr.bf16.mxu0 0
  %815 = vmatpush1.bf16.msra.mxu0 %v599
  %816 = vmatprep.subr.bf16.mxu0 0
  %817 = vmatpush1.bf16.msra.mxu0 %v600
  %818 = vmatprep.subr.bf16.mxu0 0
  %819 = vmatpush1.bf16.msra.mxu0 %v601
  %820 = vmatprep.subr.bf16.mxu0 0
  %821 = vmatpush1.bf16.msra.mxu0 %v602
  %822 = vmatprep.subr.bf16.mxu0 0
  %823 = vmatpush1.bf16.msra.mxu0 %v603
  %824 = vmatprep.subr.bf16.mxu0 0
  %825 = vmatpush1.bf16.msra.mxu0 %v604
  %826 = vmatprep.subr.bf16.mxu0 0
  %827 = vmatpush1.bf16.msra.mxu0 %v605
  %828 = vmatprep.subr.bf16.mxu0 0
  %829 = vmatpush1.bf16.msra.mxu0 %v606
  %830 = vmatprep.subr.bf16.mxu0 0
  %831 = vmatpush1.bf16.msra.mxu0 %v607
  %832 = vmatprep.subr.bf16.mxu0 0
  %833 = vmatpush1.bf16.msra.mxu0 %v608
  %834 = vmatprep.subr.bf16.mxu0 0
  %835 = vmatpush1.bf16.msra.mxu0 %v609
  %836 = vmatprep.mubr.bf16.mxu0 %v243
  %837 = vmatmul.mubr.bf16.gmra.mrb[0].mxu0 %v242
  %v838 = vpop.f32.mrb[0].mxu0
  %v839 = vadd.f32 %v790, %v838
  %v840 = vpop.f32.mrb[0].mxu0
  %v841 = vpop.f32.mrb[0].mxu0
  %v842 = vadd.f32 %v793, %v841
  %v843 = vpop.f32.mrb[0].mxu0
  %844 = vmatprep.mubr.bf16.mxu0 %v252
  %845 = vmatmul.mubr.bf16.gmra.mrb[0].mxu0 %v251
  %v846 = vpop.f32.mrb[0].mxu0
  %v847 = vadd.f32 %v798, %v846
  %v848 = vpop.f32.mrb[0].mxu0
  %v849 = vpop.f32.mrb[0].mxu0
  %v850 = vadd.f32 %v801, %v849
  %v851 = vpop.f32.mrb[0].mxu0
  %852 = vdwg.mxu0
  %853 = vmatprep.subr.bf16.mxu0 0
  %854 = vmatpush1.bf16.msra.mxu0 %v610
  %855 = vmatprep.subr.bf16.mxu0 0
  %856 = vmatpush1.bf16.msra.mxu0 %v611
  %857 = vmatprep.subr.bf16.mxu0 0
  %858 = vmatpush1.bf16.msra.mxu0 %v612
  %859 = vmatprep.subr.bf16.mxu0 0
  %860 = vmatpush1.bf16.msra.mxu0 %v613
  %861 = vmatprep.subr.bf16.mxu0 0
  %862 = vmatpush1.bf16.msra.mxu0 %v614
  %863 = vmatprep.subr.bf16.mxu0 0
  %864 = vmatpush1.bf16.msra.mxu0 %v615
  %865 = vmatprep.subr.bf16.mxu0 0
  %866 = vmatpush1.bf16.msra.mxu0 %v616
  %867 = vmatprep.subr.bf16.mxu0 0
  %868 = vmatpush1.bf16.msra.mxu0 %v617
  %869 = vmatprep.subr.bf16.mxu0 0
  %870 = vmatpush1.bf16.msra.mxu0 %v618
  %871 = vmatprep.subr.bf16.mxu0 0
  %872 = vmatpush1.bf16.msra.mxu0 %v619
  %873 = vmatprep.subr.bf16.mxu0 0
  %874 = vmatpush1.bf16.msra.mxu0 %v620
  %875 = vmatprep.subr.bf16.mxu0 0
  %876 = vmatpush1.bf16.msra.mxu0 %v621
  %877 = vmatprep.subr.bf16.mxu0 0
  %878 = vmatpush1.bf16.msra.mxu0 %v622
  %879 = vmatprep.subr.bf16.mxu0 0
  %880 = vmatpush1.bf16.msra.mxu0 %v623
  %881 = vmatprep.subr.bf16.mxu0 0
  %882 = vmatpush1.bf16.msra.mxu0 %v624
  %883 = vmatprep.subr.bf16.mxu0 0
  %884 = vmatpush1.bf16.msra.mxu0 %v625
  %885 = vmatprep.mubr.bf16.mxu0 %v245
  %886 = vmatmul.mubr.bf16.gmra.mrb[0].mxu0 %v244
  %v887 = vpop.f32.mrb[0].mxu0
  %v888 = vadd.f32 %v839, %v887
  %v889 = vpop.f32.mrb[0].mxu0
  %v890 = vpop.f32.mrb[0].mxu0
  %v891 = vadd.f32 %v842, %v890
  %v892 = vpop.f32.mrb[0].mxu0
  %893 = vmatprep.mubr.bf16.mxu0 %v254
  %894 = vmatmul.mubr.bf16.gmra.mrb[0].mxu0 %v253
  %v895 = vpop.f32.mrb[0].mxu0
  %v896 = vadd.f32 %v847, %v895
  %v897 = vpop.f32.mrb[0].mxu0
  %v898 = vpop.f32.mrb[0].mxu0
  %v899 = vadd.f32 %v850, %v898
  %v900 = vpop.f32.mrb[0].mxu0
  %901 = vdwg.mxu0
  %902 = vmatprep.subr.bf16.mxu0 0
  %903 = vmatpush1.bf16.msra.mxu0 %v626
  %904 = vmatprep.subr.bf16.mxu0 0
  %905 = vmatpush1.bf16.msra.mxu0 %v627
  %906 = vmatprep.subr.bf16.mxu0 0
  %907 = vmatpush1.bf16.msra.mxu0 %v628
  %908 = vmatprep.subr.bf16.mxu0 0
  %909 = vmatpush1.bf16.msra.mxu0 %v629
  %910 = vmatprep.subr.bf16.mxu0 0
  %911 = vmatpush1.bf16.msra.mxu0 %v630
  %912 = vmatprep.subr.bf16.mxu0 0
  %913 = vmatpush1.bf16.msra.mxu0 %v631
  %914 = vmatprep.subr.bf16.mxu0 0
  %915 = vmatpush1.bf16.msra.mxu0 %v632
  %916 = vmatprep.subr.bf16.mxu0 0
  %917 = vmatpush1.bf16.msra.mxu0 %v633
  %918 = vmatprep.subr.bf16.mxu0 0
  %919 = vmatpush1.bf16.msra.mxu0 0
  %920 = vmatprep.subr.bf16.mxu0 0
  %921 = vmatpush1.bf16.msra.mxu0 0
  %922 = vmatprep.subr.bf16.mxu0 0
  %923 = vmatpush1.bf16.msra.mxu0 0
  %924 = vmatprep.subr.bf16.mxu0 0
  %925 = vmatpush1.bf16.msra.mxu0 0
  %926 = vmatprep.subr.bf16.mxu0 0
  %927 = vmatpush1.bf16.msra.mxu0 0
  %928 = vmatprep.subr.bf16.mxu0 0
  %929 = vmatpush1.bf16.msra.mxu0 0
  %930 = vmatprep.subr.bf16.mxu0 0
  %931 = vmatpush1.bf16.msra.mxu0 0
  %932 = vmatprep.subr.bf16.mxu0 0
  %933 = vmatpush1.bf16.msra.mxu0 0
  %934 = vmatprep.mubr.bf16.mxu0 0
  %935 = vmatmul.mubr.bf16.gmra.mrb[0].mxu0 %v246
  %v936 = vpop.f32.mrb[0].mxu0
  %v937 = vadd.f32 %v888, %v936
  %v938 = vpop.f32.mrb[0].mxu0
  %v939 = vpop.f32.mrb[0].mxu0
  %v940 = vadd.f32 %v891, %v939
  %v941 = vpop.f32.mrb[0].mxu0
  %942 = vmatprep.mubr.bf16.mxu0 0
  %943 = vmatmul.mubr.bf16.gmra.mrb[0].mxu0 %v255
  %v944 = vpop.f32.mrb[0].mxu0
  %v945 = vadd.f32 %v896, %v944
  %v946 = vpop.f32.mrb[0].mxu0
  %v947 = vpop.f32.mrb[0].mxu0
  %v948 = vadd.f32 %v899, %v947
  %v949 = vpop.f32.mrb[0].mxu0
  %950 = vdwg.mxu0
  %v951 = vadd.f32 %v937, %v940
  %v952 = vadd.f32 %v951, %v945
  %v953 = vadd.f32 %v952, %v948
  %v954 = vrot.slane %v953, 4
  %v955 = vadd.f32 %v953, %v954
  %v956 = vrot.slane %v955, 2
  %v957 = vadd.f32 %v955, %v956
  %v958 = vrot.slane %v957, 1
  %v959 = vadd.f32 %v957, %v958
  %v960 = vmul.f32 %v959, 0.03125
  %v961 = vmul.f32 %v937, %v937
  %v962 = vmul.f32 %v940, %v940
  %v963 = vmul.f32 %v945, %v945
  %v964 = vmul.f32 %v948, %v948
  %v965 = vadd.f32 %v961, %v962
  %v966 = vadd.f32 %v965, %v963
  %v967 = vadd.f32 %v966, %v964
  %v968 = vrot.slane %v967, 4
  %v969 = vadd.f32 %v967, %v968
  %v970 = vrot.slane %v969, 2
  %v971 = vadd.f32 %v969, %v970
  %v972 = vrot.slane %v971, 1
  %v973 = vadd.f32 %v971, %v972
  %v974 = vmul.f32 %v973, 0.03125
  %v975 = vmul.f32 %v960, %v960
  %v976 = vsub.f32 %v974, %v975
  %v977 = vsub.f32 %v937, %v960
  %v978 = vsub.f32 %v940, %v960
  %v979 = vsub.f32 %v945, %v960
  %v980 = vsub.f32 %v948, %v960
  %v981 = vadd.f32 %v976, 1e-05
  %v982 = vrsqrt.pop %v981
  %v983 = vmul.f32 %v977, %v982
  %v984 = vmul.f32 %v978, %v982
  %v985 = vmul.f32 %v979, %v982
  %v986 = vmul.f32 %v980, %v982
  %v987 = vld [vmem:[%s2] sm:$0x1]
  %v989 = vlaneseq
  %v990 = vshrl.u32 %v989, 7
  %v991 = vsub.s32 0, %v990
  %v992 = vrot.slane %v987, %v991
  %v994 = vmul.f32 %v983, %v992
  %v995 = vmul.f32 %v984, %v992
  %v996 = vmul.f32 %v985, %v992
  %v997 = vmul.f32 %v986, %v992
  %v998 = vld [vmem:[%s3] sm:$0x1]
  %v1000 = vlaneseq
  %v1001 = vshrl.u32 %v1000, 7
  %v1002 = vsub.s32 0, %v1001
  %v1003 = vrot.slane %v998, %v1002
  %v1005 = vadd.f32 %v994, %v1003
  %v1006 = vadd.f32 %v995, %v1003
  %v1007 = vadd.f32 %v996, %v1003
  %v1008 = vadd.f32 %v997, %v1003
  %v1009 = vmax.f32 %v1005, 0.0
  %v1010 = vmax.f32 %v1006, 0.0
  %v1011 = vmax.f32 %v1007, 0.0
  %v1012 = vmax.f32 %v1008, 0.0
  %v1013 = vpack.c.bf16 %v1010, %v1009
  %v1014 = vpack.c.bf16 %v1012, %v1011
  %v1017 = vunpack.c.l.b16 %v1013
  %v1018 = vunpack.c.h.b16 %v1013
  %v1019 = vunpack.c.l.b16 %v1014
  %v1020 = vunpack.c.h.b16 %v1014
  %v1021 = vpack.c.b16 %v1017, %v1017
  %v1022 = vpack.c.b16 %v1018, %v1018
  %v1023 = vpack.c.b16 %v1019, %v1019
  %v1024 = vpack.c.b16 %v1020, %v1020
  %1029 = vst [vmem:[%s4] sm:$0xf] %v1021
  %1030 = vst [vmem:[%s4 + $0x4] sm:$0xf] %v1022
  %1031 = vst [vmem:[%s4 + $0x8] sm:$0xf] %v1023
  %1032 = vst [vmem:[%s4 + $0xc] sm:$0xf] %v1024
  // Predicated region
  $region18: #{resnet_forward.9} parent=0 // pred_check
    _
  $region19: #{resnet_forward.9} parent=0 // pred_check_branch
    %1034 = sbr.rel (0) target = $region21
  $region20: #{resnet_forward.9} parent=0 // pred_region
    _
  $region21: #{resnet_forward.9} parent=0 // pred_fallthru
    _
  // Predicated region
  $region22: #{resnet_forward.9} parent=0 // pred_check
    _
  $region23: #{resnet_forward.9} parent=0 // pred_check_branch
    %1036 = sbr.rel (0) target = $region25
  $region24: #{resnet_forward.9} parent=0 // pred_region
    _
  $region25: #{resnet_forward.9} parent=0 // pred_fallthru
    _

// kernel: resnet_forward.13
$region0: #{resnet_forward.13}
  #allocation0 [shape = 'u32[]', space=smem, size = 0x4, offset = 0x4, fixed_abs, tag = 'smem constant byte address 0x4 - core index']
  #allocation1 [shape = 'u32[144,128]{1,0:T(1,128)}', space=vmem, size = 0x12000, scoped, tag = 'internal scratch']
  %s0 = inlined_call_operand.vmem [shape: bf16[2,8], index: 0, kind: input, shape index: {}]
  %s1 = inlined_call_operand.vmem [shape: bf16[8,128], index: 1, kind: input, shape index: {}]
  %s2 = inlined_call_operand.vmem [shape: bf16[128,128], index: 2, kind: input, shape index: {}]
  %s3 = inlined_call_operand.vmem [shape: f32[1,128], index: 3, kind: input, shape index: {}]
  %s4 = inlined_call_operand.hbm [shape: f32[2,128], index: 4, kind: output, shape index: {}]
  %s5 = sld [smem:[#allocation0]]
  $region26: #{resnet_forward.13} parent=0
    _
  %s7 = ssub.s32 1, %s5
  %s8 = scalar_select 0, %s7, %s5
  $region1: #{resnet_forward.13} parent=0
    #allocation2 [shape = 'u8[1024]{0}', space=vmem, size = 0x400, scoped, tag = 'output window, operand 0, single buffered']
    #allocation3 [shape = 's32[1]{0}', space=sflag, size = 0x4, scoped, tag = 'scoped memory for resnet_forward.13']
    %9 = vsyncpa [#allocation3], 0
    // Predicated region
    $region2: #{resnet_forward.13} parent=1 // pred_check
      _
    $region3: #{resnet_forward.13} parent=1 // pred_check_branch
      %11 = sbr.rel (0) target = $region5
    $region4: #{resnet_forward.13} parent=1 // pred_region
      _
    $region5: #{resnet_forward.13} parent=1 // pred_fallthru
      _
    // Predicated region
    $region6: #{resnet_forward.13} parent=1 // pred_check
      _
    $region7: #{resnet_forward.13} parent=1 // pred_check_branch
      %13 = sbr.rel (0) target = $region9
    $region8: #{resnet_forward.13} parent=1 // pred_region
      _
    $region9: #{resnet_forward.13} parent=1 // pred_fallthru
      _
    // Predicated region
    $region10: #{resnet_forward.13} parent=1 // pred_check
      _
    $region11: #{resnet_forward.13} parent=1 // pred_check_branch
      %15 = sbr.rel (0) target = $region13
    $region12: #{resnet_forward.13} parent=1 // pred_region
      _
    $region13: #{resnet_forward.13} parent=1 // pred_fallthru
      _
    // Predicated region
    $region14: #{resnet_forward.13} parent=1 // pred_check
      _
    $region15: #{resnet_forward.13} parent=1 // pred_check_branch
      %17 = sbr.rel (0) target = $region17
    $region16: #{resnet_forward.13} parent=1 // pred_region
      _
    $region17: #{resnet_forward.13} parent=1 // pred_fallthru
      _
    %v19 = vld [vmem:[%s0] sm:$0x1]
    %v20 = vld [vmem:[%s1] sm:$0xf]
    %vm21 = vcmask 64512
    %v23 = vsel %vm21, %v19, 0
    %vm25 = vcmask 1043456
    %v27 = vsel %vm25, %v20, 0
    %29 = vmatprep.subr.bf16.mxu0 0
    %30 = vmatpush1.bf16.msra.mxu0 %v27
    %31 = vmatprep.subr.bf16.mxu0 0
    %32 = vmatpush1.bf16.msra.mxu0 0
    %33 = vmatprep.subr.bf16.mxu0 0
    %34 = vmatpush1.bf16.msra.mxu0 0
    %35 = vmatprep.subr.bf16.mxu0 0
    %36 = vmatpush1.bf16.msra.mxu0 0
    %37 = vmatprep.subr.bf16.mxu0 0
    %38 = vmatpush1.bf16.msra.mxu0 0
    %39 = vmatprep.subr.bf16.mxu0 0
    %40 = vmatpush1.bf16.msra.mxu0 0
    %41 = vmatprep.subr.bf16.mxu0 0
    %42 = vmatpush1.bf16.msra.mxu0 0
    %43 = vmatprep.subr.bf16.mxu0 0
    %44 = vmatpush1.bf16.msra.mxu0 0
    %45 = vmatprep.subr.bf16.mxu0 0
    %46 = vmatpush1.bf16.msra.mxu0 0
    %47 = vmatprep.subr.bf16.mxu0 0
    %48 = vmatpush1.bf16.msra.mxu0 0
    %49 = vmatprep.subr.bf16.mxu0 0
    %50 = vmatpush1.bf16.msra.mxu0 0
    %51 = vmatprep.subr.bf16.mxu0 0
    %52 = vmatpush1.bf16.msra.mxu0 0
    %53 = vmatprep.subr.bf16.mxu0 0
    %54 = vmatpush1.bf16.msra.mxu0 0
    %55 = vmatprep.subr.bf16.mxu0 0
    %56 = vmatpush1.bf16.msra.mxu0 0
    %57 = vmatprep.subr.bf16.mxu0 0
    %58 = vmatpush1.bf16.msra.mxu0 0
    %59 = vmatprep.subr.bf16.mxu0 0
    %60 = vmatpush1.bf16.msra.mxu0 0
    %61 = vmatprep.mubr.bf16.mxu0 0
    %62 = vmatmul.mubr.bf16.gmra.mrb[0].mxu0 %v23
    %v63 = vpop.f32.mrb[0].mxu0
    %v64 = vadd.f32 0.0, %v63
    %v65 = vpop.f32.mrb[0].mxu0
    %v66 = vpop.f32.mrb[0].mxu0
    %v67 = vpop.f32.mrb[0].mxu0
    %68 = vdwg.mxu0
    %v69 = vpack.c.bf16 %v64, %v64
    %v70 = vld [vmem:[%s2] sm:$0xf]
    %v71 = vld [vmem:[%s2 + $0x4] sm:$0xf]
    %v72 = vld [vmem:[%s2 + $0x8] sm:$0xf]
    %v73 = vld [vmem:[%s2 + $0xc] sm:$0xf]
    %v74 = vld [vmem:[%s2 + $0x10] sm:$0xf]
    %v75 = vld [vmem:[%s2 + $0x14] sm:$0xf]
    %v76 = vld [vmem:[%s2 + $0x18] sm:$0xf]
    %v77 = vld [vmem:[%s2 + $0x1c] sm:$0xf]
    %v78 = vld [vmem:[%s2 + $0x20] sm:$0xf]
    %v79 = vld [vmem:[%s2 + $0x24] sm:$0xf]
    %v80 = vld [vmem:[%s2 + $0x28] sm:$0xf]
    %v81 = vld [vmem:[%s2 + $0x2c] sm:$0xf]
    %v82 = vld [vmem:[%s2 + $0x30] sm:$0xf]
    %v83 = vld [vmem:[%s2 + $0x34] sm:$0xf]
    %v84 = vld [vmem:[%s2 + $0x38] sm:$0xf]
    %v85 = vld [vmem:[%s2 + $0x3c] sm:$0xf]
    %v86 = vld [vmem:[%s3] sm:$0x1]
    %v88 = vlaneseq
    %v89 = vshrl.u32 %v88, 7
    %v90 = vsub.s32 0, %v89
    %v91 = vrot.slane %v86, %v90
    %v109 = vunpack.c.l.b16 %v70
    %v110 = vunpack.c.l.b16 %v71
    %v111 = vunpack.c.l.b16 %v72
    %v112 = vunpack.c.l.b16 %v73
    %v113 = vunpack.c.l.b16 %v74
    %v114 = vunpack.c.l.b16 %v75
    %v115 = vunpack.c.l.b16 %v76
    %v116 = vunpack.c.l.b16 %v77
    %v117 = vunpack.c.l.b16 %v78
    %v118 = vunpack.c.l.b16 %v79
    %v119 = vunpack.c.l.b16 %v80
    %v120 = vunpack.c.l.b16 %v81
    %v121 = vunpack.c.l.b16 %v82
    %v122 = vunpack.c.l.b16 %v83
    %v123 = vunpack.c.l.b16 %v84
    %v124 = vunpack.c.l.b16 %v85
    %v125 = vpack.c.b16 %v110, %v109
    %v126 = vpack.c.b16 %v112, %v111
    %v127 = vpack.c.b16 %v114, %v113
    %v128 = vpack.c.b16 %v116, %v115
    %v129 = vpack.c.b16 %v118, %v117
    %v130 = vpack.c.b16 %v120, %v119
    %v131 = vpack.c.b16 %v122, %v121
    %v132 = vpack.c.b16 %v124, %v123
    %141 = vmatprep.subr.bf16.mxu0 0
    %142 = vmatpush1.bf16.msra.mxu0 %v125
    %143 = vmatprep.subr.bf16.mxu0 0
    %144 = vmatpush1.bf16.msra.mxu0 %v126
    %145 = vmatprep.subr.bf16.mxu0 0
    %146 = vmatpush1.bf16.msra.mxu0 %v127
    %147 = vmatprep.subr.bf16.mxu0 0
    %148 = vmatpush1.bf16.msra.mxu0 %v128
    %149 = vmatprep.subr.bf16.mxu0 0
    %150 = vmatpush1.bf16.msra.mxu0 %v129
    %151 = vmatprep.subr.bf16.mxu0 0
    %152 = vmatpush1.bf16.msra.mxu0 %v130
    %153 = vmatprep.subr.bf16.mxu0 0
    %154 = vmatpush1.bf16.msra.mxu0 %v131
    %155 = vmatprep.subr.bf16.mxu0 0
    %156 = vmatpush1.bf16.msra.mxu0 %v132
    %157 = vmatprep.subr.bf16.mxu0 0
    %158 = vmatpush1.bf16.msra.mxu0 0
    %159 = vmatprep.subr.bf16.mxu0 0
    %160 = vmatpush1.bf16.msra.mxu0 0
    %161 = vmatprep.subr.bf16.mxu0 0
    %162 = vmatpush1.bf16.msra.mxu0 0
    %163 = vmatprep.subr.bf16.mxu0 0
    %164 = vmatpush1.bf16.msra.mxu0 0
    %165 = vmatprep.subr.bf16.mxu0 0
    %166 = vmatpush1.bf16.msra.mxu0 0
    %167 = vmatprep.subr.bf16.mxu0 0
    %168 = vmatpush1.bf16.msra.mxu0 0
    %169 = vmatprep.subr.bf16.mxu0 0
    %170 = vmatpush1.bf16.msra.mxu0 0
    %171 = vmatprep.subr.bf16.mxu0 0
    %172 = vmatpush1.bf16.msra.mxu0 0
    %173 = vmatprep.mubr.bf16.mxu0 0
    %174 = vmatmul.mubr.bf16.gmra.mrb[0].mxu0 %v69
    %v175 = vpop.f32.mrb[0].mxu0
    %v176 = vadd.f32 %v91, %v175
    %v177 = vpop.f32.mrb[0].mxu0
    %v178 = vpop.f32.mrb[0].mxu0
    %v179 = vpop.f32.mrb[0].mxu0
    %180 = vdwg.mxu0
    %181 = vst [vmem:[#allocation2] sm:$0x3] %v176
    // Predicated region
    $region18: #{resnet_forward.13} parent=1 // pred_check
      _
    $region19: #{resnet_forward.13} parent=1 // pred_check_branch
      %183 = sbr.rel (0) target = $region21
    $region20: #{resnet_forward.13} parent=1 // pred_region
      %s185 = ssub.s32 32, 32
      %186 = vsyncadd [#allocation3], %s185
      %s188 = sshll.u32 [#allocation2], 4
      %s189 = int_to_ptr.vmem [resolvable:$true] %s188
      %191 = dma.vmem_to_hbm [thread:$0]  %s189, 32, %s4, [#allocation3]
    $region21: #{resnet_forward.13} parent=1 // pred_fallthru
      _
    // Predicated region
    $region22: #{resnet_forward.13} parent=1 // pred_check
      _
    $region23: #{resnet_forward.13} parent=1 // pred_check_branch
      %193 = sbr.rel (0) target = $region25
    $region24: #{resnet_forward.13} parent=1 // pred_region
      %194 = dma.done [#allocation3], 32
    $region25: #{resnet_forward.13} parent=1 // pred_fallthru
      _
    %195 = vsyncpa [#allocation3], 1

// kernel: resnet_forward.11
$region0: #{resnet_forward.11}
  #allocation0 [shape = 'u32[]', space=smem, size = 0x4, offset = 0x4, fixed_abs, tag = 'smem constant byte address 0x4 - core index']
  #allocation1 [shape = 'u32[144,128]{1,0:T(1,128)}', space=vmem, size = 0x12000, scoped, tag = 'internal scratch']
  %s0 = inlined_call_operand.vmem [shape: bf16[8,1152], index: 0, kind: input, shape index: {}]
  %s1 = inlined_call_operand.vmem [shape: bf16[1152,128], index: 1, kind: input, shape index: {}]
  %s2 = inlined_call_operand.vmem [shape: f32[1,128], index: 2, kind: input, shape index: {}]
  %s3 = inlined_call_operand.vmem [shape: f32[1,128], index: 3, kind: input, shape index: {}]
  %s4 = inlined_call_operand.vmem [shape: bf16[8,128], index: 4, kind: output, shape index: {}]
  %s5 = sld [smem:[#allocation0]]
  $region26: #{resnet_forward.11} parent=0
    _
  %s7 = ssub.s32 1, %s5
  %s8 = scalar_select 0, %s7, %s5
  // Predicated region
  $region2: #{resnet_forward.11} parent=0 // pred_check
    _
  $region3: #{resnet_forward.11} parent=0 // pred_check_branch
    %10 = sbr.rel (0) target = $region5
  $region4: #{resnet_forward.11} parent=0 // pred_region
    _
  $region5: #{resnet_forward.11} parent=0 // pred_fallthru
    _
  // Predicated region
  $region6: #{resnet_forward.11} parent=0 // pred_check
    _
  $region7: #{resnet_forward.11} parent=0 // pred_check_branch
    %12 = sbr.rel (0) target = $region9
  $region8: #{resnet_forward.11} parent=0 // pred_region
    _
  $region9: #{resnet_forward.11} parent=0 // pred_fallthru
    _
  // Predicated region
  $region10: #{resnet_forward.11} parent=0 // pred_check
    _
  $region11: #{resnet_forward.11} parent=0 // pred_check_branch
    %14 = sbr.rel (0) target = $region13
  $region12: #{resnet_forward.11} parent=0 // pred_region
    _
  $region13: #{resnet_forward.11} parent=0 // pred_fallthru
    _
  // Predicated region
  $region14: #{resnet_forward.11} parent=0 // pred_check
    _
  $region15: #{resnet_forward.11} parent=0 // pred_check_branch
    %16 = sbr.rel (0) target = $region17
  $region16: #{resnet_forward.11} parent=0 // pred_region
    _
  $region17: #{resnet_forward.11} parent=0 // pred_fallthru
    _
  %v18 = vld [vmem:[%s0] sm:$0xff]
  %v19 = vld [vmem:[%s0 + $0x8] sm:$0xff]
  %v20 = vld [vmem:[%s0 + $0x10] sm:$0xff]
  %v21 = vld [vmem:[%s0 + $0x18] sm:$0xff]
  %v22 = vld [vmem:[%s0 + $0x20] sm:$0xf]
  %v23 = vld [vmem:[%s1] sm:$0xf]
  %v24 = vld [vmem:[%s1 + $0x4] sm:$0xf]
  %v25 = vld [vmem:[%s1 + $0x8] sm:$0xf]
  %v26 = vld [vmem:[%s1 + $0xc] sm:$0xf]
  %v27 = vld [vmem:[%s1 + $0x10] sm:$0xf]
  %v28 = vld [vmem:[%s1 + $0x14] sm:$0xf]
  %v29 = vld [vmem:[%s1 + $0x18] sm:$0xf]
  %v30 = vld [vmem:[%s1 + $0x1c] sm:$0xf]
  %v31 = vld [vmem:[%s1 + $0x20] sm:$0xf]
  %v32 = vld [vmem:[%s1 + $0x24] sm:$0xf]
  %v33 = vld [vmem:[%s1 + $0x28] sm:$0xf]
  %v34 = vld [vmem:[%s1 + $0x2c] sm:$0xf]
  %v35 = vld [vmem:[%s1 + $0x30] sm:$0xf]
  %v36 = vld [vmem:[%s1 + $0x34] sm:$0xf]
  %v37 = vld [vmem:[%s1 + $0x38] sm:$0xf]
  %v38 = vld [vmem:[%s1 + $0x3c] sm:$0xf]
  %v39 = vld [vmem:[%s1 + $0x40] sm:$0xf]
  %v40 = vld [vmem:[%s1 + $0x44] sm:$0xf]
  %v41 = vld [vmem:[%s1 + $0x48] sm:$0xf]
  %v42 = vld [vmem:[%s1 + $0x4c] sm:$0xf]
  %v43 = vld [vmem:[%s1 + $0x50] sm:$0xf]
  %v44 = vld [vmem:[%s1 + $0x54] sm:$0xf]
  %v45 = vld [vmem:[%s1 + $0x58] sm:$0xf]
  %v46 = vld [vmem:[%s1 + $0x5c] sm:$0xf]
  %v47 = vld [vmem:[%s1 + $0x60] sm:$0xf]
  %v48 = vld [vmem:[%s1 + $0x64] sm:$0xf]
  %v49 = vld [vmem:[%s1 + $0x68] sm:$0xf]
  %v50 = vld [vmem:[%s1 + $0x6c] sm:$0xf]
  %v51 = vld [vmem:[%s1 + $0x70] sm:$0xf]
  %v52 = vld [vmem:[%s1 + $0x74] sm:$0xf]
  %v53 = vld [vmem:[%s1 + $0x78] sm:$0xf]
  %v54 = vld [vmem:[%s1 + $0x7c] sm:$0xf]
  %v55 = vld [vmem:[%s1 + $0x80] sm:$0xf]
  %v56 = vld [vmem:[%s1 + $0x84] sm:$0xf]
  %v57 = vld [vmem:[%s1 + $0x88] sm:$0xf]
  %v58 = vld [vmem:[%s1 + $0x8c] sm:$0xf]
  %v59 = vld [vmem:[%s1 + $0x90] sm:$0xf]
  %v60 = vld [vmem:[%s1 + $0x94] sm:$0xf]
  %v61 = vld [vmem:[%s1 + $0x98] sm:$0xf]
  %v62 = vld [vmem:[%s1 + $0x9c] sm:$0xf]
  %v63 = vld [vmem:[%s1 + $0xa0] sm:$0xf]
  %v64 = vld [vmem:[%s1 + $0xa4] sm:$0xf]
  %v65 = vld [vmem:[%s1 + $0xa8] sm:$0xf]
  %v66 = vld [vmem:[%s1 + $0xac] sm:$0xf]
  %v67 = vld [vmem:[%s1 + $0xb0] sm:$0xf]
  %v68 = vld [vmem:[%s1 + $0xb4] sm:$0xf]
  %v69 = vld [vmem:[%s1 + $0xb8] sm:$0xf]
  %v70 = vld [vmem:[%s1 + $0xbc] sm:$0xf]
  %v71 = vld [vmem:[%s1 + $0xc0] sm:$0xf]
  %v72 = vld [vmem:[%s1 + $0xc4] sm:$0xf]
  %v73 = vld [vmem:[%s1 + $0xc8] sm:$0xf]
  %v74 = vld [vmem:[%s1 + $0xcc] sm:$0xf]
  %v75 = vld [vmem:[%s1 + $0xd0] sm:$0xf]
  %v76 = vld [vmem:[%s1 + $0xd4] sm:$0xf]
  %v77 = vld [vmem:[%s1 + $0xd8] sm:$0xf]
  %v78 = vld [vmem:[%s1 + $0xdc] sm:$0xf]
  %v79 = vld [vmem:[%s1 + $0xe0] sm:$0xf]
  %v80 = vld [vmem:[%s1 + $0xe4] sm:$0xf]
  %v81 = vld [vmem:[%s1 + $0xe8] sm:$0xf]
  %v82 = vld [vmem:[%s1 + $0xec] sm:$0xf]
  %v83 = vld [vmem:[%s1 + $0xf0] sm:$0xf]
  %v84 = vld [vmem:[%s1 + $0xf4] sm:$0xf]
  %v85 = vld [vmem:[%s1 + $0xf8] sm:$0xf]
  %v86 = vld [vmem:[%s1 + $0xfc] sm:$0xf]
  %v87 = vld [vmem:[%s1 + $0x100] sm:$0xf]
  %v88 = vld [vmem:[%s1 + $0x104] sm:$0xf]
  %v89 = vld [vmem:[%s1 + $0x108] sm:$0xf]
  %v90 = vld [vmem:[%s1 + $0x10c] sm:$0xf]
  %v91 = vld [vmem:[%s1 + $0x110] sm:$0xf]
  %v92 = vld [vmem:[%s1 + $0x114] sm:$0xf]
  %v93 = vld [vmem:[%s1 + $0x118] sm:$0xf]
  %v94 = vld [vmem:[%s1 + $0x11c] sm:$0xf]
  %v95 = vld [vmem:[%s1 + $0x120] sm:$0xf]
  %v96 = vld [vmem:[%s1 + $0x124] sm:$0xf]
  %v97 = vld [vmem:[%s1 + $0x128] sm:$0xf]
  %v98 = vld [vmem:[%s1 + $0x12c] sm:$0xf]
  %v99 = vld [vmem:[%s1 + $0x130] sm:$0xf]
  %v100 = vld [vmem:[%s1 + $0x134] sm:$0xf]
  %v101 = vld [vmem:[%s1 + $0x138] sm:$0xf]
  %v102 = vld [vmem:[%s1 + $0x13c] sm:$0xf]
  %v103 = vld [vmem:[%s1 + $0x140] sm:$0xf]
  %v104 = vld [vmem:[%s1 + $0x144] sm:$0xf]
  %v105 = vld [vmem:[%s1 + $0x148] sm:$0xf]
  %v106 = vld [vmem:[%s1 + $0x14c] sm:$0xf]
  %v107 = vld [vmem:[%s1 + $0x150] sm:$0xf]
  %v108 = vld [vmem:[%s1 + $0x154] sm:$0xf]
  %v109 = vld [vmem:[%s1 + $0x158] sm:$0xf]
  %v110 = vld [vmem:[%s1 + $0x15c] sm:$0xf]
  %v111 = vld [vmem:[%s1 + $0x160] sm:$0xf]
  %v112 = vld [vmem:[%s1 + $0x164] sm:$0xf]
  %v113 = vld [vmem:[%s1 + $0x168] sm:$0xf]
  %v114 = vld [vmem:[%s1 + $0x16c] sm:$0xf]
  %v115 = vld [vmem:[%s1 + $0x170] sm:$0xf]
  %v116 = vld [vmem:[%s1 + $0x174] sm:$0xf]
  %v117 = vld [vmem:[%s1 + $0x178] sm:$0xf]
  %v118 = vld [vmem:[%s1 + $0x17c] sm:$0xf]
  %v119 = vld [vmem:[%s1 + $0x180] sm:$0xf]
  %v120 = vld [vmem:[%s1 + $0x184] sm:$0xf]
  %v121 = vld [vmem:[%s1 + $0x188] sm:$0xf]
  %v122 = vld [vmem:[%s1 + $0x18c] sm:$0xf]
  %v123 = vld [vmem:[%s1 + $0x190] sm:$0xf]
  %v124 = vld [vmem:[%s1 + $0x194] sm:$0xf]
  %v125 = vld [vmem:[%s1 + $0x198] sm:$0xf]
  %v126 = vld [vmem:[%s1 + $0x19c] sm:$0xf]
  %v127 = vld [vmem:[%s1 + $0x1a0] sm:$0xf]
  %v128 = vld [vmem:[%s1 + $0x1a4] sm:$0xf]
  %v129 = vld [vmem:[%s1 + $0x1a8] sm:$0xf]
  %v130 = vld [vmem:[%s1 + $0x1ac] sm:$0xf]
  %v131 = vld [vmem:[%s1 + $0x1b0] sm:$0xf]
  %v132 = vld [vmem:[%s1 + $0x1b4] sm:$0xf]
  %v133 = vld [vmem:[%s1 + $0x1b8] sm:$0xf]
  %v134 = vld [vmem:[%s1 + $0x1bc] sm:$0xf]
  %v135 = vld [vmem:[%s1 + $0x1c0] sm:$0xf]
  %v136 = vld [vmem:[%s1 + $0x1c4] sm:$0xf]
  %v137 = vld [vmem:[%s1 + $0x1c8] sm:$0xf]
  %v138 = vld [vmem:[%s1 + $0x1cc] sm:$0xf]
  %v139 = vld [vmem:[%s1 + $0x1d0] sm:$0xf]
  %v140 = vld [vmem:[%s1 + $0x1d4] sm:$0xf]
  %v141 = vld [vmem:[%s1 + $0x1d8] sm:$0xf]
  %v142 = vld [vmem:[%s1 + $0x1dc] sm:$0xf]
  %v143 = vld [vmem:[%s1 + $0x1e0] sm:$0xf]
  %v144 = vld [vmem:[%s1 + $0x1e4] sm:$0xf]
  %v145 = vld [vmem:[%s1 + $0x1e8] sm:$0xf]
  %v146 = vld [vmem:[%s1 + $0x1ec] sm:$0xf]
  %v147 = vld [vmem:[%s1 + $0x1f0] sm:$0xf]
  %v148 = vld [vmem:[%s1 + $0x1f4] sm:$0xf]
  %v149 = vld [vmem:[%s1 + $0x1f8] sm:$0xf]
  %v150 = vld [vmem:[%s1 + $0x1fc] sm:$0xf]
  %v151 = vld [vmem:[%s1 + $0x200] sm:$0xf]
  %v152 = vld [vmem:[%s1 + $0x204] sm:$0xf]
  %v153 = vld [vmem:[%s1 + $0x208] sm:$0xf]
  %v154 = vld [vmem:[%s1 + $0x20c] sm:$0xf]
  %v155 = vld [vmem:[%s1 + $0x210] sm:$0xf]
  %v156 = vld [vmem:[%s1 + $0x214] sm:$0xf]
  %v157 = vld [vmem:[%s1 + $0x218] sm:$0xf]
  %v158 = vld [vmem:[%s1 + $0x21c] sm:$0xf]
  %v159 = vld [vmem:[%s1 + $0x220] sm:$0xf]
  %v160 = vld [vmem:[%s1 + $0x224] sm:$0xf]
  %v161 = vld [vmem:[%s1 + $0x228] sm:$0xf]
  %v162 = vld [vmem:[%s1 + $0x22c] sm:$0xf]
  %v163 = vld [vmem:[%s1 + $0x230] sm:$0xf]
  %v164 = vld [vmem:[%s1 + $0x234] sm:$0xf]
  %v165 = vld [vmem:[%s1 + $0x238] sm:$0xf]
  %v166 = vld [vmem:[%s1 + $0x23c] sm:$0xf]
  %v172 = vunpack.c.l.b16 %v18
  %v173 = vunpack.c.h.b16 %v18
  %v174 = vunpack.c.l.b16 %v19
  %v175 = vunpack.c.h.b16 %v19
  %v176 = vunpack.c.l.b16 %v20
  %v177 = vunpack.c.h.b16 %v20
  %v178 = vunpack.c.l.b16 %v21
  %v179 = vunpack.c.h.b16 %v21
  %v180 = vunpack.c.l.b16 %v22
  %v181 = vpack.c.b16 %v172, %v172
  %v182 = vpack.c.b16 %v173, %v173
  %v183 = vpack.c.b16 %v174, %v174
  %v184 = vpack.c.b16 %v175, %v175
  %v185 = vpack.c.b16 %v176, %v176
  %v186 = vpack.c.b16 %v177, %v177
  %v187 = vpack.c.b16 %v178, %v178
  %v188 = vpack.c.b16 %v179, %v179
  %v189 = vpack.c.b16 %v180, %v180
  %v343 = vunpack.c.l.b16 %v23
  %v344 = vunpack.c.l.b16 %v24
  %v345 = vunpack.c.l.b16 %v25
  %v346 = vunpack.c.l.b16 %v26
  %v347 = vunpack.c.l.b16 %v27
  %v348 = vunpack.c.l.b16 %v28
  %v349 = vunpack.c.l.b16 %v29
  %v350 = vunpack.c.l.b16 %v30
  %v351 = vunpack.c.l.b16 %v31
  %v352 = vunpack.c.l.b16 %v32
  %v353 = vunpack.c.l.b16 %v33
  %v354 = vunpack.c.l.b16 %v34
  %v355 = vunpack.c.l.b16 %v35
  %v356 = vunpack.c.l.b16 %v36
  %v357 = vunpack.c.l.b16 %v37
  %v358 = vunpack.c.l.b16 %v38
  %v359 = vunpack.c.l.b16 %v39
  %v360 = vunpack.c.l.b16 %v40
  %v361 = vunpack.c.l.b16 %v41
  %v362 = vunpack.c.l.b16 %v42
  %v363 = vunpack.c.l.b16 %v43
  %v364 = vunpack.c.l.b16 %v44
  %v365 = vunpack.c.l.b16 %v45
  %v366 = vunpack.c.l.b16 %v46
  %v367 = vunpack.c.l.b16 %v47
  %v368 = vunpack.c.l.b16 %v48
  %v369 = vunpack.c.l.b16 %v49
  %v370 = vunpack.c.l.b16 %v50
  %v371 = vunpack.c.l.b16 %v51
  %v372 = vunpack.c.l.b16 %v52
  %v373 = vunpack.c.l.b16 %v53
  %v374 = vunpack.c.l.b16 %v54
  %v375 = vunpack.c.l.b16 %v55
  %v376 = vunpack.c.l.b16 %v56
  %v377 = vunpack.c.l.b16 %v57
  %v378 = vunpack.c.l.b16 %v58
  %v379 = vunpack.c.l.b16 %v59
  %v380 = vunpack.c.l.b16 %v60
  %v381 = vunpack.c.l.b16 %v61
  %v382 = vunpack.c.l.b16 %v62
  %v383 = vunpack.c.l.b16 %v63
  %v384 = vunpack.c.l.b16 %v64
  %v385 = vunpack.c.l.b16 %v65
  %v386 = vunpack.c.l.b16 %v66
  %v387 = vunpack.c.l.b16 %v67
  %v388 = vunpack.c.l.b16 %v68
  %v389 = vunpack.c.l.b16 %v69
  %v390 = vunpack.c.l.b16 %v70
  %v391 = vunpack.c.l.b16 %v71
  %v392 = vunpack.c.l.b16 %v72
  %v393 = vunpack.c.l.b16 %v73
  %v394 = vunpack.c.l.b16 %v74
  %v395 = vunpack.c.l.b16 %v75
  %v396 = vunpack.c.l.b16 %v76
  %v397 = vunpack.c.l.b16 %v77
  %v398 = vunpack.c.l.b16 %v78
  %v399 = vunpack.c.l.b16 %v79
  %v400 = vunpack.c.l.b16 %v80
  %v401 = vunpack.c.l.b16 %v81
  %v402 = vunpack.c.l.b16 %v82
  %v403 = vunpack.c.l.b16 %v83
  %v404 = vunpack.c.l.b16 %v84
  %v405 = vunpack.c.l.b16 %v85
  %v406 = vunpack.c.l.b16 %v86
  %v407 = vunpack.c.l.b16 %v87
  %v408 = vunpack.c.l.b16 %v88
  %v409 = vunpack.c.l.b16 %v89
  %v410 = vunpack.c.l.b16 %v90
  %v411 = vunpack.c.l.b16 %v91
  %v412 = vunpack.c.l.b16 %v92
  %v413 = vunpack.c.l.b16 %v93
  %v414 = vunpack.c.l.b16 %v94
  %v415 = vunpack.c.l.b16 %v95
  %v416 = vunpack.c.l.b16 %v96
  %v417 = vunpack.c.l.b16 %v97
  %v418 = vunpack.c.l.b16 %v98
  %v419 = vunpack.c.l.b16 %v99
  %v420 = vunpack.c.l.b16 %v100
  %v421 = vunpack.c.l.b16 %v101
  %v422 = vunpack.c.l.b16 %v102
  %v423 = vunpack.c.l.b16 %v103
  %v424 = vunpack.c.l.b16 %v104
  %v425 = vunpack.c.l.b16 %v105
  %v426 = vunpack.c.l.b16 %v106
  %v427 = vunpack.c.l.b16 %v107
  %v428 = vunpack.c.l.b16 %v108
  %v429 = vunpack.c.l.b16 %v109
  %v430 = vunpack.c.l.b16 %v110
  %v431 = vunpack.c.l.b16 %v111
  %v432 = vunpack.c.l.b16 %v112
  %v433 = vunpack.c.l.b16 %v113
  %v434 = vunpack.c.l.b16 %v114
  %v435 = vunpack.c.l.b16 %v115
  %v436 = vunpack.c.l.b16 %v116
  %v437 = vunpack.c.l.b16 %v117
  %v438 = vunpack.c.l.b16 %v118
  %v439 = vunpack.c.l.b16 %v119
  %v440 = vunpack.c.l.b16 %v120
  %v441 = vunpack.c.l.b16 %v121
  %v442 = vunpack.c.l.b16 %v122
  %v443 = vunpack.c.l.b16 %v123
  %v444 = vunpack.c.l.b16 %v124
  %v445 = vunpack.c.l.b16 %v125
  %v446 = vunpack.c.l.b16 %v126
  %v447 = vunpack.c.l.b16 %v127
  %v448 = vunpack.c.l.b16 %v128
  %v449 = vunpack.c.l.b16 %v129
  %v450 = vunpack.c.l.b16 %v130
  %v451 = vunpack.c.l.b16 %v131
  %v452 = vunpack.c.l.b16 %v132
  %v453 = vunpack.c.l.b16 %v133
  %v454 = vunpack.c.l.b16 %v134
  %v455 = vunpack.c.l.b16 %v135
  %v456 = vunpack.c.l.b16 %v136
  %v457 = vunpack.c.l.b16 %v137
  %v458 = vunpack.c.l.b16 %v138
  %v459 = vunpack.c.l.b16 %v139
  %v460 = vunpack.c.l.b16 %v140
  %v461 = vunpack.c.l.b16 %v141
  %v462 = vunpack.c.l.b16 %v142
  %v463 = vunpack.c.l.b16 %v143
  %v464 = vunpack.c.l.b16 %v144
  %v465 = vunpack.c.l.b16 %v145
  %v466 = vunpack.c.l.b16 %v146
  %v467 = vunpack.c.l.b16 %v147
  %v468 = vunpack.c.l.b16 %v148
  %v469 = vunpack.c.l.b16 %v149
  %v470 = vunpack.c.l.b16 %v150
  %v471 = vunpack.c.l.b16 %v151
  %v472 = vunpack.c.l.b16 %v152
  %v473 = vunpack.c.l.b16 %v153
  %v474 = vunpack.c.l.b16 %v154
  %v475 = vunpack.c.l.b16 %v155
  %v476 = vunpack.c.l.b16 %v156
  %v477 = vunpack.c.l.b16 %v157
  %v478 = vunpack.c.l.b16 %v158
  %v479 = vunpack.c.l.b16 %v159
  %v480 = vunpack.c.l.b16 %v160
  %v481 = vunpack.c.l.b16 %v161
  %v482 = vunpack.c.l.b16 %v162
  %v483 = vunpack.c.l.b16 %v163
  %v484 = vunpack.c.l.b16 %v164
  %v485 = vunpack.c.l.b16 %v165
  %v486 = vunpack.c.l.b16 %v166
  %v487 = vpack.c.b16 %v344, %v343
  %v488 = vpack.c.b16 %v346, %v345
  %v489 = vpack.c.b16 %v348, %v347
  %v490 = vpack.c.b16 %v350, %v349
  %v491 = vpack.c.b16 %v352, %v351
  %v492 = vpack.c.b16 %v354, %v353
  %v493 = vpack.c.b16 %v356, %v355
  %v494 = vpack.c.b16 %v358, %v357
  %v495 = vpack.c.b16 %v360, %v359
  %v496 = vpack.c.b16 %v362, %v361
  %v497 = vpack.c.b16 %v364, %v363
  %v498 = vpack.c.b16 %v366, %v365
  %v499 = vpack.c.b16 %v368, %v367
  %v500 = vpack.c.b16 %v370, %v369
  %v501 = vpack.c.b16 %v372, %v371
  %v502 = vpack.c.b16 %v374, %v373
  %v503 = vpack.c.b16 %v376, %v375
  %v504 = vpack.c.b16 %v378, %v377
  %v505 = vpack.c.b16 %v380, %v379
  %v506 = vpack.c.b16 %v382, %v381
  %v507 = vpack.c.b16 %v384, %v383
  %v508 = vpack.c.b16 %v386, %v385
  %v509 = vpack.c.b16 %v388, %v387
  %v510 = vpack.c.b16 %v390, %v389
  %v511 = vpack.c.b16 %v392, %v391
  %v512 = vpack.c.b16 %v394, %v393
  %v513 = vpack.c.b16 %v396, %v395
  %v514 = vpack.c.b16 %v398, %v397
  %v515 = vpack.c.b16 %v400, %v399
  %v516 = vpack.c.b16 %v402, %v401
  %v517 = vpack.c.b16 %v404, %v403
  %v518 = vpack.c.b16 %v406, %v405
  %v519 = vpack.c.b16 %v408, %v407
  %v520 = vpack.c.b16 %v410, %v409
  %v521 = vpack.c.b16 %v412, %v411
  %v522 = vpack.c.b16 %v414, %v413
  %v523 = vpack.c.b16 %v416, %v415
  %v524 = vpack.c.b16 %v418, %v417
  %v525 = vpack.c.b16 %v420, %v419
  %v526 = vpack.c.b16 %v422, %v421
  %v527 = vpack.c.b16 %v424, %v423
  %v528 = vpack.c.b16 %v426, %v425
  %v529 = vpack.c.b16 %v428, %v427
  %v530 = vpack.c.b16 %v430, %v429
  %v531 = vpack.c.b16 %v432, %v431
  %v532 = vpack.c.b16 %v434, %v433
  %v533 = vpack.c.b16 %v436, %v435
  %v534 = vpack.c.b16 %v438, %v437
  %v535 = vpack.c.b16 %v440, %v439
  %v536 = vpack.c.b16 %v442, %v441
  %v537 = vpack.c.b16 %v444, %v443
  %v538 = vpack.c.b16 %v446, %v445
  %v539 = vpack.c.b16 %v448, %v447
  %v540 = vpack.c.b16 %v450, %v449
  %v541 = vpack.c.b16 %v452, %v451
  %v542 = vpack.c.b16 %v454, %v453
  %v543 = vpack.c.b16 %v456, %v455
  %v544 = vpack.c.b16 %v458, %v457
  %v545 = vpack.c.b16 %v460, %v459
  %v546 = vpack.c.b16 %v462, %v461
  %v547 = vpack.c.b16 %v464, %v463
  %v548 = vpack.c.b16 %v466, %v465
  %v549 = vpack.c.b16 %v468, %v467
  %v550 = vpack.c.b16 %v470, %v469
  %v551 = vpack.c.b16 %v472, %v471
  %v552 = vpack.c.b16 %v474, %v473
  %v553 = vpack.c.b16 %v476, %v475
  %v554 = vpack.c.b16 %v478, %v477
  %v555 = vpack.c.b16 %v480, %v479
  %v556 = vpack.c.b16 %v482, %v481
  %v557 = vpack.c.b16 %v484, %v483
  %v558 = vpack.c.b16 %v486, %v485
  %631 = vmatprep.subr.bf16.mxu0 0
  %632 = vmatpush1.bf16.msra.mxu0 %v487
  %633 = vmatprep.subr.bf16.mxu0 0
  %634 = vmatpush1.bf16.msra.mxu0 %v488
  %635 = vmatprep.subr.bf16.mxu0 0
  %636 = vmatpush1.bf16.msra.mxu0 %v489
  %637 = vmatprep.subr.bf16.mxu0 0
  %638 = vmatpush1.bf16.msra.mxu0 %v490
  %639 = vmatprep.subr.bf16.mxu0 0
  %640 = vmatpush1.bf16.msra.mxu0 %v491
  %641 = vmatprep.subr.bf16.mxu0 0
  %642 = vmatpush1.bf16.msra.mxu0 %v492
  %643 = vmatprep.subr.bf16.mxu0 0
  %644 = vmatpush1.bf16.msra.mxu0 %v493
  %645 = vmatprep.subr.bf16.mxu0 0
  %646 = vmatpush1.bf16.msra.mxu0 %v494
  %647 = vmatprep.subr.bf16.mxu0 0
  %648 = vmatpush1.bf16.msra.mxu0 %v495
  %649 = vmatprep.subr.bf16.mxu0 0
  %650 = vmatpush1.bf16.msra.mxu0 %v496
  %651 = vmatprep.subr.bf16.mxu0 0
  %652 = vmatpush1.bf16.msra.mxu0 %v497
  %653 = vmatprep.subr.bf16.mxu0 0
  %654 = vmatpush1.bf16.msra.mxu0 %v498
  %655 = vmatprep.subr.bf16.mxu0 0
  %656 = vmatpush1.bf16.msra.mxu0 %v499
  %657 = vmatprep.subr.bf16.mxu0 0
  %658 = vmatpush1.bf16.msra.mxu0 %v500
  %659 = vmatprep.subr.bf16.mxu0 0
  %660 = vmatpush1.bf16.msra.mxu0 %v501
  %661 = vmatprep.subr.bf16.mxu0 0
  %662 = vmatpush1.bf16.msra.mxu0 %v502
  %663 = vmatprep.mubr.bf16.mxu0 %v182
  %664 = vmatmul.mubr.bf16.gmra.mrb[0].mxu0 %v181
  %v665 = vpop.f32.mrb[0].mxu0
  %v666 = vadd.f32 0.0, %v665
  %v667 = vpop.f32.mrb[0].mxu0
  %v668 = vpop.f32.mrb[0].mxu0
  %v669 = vpop.f32.mrb[0].mxu0
  %670 = vdwg.mxu0
  %671 = vmatprep.subr.bf16.mxu0 0
  %672 = vmatpush1.bf16.msra.mxu0 %v503
  %673 = vmatprep.subr.bf16.mxu0 0
  %674 = vmatpush1.bf16.msra.mxu0 %v504
  %675 = vmatprep.subr.bf16.mxu0 0
  %676 = vmatpush1.bf16.msra.mxu0 %v505
  %677 = vmatprep.subr.bf16.mxu0 0
  %678 = vmatpush1.bf16.msra.mxu0 %v506
  %679 = vmatprep.subr.bf16.mxu0 0
  %680 = vmatpush1.bf16.msra.mxu0 %v507
  %681 = vmatprep.subr.bf16.mxu0 0
  %682 = vmatpush1.bf16.msra.mxu0 %v508
  %683 = vmatprep.subr.bf16.mxu0 0
  %684 = vmatpush1.bf16.msra.mxu0 %v509
  %685 = vmatprep.subr.bf16.mxu0 0
  %686 = vmatpush1.bf16.msra.mxu0 %v510
  %687 = vmatprep.subr.bf16.mxu0 0
  %688 = vmatpush1.bf16.msra.mxu0 %v511
  %689 = vmatprep.subr.bf16.mxu0 0
  %690 = vmatpush1.bf16.msra.mxu0 %v512
  %691 = vmatprep.subr.bf16.mxu0 0
  %692 = vmatpush1.bf16.msra.mxu0 %v513
  %693 = vmatprep.subr.bf16.mxu0 0
  %694 = vmatpush1.bf16.msra.mxu0 %v514
  %695 = vmatprep.subr.bf16.mxu0 0
  %696 = vmatpush1.bf16.msra.mxu0 %v515
  %697 = vmatprep.subr.bf16.mxu0 0
  %698 = vmatpush1.bf16.msra.mxu0 %v516
  %699 = vmatprep.subr.bf16.mxu0 0
  %700 = vmatpush1.bf16.msra.mxu0 %v517
  %701 = vmatprep.subr.bf16.mxu0 0
  %702 = vmatpush1.bf16.msra.mxu0 %v518
  %703 = vmatprep.mubr.bf16.mxu0 %v184
  %704 = vmatmul.mubr.bf16.gmra.mrb[0].mxu0 %v183
  %v705 = vpop.f32.mrb[0].mxu0
  %v706 = vadd.f32 %v666, %v705
  %v707 = vpop.f32.mrb[0].mxu0
  %v708 = vpop.f32.mrb[0].mxu0
  %v709 = vpop.f32.mrb[0].mxu0
  %710 = vdwg.mxu0
  %711 = vmatprep.subr.bf16.mxu0 0
  %712 = vmatpush1.bf16.msra.mxu0 %v519
  %713 = vmatprep.subr.bf16.mxu0 0
  %714 = vmatpush1.bf16.msra.mxu0 %v520
  %715 = vmatprep.subr.bf16.mxu0 0
  %716 = vmatpush1.bf16.msra.mxu0 %v521
  %717 = vmatprep.subr.bf16.mxu0 0
  %718 = vmatpush1.bf16.msra.mxu0 %v522
  %719 = vmatprep.subr.bf16.mxu0 0
  %720 = vmatpush1.bf16.msra.mxu0 %v523
  %721 = vmatprep.subr.bf16.mxu0 0
  %722 = vmatpush1.bf16.msra.mxu0 %v524
  %723 = vmatprep.subr.bf16.mxu0 0
  %724 = vmatpush1.bf16.msra.mxu0 %v525
  %725 = vmatprep.subr.bf16.mxu0 0
  %726 = vmatpush1.bf16.msra.mxu0 %v526
  %727 = vmatprep.subr.bf16.mxu0 0
  %728 = vmatpush1.bf16.msra.mxu0 %v527
  %729 = vmatprep.subr.bf16.mxu0 0
  %730 = vmatpush1.bf16.msra.mxu0 %v528
  %731 = vmatprep.subr.bf16.mxu0 0
  %732 = vmatpush1.bf16.msra.mxu0 %v529
  %733 = vmatprep.subr.bf16.mxu0 0
  %734 = vmatpush1.bf16.msra.mxu0 %v530
  %735 = vmatprep.subr.bf16.mxu0 0
  %736 = vmatpush1.bf16.msra.mxu0 %v531
  %737 = vmatprep.subr.bf16.mxu0 0
  %738 = vmatpush1.bf16.msra.mxu0 %v532
  %739 = vmatprep.subr.bf16.mxu0 0
  %740 = vmatpush1.bf16.msra.mxu0 %v533
  %741 = vmatprep.subr.bf16.mxu0 0
  %742 = vmatpush1.bf16.msra.mxu0 %v534
  %743 = vmatprep.mubr.bf16.mxu0 %v186
  %744 = vmatmul.mubr.bf16.gmra.mrb[0].mxu0 %v185
  %v745 = vpop.f32.mrb[0].mxu0
  %v746 = vadd.f32 %v706, %v745
  %v747 = vpop.f32.mrb[0].mxu0
  %v748 = vpop.f32.mrb[0].mxu0
  %v749 = vpop.f32.mrb[0].mxu0
  %750 = vdwg.mxu0
  %751 = vmatprep.subr.bf16.mxu0 0
  %752 = vmatpush1.bf16.msra.mxu0 %v535
  %753 = vmatprep.subr.bf16.mxu0 0
  %754 = vmatpush1.bf16.msra.mxu0 %v536
  %755 = vmatprep.subr.bf16.mxu0 0
  %756 = vmatpush1.bf16.msra.mxu0 %v537
  %757 = vmatprep.subr.bf16.mxu0 0
  %758 = vmatpush1.bf16.msra.mxu0 %v538
  %759 = vmatprep.subr.bf16.mxu0 0
  %760 = vmatpush1.bf16.msra.mxu0 %v539
  %761 = vmatprep.subr.bf16.mxu0 0
  %762 = vmatpush1.bf16.msra.mxu0 %v540
  %763 = vmatprep.subr.bf16.mxu0 0
  %764 = vmatpush1.bf16.msra.mxu0 %v541
  %765 = vmatprep.subr.bf16.mxu0 0
  %766 = vmatpush1.bf16.msra.mxu0 %v542
  %767 = vmatprep.subr.bf16.mxu0 0
  %768 = vmatpush1.bf16.msra.mxu0 %v543
  %769 = vmatprep.subr.bf16.mxu0 0
  %770 = vmatpush1.bf16.msra.mxu0 %v544
  %771 = vmatprep.subr.bf16.mxu0 0
  %772 = vmatpush1.bf16.msra.mxu0 %v545
  %773 = vmatprep.subr.bf16.mxu0 0
  %774 = vmatpush1.bf16.msra.mxu0 %v546
  %775 = vmatprep.subr.bf16.mxu0 0
  %776 = vmatpush1.bf16.msra.mxu0 %v547
  %777 = vmatprep.subr.bf16.mxu0 0
  %778 = vmatpush1.bf16.msra.mxu0 %v548
  %779 = vmatprep.subr.bf16.mxu0 0
  %780 = vmatpush1.bf16.msra.mxu0 %v549
  %781 = vmatprep.subr.bf16.mxu0 0
  %782 = vmatpush1.bf16.msra.mxu0 %v550
  %783 = vmatprep.mubr.bf16.mxu0 %v188
  %784 = vmatmul.mubr.bf16.gmra.mrb[0].mxu0 %v187
  %v785 = vpop.f32.mrb[0].mxu0
  %v786 = vadd.f32 %v746, %v785
  %v787 = vpop.f32.mrb[0].mxu0
  %v788 = vpop.f32.mrb[0].mxu0
  %v789 = vpop.f32.mrb[0].mxu0
  %790 = vdwg.mxu0
  %791 = vmatprep.subr.bf16.mxu0 0
  %792 = vmatpush1.bf16.msra.mxu0 %v551
  %793 = vmatprep.subr.bf16.mxu0 0
  %794 = vmatpush1.bf16.msra.mxu0 %v552
  %795 = vmatprep.subr.bf16.mxu0 0
  %796 = vmatpush1.bf16.msra.mxu0 %v553
  %797 = vmatprep.subr.bf16.mxu0 0
  %798 = vmatpush1.bf16.msra.mxu0 %v554
  %799 = vmatprep.subr.bf16.mxu0 0
  %800 = vmatpush1.bf16.msra.mxu0 %v555
  %801 = vmatprep.subr.bf16.mxu0 0
  %802 = vmatpush1.bf16.msra.mxu0 %v556
  %803 = vmatprep.subr.bf16.mxu0 0
  %804 = vmatpush1.bf16.msra.mxu0 %v557
  %805 = vmatprep.subr.bf16.mxu0 0
  %806 = vmatpush1.bf16.msra.mxu0 %v558
  %807 = vmatprep.subr.bf16.mxu0 0
  %808 = vmatpush1.bf16.msra.mxu0 0
  %809 = vmatprep.subr.bf16.mxu0 0
  %810 = vmatpush1.bf16.msra.mxu0 0
  %811 = vmatprep.subr.bf16.mxu0 0
  %812 = vmatpush1.bf16.msra.mxu0 0
  %813 = vmatprep.subr.bf16.mxu0 0
  %814 = vmatpush1.bf16.msra.mxu0 0
  %815 = vmatprep.subr.bf16.mxu0 0
  %816 = vmatpush1.bf16.msra.mxu0 0
  %817 = vmatprep.subr.bf16.mxu0 0
  %818 = vmatpush1.bf16.msra.mxu0 0
  %819 = vmatprep.subr.bf16.mxu0 0
  %820 = vmatpush1.bf16.msra.mxu0 0
  %821 = vmatprep.subr.bf16.mxu0 0
  %822 = vmatpush1.bf16.msra.mxu0 0
  %823 = vmatprep.mubr.bf16.mxu0 0
  %824 = vmatmul.mubr.bf16.gmra.mrb[0].mxu0 %v189
  %v825 = vpop.f32.mrb[0].mxu0
  %v826 = vadd.f32 %v786, %v825
  %v827 = vpop.f32.mrb[0].mxu0
  %v828 = vpop.f32.mrb[0].mxu0
  %v829 = vpop.f32.mrb[0].mxu0
  %830 = vdwg.mxu0
  %v831 = vrot.slane %v826, 4
  %v832 = vadd.f32 %v826, %v831
  %v833 = vrot.slane %v832, 2
  %v834 = vadd.f32 %v832, %v833
  %v835 = vrot.slane %v834, 1
  %v836 = vadd.f32 %v834, %v835
  %v837 = vmul.f32 %v836, 0.125
  %v838 = vmul.f32 %v826, %v826
  %v839 = vrot.slane %v838, 4
  %v840 = vadd.f32 %v838, %v839
  %v841 = vrot.slane %v840, 2
  %v842 = vadd.f32 %v840, %v841
  %v843 = vrot.slane %v842, 1
  %v844 = vadd.f32 %v842, %v843
  %v845 = vmul.f32 %v844, 0.125
  %v846 = vmul.f32 %v837, %v837
  %v847 = vsub.f32 %v845, %v846
  %v848 = vsub.f32 %v826, %v837
  %v849 = vadd.f32 %v847, 1e-05
  %v850 = vrsqrt.pop %v849
  %v851 = vmul.f32 %v848, %v850
  %v852 = vld [vmem:[%s2] sm:$0x1]
  %v854 = vlaneseq
  %v855 = vshrl.u32 %v854, 7
  %v856 = vsub.s32 0, %v855
  %v857 = vrot.slane %v852, %v856
  %v859 = vmul.f32 %v851, %v857
  %v860 = vld [vmem:[%s3] sm:$0x1]
  %v862 = vlaneseq
  %v863 = vshrl.u32 %v862, 7
  %v864 = vsub.s32 0, %v863
  %v865 = vrot.slane %v860, %v864
  %v867 = vadd.f32 %v859, %v865
  %v868 = vmax.f32 %v867, 0.0
  %v869 = vpack.c.bf16 %v868, %v868
  %870 = vst [vmem:[%s4] sm:$0xf] %v869
  // Predicated region
  $region18: #{resnet_forward.11} parent=0 // pred_check
    _
  $region19: #{resnet_forward.11} parent=0 // pred_check_branch
    %872 = sbr.rel (0) target = $region21
  $region20: #{resnet_forward.11} parent=0 // pred_region
    _
  $region21: #{resnet_forward.11} parent=0 // pred_fallthru
    _
  // Predicated region
  $region22: #{resnet_forward.11} parent=0 // pred_check
    _
  $region23: #{resnet_forward.11} parent=0 // pred_check_branch
    %874 = sbr.rel (0) target = $region25
  $region24: #{resnet_forward.11} parent=0 // pred_region
    _
  $region25: #{resnet_forward.11} parent=0 // pred_fallthru
    _

// kernel: resnet_forward.12
$region0: #{resnet_forward.12}
  #allocation0 [shape = 'u32[]', space=smem, size = 0x4, offset = 0x4, fixed_abs, tag = 'smem constant byte address 0x4 - core index']
  #allocation1 [shape = 'u32[144,128]{1,0:T(1,128)}', space=vmem, size = 0x12000, scoped, tag = 'internal scratch']
  %s0 = inlined_call_operand.vmem [shape: bf16[8,1152], index: 0, kind: input, shape index: {}]
  %s1 = inlined_call_operand.vmem [shape: bf16[1152,128], index: 1, kind: input, shape index: {}]
  %s2 = inlined_call_operand.vmem [shape: f32[1,128], index: 2, kind: input, shape index: {}]
  %s3 = inlined_call_operand.vmem [shape: f32[1,128], index: 3, kind: input, shape index: {}]
  %s4 = inlined_call_operand.vmem [shape: bf16[8,128], index: 4, kind: input, shape index: {}]
  %s5 = inlined_call_operand.vmem [shape: bf16[128,128], index: 5, kind: input, shape index: {}]
  %s6 = inlined_call_operand.vmem [shape: f32[1,128], index: 6, kind: input, shape index: {}]
  %s7 = inlined_call_operand.vmem [shape: bf16[8,128], index: 7, kind: output, shape index: {}]
  %s8 = sld [smem:[#allocation0]]
  $region38: #{resnet_forward.12} parent=0
    _
  %s10 = ssub.s32 1, %s8
  %s11 = scalar_select 0, %s10, %s8
  // Predicated region
  $region2: #{resnet_forward.12} parent=0 // pred_check
    _
  $region3: #{resnet_forward.12} parent=0 // pred_check_branch
    %13 = sbr.rel (0) target = $region5
  $region4: #{resnet_forward.12} parent=0 // pred_region
    _
  $region5: #{resnet_forward.12} parent=0 // pred_fallthru
    _
  // Predicated region
  $region6: #{resnet_forward.12} parent=0 // pred_check
    _
  $region7: #{resnet_forward.12} parent=0 // pred_check_branch
    %15 = sbr.rel (0) target = $region9
  $region8: #{resnet_forward.12} parent=0 // pred_region
    _
  $region9: #{resnet_forward.12} parent=0 // pred_fallthru
    _
  // Predicated region
  $region10: #{resnet_forward.12} parent=0 // pred_check
    _
  $region11: #{resnet_forward.12} parent=0 // pred_check_branch
    %17 = sbr.rel (0) target = $region13
  $region12: #{resnet_forward.12} parent=0 // pred_region
    _
  $region13: #{resnet_forward.12} parent=0 // pred_fallthru
    _
  // Predicated region
  $region14: #{resnet_forward.12} parent=0 // pred_check
    _
  $region15: #{resnet_forward.12} parent=0 // pred_check_branch
    %19 = sbr.rel (0) target = $region17
  $region16: #{resnet_forward.12} parent=0 // pred_region
    _
  $region17: #{resnet_forward.12} parent=0 // pred_fallthru
    _
  // Predicated region
  $region18: #{resnet_forward.12} parent=0 // pred_check
    _
  $region19: #{resnet_forward.12} parent=0 // pred_check_branch
    %21 = sbr.rel (0) target = $region21
  $region20: #{resnet_forward.12} parent=0 // pred_region
    _
  $region21: #{resnet_forward.12} parent=0 // pred_fallthru
    _
  // Predicated region
  $region22: #{resnet_forward.12} parent=0 // pred_check
    _
  $region23: #{resnet_forward.12} parent=0 // pred_check_branch
    %23 = sbr.rel (0) target = $region25
  $region24: #{resnet_forward.12} parent=0 // pred_region
    _
  $region25: #{resnet_forward.12} parent=0 // pred_fallthru
    _
  // Predicated region
  $region26: #{resnet_forward.12} parent=0 // pred_check
    _
  $region27: #{resnet_forward.12} parent=0 // pred_check_branch
    %25 = sbr.rel (0) target = $region29
  $region28: #{resnet_forward.12} parent=0 // pred_region
    _
  $region29: #{resnet_forward.12} parent=0 // pred_fallthru
    _
  %v27 = vld [vmem:[%s0] sm:$0xff]
  %v28 = vld [vmem:[%s0 + $0x8] sm:$0xff]
  %v29 = vld [vmem:[%s0 + $0x10] sm:$0xff]
  %v30 = vld [vmem:[%s0 + $0x18] sm:$0xff]
  %v31 = vld [vmem:[%s0 + $0x20] sm:$0xf]
  %v32 = vld [vmem:[%s1] sm:$0xf]
  %v33 = vld [vmem:[%s1 + $0x4] sm:$0xf]
  %v34 = vld [vmem:[%s1 + $0x8] sm:$0xf]
  %v35 = vld [vmem:[%s1 + $0xc] sm:$0xf]
  %v36 = vld [vmem:[%s1 + $0x10] sm:$0xf]
  %v37 = vld [vmem:[%s1 + $0x14] sm:$0xf]
  %v38 = vld [vmem:[%s1 + $0x18] sm:$0xf]
  %v39 = vld [vmem:[%s1 + $0x1c] sm:$0xf]
  %v40 = vld [vmem:[%s1 + $0x20] sm:$0xf]
  %v41 = vld [vmem:[%s1 + $0x24] sm:$0xf]
  %v42 = vld [vmem:[%s1 + $0x28] sm:$0xf]
  %v43 = vld [vmem:[%s1 + $0x2c] sm:$0xf]
  %v44 = vld [vmem:[%s1 + $0x30] sm:$0xf]
  %v45 = vld [vmem:[%s1 + $0x34] sm:$0xf]
  %v46 = vld [vmem:[%s1 + $0x38] sm:$0xf]
  %v47 = vld [vmem:[%s1 + $0x3c] sm:$0xf]
  %v48 = vld [vmem:[%s1 + $0x40] sm:$0xf]
  %v49 = vld [vmem:[%s1 + $0x44] sm:$0xf]
  %v50 = vld [vmem:[%s1 + $0x48] sm:$0xf]
  %v51 = vld [vmem:[%s1 + $0x4c] sm:$0xf]
  %v52 = vld [vmem:[%s1 + $0x50] sm:$0xf]
  %v53 = vld [vmem:[%s1 + $0x54] sm:$0xf]
  %v54 = vld [vmem:[%s1 + $0x58] sm:$0xf]
  %v55 = vld [vmem:[%s1 + $0x5c] sm:$0xf]
  %v56 = vld [vmem:[%s1 + $0x60] sm:$0xf]
  %v57 = vld [vmem:[%s1 + $0x64] sm:$0xf]
  %v58 = vld [vmem:[%s1 + $0x68] sm:$0xf]
  %v59 = vld [vmem:[%s1 + $0x6c] sm:$0xf]
  %v60 = vld [vmem:[%s1 + $0x70] sm:$0xf]
  %v61 = vld [vmem:[%s1 + $0x74] sm:$0xf]
  %v62 = vld [vmem:[%s1 + $0x78] sm:$0xf]
  %v63 = vld [vmem:[%s1 + $0x7c] sm:$0xf]
  %v64 = vld [vmem:[%s1 + $0x80] sm:$0xf]
  %v65 = vld [vmem:[%s1 + $0x84] sm:$0xf]
  %v66 = vld [vmem:[%s1 + $0x88] sm:$0xf]
  %v67 = vld [vmem:[%s1 + $0x8c] sm:$0xf]
  %v68 = vld [vmem:[%s1 + $0x90] sm:$0xf]
  %v69 = vld [vmem:[%s1 + $0x94] sm:$0xf]
  %v70 = vld [vmem:[%s1 + $0x98] sm:$0xf]
  %v71 = vld [vmem:[%s1 + $0x9c] sm:$0xf]
  %v72 = vld [vmem:[%s1 + $0xa0] sm:$0xf]
  %v73 = vld [vmem:[%s1 + $0xa4] sm:$0xf]
  %v74 = vld [vmem:[%s1 + $0xa8] sm:$0xf]
  %v75 = vld [vmem:[%s1 + $0xac] sm:$0xf]
  %v76 = vld [vmem:[%s1 + $0xb0] sm:$0xf]
  %v77 = vld [vmem:[%s1 + $0xb4] sm:$0xf]
  %v78 = vld [vmem:[%s1 + $0xb8] sm:$0xf]
  %v79 = vld [vmem:[%s1 + $0xbc] sm:$0xf]
  %v80 = vld [vmem:[%s1 + $0xc0] sm:$0xf]
  %v81 = vld [vmem:[%s1 + $0xc4] sm:$0xf]
  %v82 = vld [vmem:[%s1 + $0xc8] sm:$0xf]
  %v83 = vld [vmem:[%s1 + $0xcc] sm:$0xf]
  %v84 = vld [vmem:[%s1 + $0xd0] sm:$0xf]
  %v85 = vld [vmem:[%s1 + $0xd4] sm:$0xf]
  %v86 = vld [vmem:[%s1 + $0xd8] sm:$0xf]
  %v87 = vld [vmem:[%s1 + $0xdc] sm:$0xf]
  %v88 = vld [vmem:[%s1 + $0xe0] sm:$0xf]
  %v89 = vld [vmem:[%s1 + $0xe4] sm:$0xf]
  %v90 = vld [vmem:[%s1 + $0xe8] sm:$0xf]
  %v91 = vld [vmem:[%s1 + $0xec] sm:$0xf]
  %v92 = vld [vmem:[%s1 + $0xf0] sm:$0xf]
  %v93 = vld [vmem:[%s1 + $0xf4] sm:$0xf]
  %v94 = vld [vmem:[%s1 + $0xf8] sm:$0xf]
  %v95 = vld [vmem:[%s1 + $0xfc] sm:$0xf]
  %v96 = vld [vmem:[%s1 + $0x100] sm:$0xf]
  %v97 = vld [vmem:[%s1 + $0x104] sm:$0xf]
  %v98 = vld [vmem:[%s1 + $0x108] sm:$0xf]
  %v99 = vld [vmem:[%s1 + $0x10c] sm:$0xf]
  %v100 = vld [vmem:[%s1 + $0x110] sm:$0xf]
  %v101 = vld [vmem:[%s1 + $0x114] sm:$0xf]
  %v102 = vld [vmem:[%s1 + $0x118] sm:$0xf]
  %v103 = vld [vmem:[%s1 + $0x11c] sm:$0xf]
  %v104 = vld [vmem:[%s1 + $0x120] sm:$0xf]
  %v105 = vld [vmem:[%s1 + $0x124] sm:$0xf]
  %v106 = vld [vmem:[%s1 + $0x128] sm:$0xf]
  %v107 = vld [vmem:[%s1 + $0x12c] sm:$0xf]
  %v108 = vld [vmem:[%s1 + $0x130] sm:$0xf]
  %v109 = vld [vmem:[%s1 + $0x134] sm:$0xf]
  %v110 = vld [vmem:[%s1 + $0x138] sm:$0xf]
  %v111 = vld [vmem:[%s1 + $0x13c] sm:$0xf]
  %v112 = vld [vmem:[%s1 + $0x140] sm:$0xf]
  %v113 = vld [vmem:[%s1 + $0x144] sm:$0xf]
  %v114 = vld [vmem:[%s1 + $0x148] sm:$0xf]
  %v115 = vld [vmem:[%s1 + $0x14c] sm:$0xf]
  %v116 = vld [vmem:[%s1 + $0x150] sm:$0xf]
  %v117 = vld [vmem:[%s1 + $0x154] sm:$0xf]
  %v118 = vld [vmem:[%s1 + $0x158] sm:$0xf]
  %v119 = vld [vmem:[%s1 + $0x15c] sm:$0xf]
  %v120 = vld [vmem:[%s1 + $0x160] sm:$0xf]
  %v121 = vld [vmem:[%s1 + $0x164] sm:$0xf]
  %v122 = vld [vmem:[%s1 + $0x168] sm:$0xf]
  %v123 = vld [vmem:[%s1 + $0x16c] sm:$0xf]
  %v124 = vld [vmem:[%s1 + $0x170] sm:$0xf]
  %v125 = vld [vmem:[%s1 + $0x174] sm:$0xf]
  %v126 = vld [vmem:[%s1 + $0x178] sm:$0xf]
  %v127 = vld [vmem:[%s1 + $0x17c] sm:$0xf]
  %v128 = vld [vmem:[%s1 + $0x180] sm:$0xf]
  %v129 = vld [vmem:[%s1 + $0x184] sm:$0xf]
  %v130 = vld [vmem:[%s1 + $0x188] sm:$0xf]
  %v131 = vld [vmem:[%s1 + $0x18c] sm:$0xf]
  %v132 = vld [vmem:[%s1 + $0x190] sm:$0xf]
  %v133 = vld [vmem:[%s1 + $0x194] sm:$0xf]
  %v134 = vld [vmem:[%s1 + $0x198] sm:$0xf]
  %v135 = vld [vmem:[%s1 + $0x19c] sm:$0xf]
  %v136 = vld [vmem:[%s1 + $0x1a0] sm:$0xf]
  %v137 = vld [vmem:[%s1 + $0x1a4] sm:$0xf]
  %v138 = vld [vmem:[%s1 + $0x1a8] sm:$0xf]
  %v139 = vld [vmem:[%s1 + $0x1ac] sm:$0xf]
  %v140 = vld [vmem:[%s1 + $0x1b0] sm:$0xf]
  %v141 = vld [vmem:[%s1 + $0x1b4] sm:$0xf]
  %v142 = vld [vmem:[%s1 + $0x1b8] sm:$0xf]
  %v143 = vld [vmem:[%s1 + $0x1bc] sm:$0xf]
  %v144 = vld [vmem:[%s1 + $0x1c0] sm:$0xf]
  %v145 = vld [vmem:[%s1 + $0x1c4] sm:$0xf]
  %v146 = vld [vmem:[%s1 + $0x1c8] sm:$0xf]
  %v147 = vld [vmem:[%s1 + $0x1cc] sm:$0xf]
  %v148 = vld [vmem:[%s1 + $0x1d0] sm:$0xf]
  %v149 = vld [vmem:[%s1 + $0x1d4] sm:$0xf]
  %v150 = vld [vmem:[%s1 + $0x1d8] sm:$0xf]
  %v151 = vld [vmem:[%s1 + $0x1dc] sm:$0xf]
  %v152 = vld [vmem:[%s1 + $0x1e0] sm:$0xf]
  %v153 = vld [vmem:[%s1 + $0x1e4] sm:$0xf]
  %v154 = vld [vmem:[%s1 + $0x1e8] sm:$0xf]
  %v155 = vld [vmem:[%s1 + $0x1ec] sm:$0xf]
  %v156 = vld [vmem:[%s1 + $0x1f0] sm:$0xf]
  %v157 = vld [vmem:[%s1 + $0x1f4] sm:$0xf]
  %v158 = vld [vmem:[%s1 + $0x1f8] sm:$0xf]
  %v159 = vld [vmem:[%s1 + $0x1fc] sm:$0xf]
  %v160 = vld [vmem:[%s1 + $0x200] sm:$0xf]
  %v161 = vld [vmem:[%s1 + $0x204] sm:$0xf]
  %v162 = vld [vmem:[%s1 + $0x208] sm:$0xf]
  %v163 = vld [vmem:[%s1 + $0x20c] sm:$0xf]
  %v164 = vld [vmem:[%s1 + $0x210] sm:$0xf]
  %v165 = vld [vmem:[%s1 + $0x214] sm:$0xf]
  %v166 = vld [vmem:[%s1 + $0x218] sm:$0xf]
  %v167 = vld [vmem:[%s1 + $0x21c] sm:$0xf]
  %v168 = vld [vmem:[%s1 + $0x220] sm:$0xf]
  %v169 = vld [vmem:[%s1 + $0x224] sm:$0xf]
  %v170 = vld [vmem:[%s1 + $0x228] sm:$0xf]
  %v171 = vld [vmem:[%s1 + $0x22c] sm:$0xf]
  %v172 = vld [vmem:[%s1 + $0x230] sm:$0xf]
  %v173 = vld [vmem:[%s1 + $0x234] sm:$0xf]
  %v174 = vld [vmem:[%s1 + $0x238] sm:$0xf]
  %v175 = vld [vmem:[%s1 + $0x23c] sm:$0xf]
  %v181 = vunpack.c.l.b16 %v27
  %v182 = vunpack.c.h.b16 %v27
  %v183 = vunpack.c.l.b16 %v28
  %v184 = vunpack.c.h.b16 %v28
  %v185 = vunpack.c.l.b16 %v29
  %v186 = vunpack.c.h.b16 %v29
  %v187 = vunpack.c.l.b16 %v30
  %v188 = vunpack.c.h.b16 %v30
  %v189 = vunpack.c.l.b16 %v31
  %v190 = vpack.c.b16 %v181, %v181
  %v191 = vpack.c.b16 %v182, %v182
  %v192 = vpack.c.b16 %v183, %v183
  %v193 = vpack.c.b16 %v184, %v184
  %v194 = vpack.c.b16 %v185, %v185
  %v195 = vpack.c.b16 %v186, %v186
  %v196 = vpack.c.b16 %v187, %v187
  %v197 = vpack.c.b16 %v188, %v188
  %v198 = vpack.c.b16 %v189, %v189
  %v352 = vunpack.c.l.b16 %v32
  %v353 = vunpack.c.l.b16 %v33
  %v354 = vunpack.c.l.b16 %v34
  %v355 = vunpack.c.l.b16 %v35
  %v356 = vunpack.c.l.b16 %v36
  %v357 = vunpack.c.l.b16 %v37
  %v358 = vunpack.c.l.b16 %v38
  %v359 = vunpack.c.l.b16 %v39
  %v360 = vunpack.c.l.b16 %v40
  %v361 = vunpack.c.l.b16 %v41
  %v362 = vunpack.c.l.b16 %v42
  %v363 = vunpack.c.l.b16 %v43
  %v364 = vunpack.c.l.b16 %v44
  %v365 = vunpack.c.l.b16 %v45
  %v366 = vunpack.c.l.b16 %v46
  %v367 = vunpack.c.l.b16 %v47
  %v368 = vunpack.c.l.b16 %v48
  %v369 = vunpack.c.l.b16 %v49
  %v370 = vunpack.c.l.b16 %v50
  %v371 = vunpack.c.l.b16 %v51
  %v372 = vunpack.c.l.b16 %v52
  %v373 = vunpack.c.l.b16 %v53
  %v374 = vunpack.c.l.b16 %v54
  %v375 = vunpack.c.l.b16 %v55
  %v376 = vunpack.c.l.b16 %v56
  %v377 = vunpack.c.l.b16 %v57
  %v378 = vunpack.c.l.b16 %v58
  %v379 = vunpack.c.l.b16 %v59
  %v380 = vunpack.c.l.b16 %v60
  %v381 = vunpack.c.l.b16 %v61
  %v382 = vunpack.c.l.b16 %v62
  %v383 = vunpack.c.l.b16 %v63
  %v384 = vunpack.c.l.b16 %v64
  %v385 = vunpack.c.l.b16 %v65
  %v386 = vunpack.c.l.b16 %v66
  %v387 = vunpack.c.l.b16 %v67
  %v388 = vunpack.c.l.b16 %v68
  %v389 = vunpack.c.l.b16 %v69
  %v390 = vunpack.c.l.b16 %v70
  %v391 = vunpack.c.l.b16 %v71
  %v392 = vunpack.c.l.b16 %v72
  %v393 = vunpack.c.l.b16 %v73
  %v394 = vunpack.c.l.b16 %v74
  %v395 = vunpack.c.l.b16 %v75
  %v396 = vunpack.c.l.b16 %v76
  %v397 = vunpack.c.l.b16 %v77
  %v398 = vunpack.c.l.b16 %v78
  %v399 = vunpack.c.l.b16 %v79
  %v400 = vunpack.c.l.b16 %v80
  %v401 = vunpack.c.l.b16 %v81
  %v402 = vunpack.c.l.b16 %v82
  %v403 = vunpack.c.l.b16 %v83
  %v404 = vunpack.c.l.b16 %v84
  %v405 = vunpack.c.l.b16 %v85
  %v406 = vunpack.c.l.b16 %v86
  %v407 = vunpack.c.l.b16 %v87
  %v408 = vunpack.c.l.b16 %v88
  %v409 = vunpack.c.l.b16 %v89
  %v410 = vunpack.c.l.b16 %v90
  %v411 = vunpack.c.l.b16 %v91
  %v412 = vunpack.c.l.b16 %v92
  %v413 = vunpack.c.l.b16 %v93
  %v414 = vunpack.c.l.b16 %v94
  %v415 = vunpack.c.l.b16 %v95
  %v416 = vunpack.c.l.b16 %v96
  %v417 = vunpack.c.l.b16 %v97
  %v418 = vunpack.c.l.b16 %v98
  %v419 = vunpack.c.l.b16 %v99
  %v420 = vunpack.c.l.b16 %v100
  %v421 = vunpack.c.l.b16 %v101
  %v422 = vunpack.c.l.b16 %v102
  %v423 = vunpack.c.l.b16 %v103
  %v424 = vunpack.c.l.b16 %v104
  %v425 = vunpack.c.l.b16 %v105
  %v426 = vunpack.c.l.b16 %v106
  %v427 = vunpack.c.l.b16 %v107
  %v428 = vunpack.c.l.b16 %v108
  %v429 = vunpack.c.l.b16 %v109
  %v430 = vunpack.c.l.b16 %v110
  %v431 = vunpack.c.l.b16 %v111
  %v432 = vunpack.c.l.b16 %v112
  %v433 = vunpack.c.l.b16 %v113
  %v434 = vunpack.c.l.b16 %v114
  %v435 = vunpack.c.l.b16 %v115
  %v436 = vunpack.c.l.b16 %v116
  %v437 = vunpack.c.l.b16 %v117
  %v438 = vunpack.c.l.b16 %v118
  %v439 = vunpack.c.l.b16 %v119
  %v440 = vunpack.c.l.b16 %v120
  %v441 = vunpack.c.l.b16 %v121
  %v442 = vunpack.c.l.b16 %v122
  %v443 = vunpack.c.l.b16 %v123
  %v444 = vunpack.c.l.b16 %v124
  %v445 = vunpack.c.l.b16 %v125
  %v446 = vunpack.c.l.b16 %v126
  %v447 = vunpack.c.l.b16 %v127
  %v448 = vunpack.c.l.b16 %v128
  %v449 = vunpack.c.l.b16 %v129
  %v450 = vunpack.c.l.b16 %v130
  %v451 = vunpack.c.l.b16 %v131
  %v452 = vunpack.c.l.b16 %v132
  %v453 = vunpack.c.l.b16 %v133
  %v454 = vunpack.c.l.b16 %v134
  %v455 = vunpack.c.l.b16 %v135
  %v456 = vunpack.c.l.b16 %v136
  %v457 = vunpack.c.l.b16 %v137
  %v458 = vunpack.c.l.b16 %v138
  %v459 = vunpack.c.l.b16 %v139
  %v460 = vunpack.c.l.b16 %v140
  %v461 = vunpack.c.l.b16 %v141
  %v462 = vunpack.c.l.b16 %v142
  %v463 = vunpack.c.l.b16 %v143
  %v464 = vunpack.c.l.b16 %v144
  %v465 = vunpack.c.l.b16 %v145
  %v466 = vunpack.c.l.b16 %v146
  %v467 = vunpack.c.l.b16 %v147
  %v468 = vunpack.c.l.b16 %v148
  %v469 = vunpack.c.l.b16 %v149
  %v470 = vunpack.c.l.b16 %v150
  %v471 = vunpack.c.l.b16 %v151
  %v472 = vunpack.c.l.b16 %v152
  %v473 = vunpack.c.l.b16 %v153
  %v474 = vunpack.c.l.b16 %v154
  %v475 = vunpack.c.l.b16 %v155
  %v476 = vunpack.c.l.b16 %v156
  %v477 = vunpack.c.l.b16 %v157
  %v478 = vunpack.c.l.b16 %v158
  %v479 = vunpack.c.l.b16 %v159
  %v480 = vunpack.c.l.b16 %v160
  %v481 = vunpack.c.l.b16 %v161
  %v482 = vunpack.c.l.b16 %v162
  %v483 = vunpack.c.l.b16 %v163
  %v484 = vunpack.c.l.b16 %v164
  %v485 = vunpack.c.l.b16 %v165
  %v486 = vunpack.c.l.b16 %v166
  %v487 = vunpack.c.l.b16 %v167
  %v488 = vunpack.c.l.b16 %v168
  %v489 = vunpack.c.l.b16 %v169
  %v490 = vunpack.c.l.b16 %v170
  %v491 = vunpack.c.l.b16 %v171
  %v492 = vunpack.c.l.b16 %v172
  %v493 = vunpack.c.l.b16 %v173
  %v494 = vunpack.c.l.b16 %v174
  %v495 = vunpack.c.l.b16 %v175
  %v496 = vpack.c.b16 %v353, %v352
  %v497 = vpack.c.b16 %v355, %v354
  %v498 = vpack.c.b16 %v357, %v356
  %v499 = vpack.c.b16 %v359, %v358
  %v500 = vpack.c.b16 %v361, %v360
  %v501 = vpack.c.b16 %v363, %v362
  %v502 = vpack.c.b16 %v365, %v364
  %v503 = vpack.c.b16 %v367, %v366
  %v504 = vpack.c.b16 %v369, %v368
  %v505 = vpack.c.b16 %v371, %v370
  %v506 = vpack.c.b16 %v373, %v372
  %v507 = vpack.c.b16 %v375, %v374
  %v508 = vpack.c.b16 %v377, %v376
  %v509 = vpack.c.b16 %v379, %v378
  %v510 = vpack.c.b16 %v381, %v380
  %v511 = vpack.c.b16 %v383, %v382
  %v512 = vpack.c.b16 %v385, %v384
  %v513 = vpack.c.b16 %v387, %v386
  %v514 = vpack.c.b16 %v389, %v388
  %v515 = vpack.c.b16 %v391, %v390
  %v516 = vpack.c.b16 %v393, %v392
  %v517 = vpack.c.b16 %v395, %v394
  %v518 = vpack.c.b16 %v397, %v396
  %v519 = vpack.c.b16 %v399, %v398
  %v520 = vpack.c.b16 %v401, %v400
  %v521 = vpack.c.b16 %v403, %v402
  %v522 = vpack.c.b16 %v405, %v404
  %v523 = vpack.c.b16 %v407, %v406
  %v524 = vpack.c.b16 %v409, %v408
  %v525 = vpack.c.b16 %v411, %v410
  %v526 = vpack.c.b16 %v413, %v412
  %v527 = vpack.c.b16 %v415, %v414
  %v528 = vpack.c.b16 %v417, %v416
  %v529 = vpack.c.b16 %v419, %v418
  %v530 = vpack.c.b16 %v421, %v420
  %v531 = vpack.c.b16 %v423, %v422
  %v532 = vpack.c.b16 %v425, %v424
  %v533 = vpack.c.b16 %v427, %v426
  %v534 = vpack.c.b16 %v429, %v428
  %v535 = vpack.c.b16 %v431, %v430
  %v536 = vpack.c.b16 %v433, %v432
  %v537 = vpack.c.b16 %v435, %v434
  %v538 = vpack.c.b16 %v437, %v436
  %v539 = vpack.c.b16 %v439, %v438
  %v540 = vpack.c.b16 %v441, %v440
  %v541 = vpack.c.b16 %v443, %v442
  %v542 = vpack.c.b16 %v445, %v444
  %v543 = vpack.c.b16 %v447, %v446
  %v544 = vpack.c.b16 %v449, %v448
  %v545 = vpack.c.b16 %v451, %v450
  %v546 = vpack.c.b16 %v453, %v452
  %v547 = vpack.c.b16 %v455, %v454
  %v548 = vpack.c.b16 %v457, %v456
  %v549 = vpack.c.b16 %v459, %v458
  %v550 = vpack.c.b16 %v461, %v460
  %v551 = vpack.c.b16 %v463, %v462
  %v552 = vpack.c.b16 %v465, %v464
  %v553 = vpack.c.b16 %v467, %v466
  %v554 = vpack.c.b16 %v469, %v468
  %v555 = vpack.c.b16 %v471, %v470
  %v556 = vpack.c.b16 %v473, %v472
  %v557 = vpack.c.b16 %v475, %v474
  %v558 = vpack.c.b16 %v477, %v476
  %v559 = vpack.c.b16 %v479, %v478
  %v560 = vpack.c.b16 %v481, %v480
  %v561 = vpack.c.b16 %v483, %v482
  %v562 = vpack.c.b16 %v485, %v484
  %v563 = vpack.c.b16 %v487, %v486
  %v564 = vpack.c.b16 %v489, %v488
  %v565 = vpack.c.b16 %v491, %v490
  %v566 = vpack.c.b16 %v493, %v492
  %v567 = vpack.c.b16 %v495, %v494
  %640 = vmatprep.subr.bf16.mxu0 0
  %641 = vmatpush1.bf16.msra.mxu0 %v496
  %642 = vmatprep.subr.bf16.mxu0 0
  %643 = vmatpush1.bf16.msra.mxu0 %v497
  %644 = vmatprep.subr.bf16.mxu0 0
  %645 = vmatpush1.bf16.msra.mxu0 %v498
  %646 = vmatprep.subr.bf16.mxu0 0
  %647 = vmatpush1.bf16.msra.mxu0 %v499
  %648 = vmatprep.subr.bf16.mxu0 0
  %649 = vmatpush1.bf16.msra.mxu0 %v500
  %650 = vmatprep.subr.bf16.mxu0 0
  %651 = vmatpush1.bf16.msra.mxu0 %v501
  %652 = vmatprep.subr.bf16.mxu0 0
  %653 = vmatpush1.bf16.msra.mxu0 %v502
  %654 = vmatprep.subr.bf16.mxu0 0
  %655 = vmatpush1.bf16.msra.mxu0 %v503
  %656 = vmatprep.subr.bf16.mxu0 0
  %657 = vmatpush1.bf16.msra.mxu0 %v504
  %658 = vmatprep.subr.bf16.mxu0 0
  %659 = vmatpush1.bf16.msra.mxu0 %v505
  %660 = vmatprep.subr.bf16.mxu0 0
  %661 = vmatpush1.bf16.msra.mxu0 %v506
  %662 = vmatprep.subr.bf16.mxu0 0
  %663 = vmatpush1.bf16.msra.mxu0 %v507
  %664 = vmatprep.subr.bf16.mxu0 0
  %665 = vmatpush1.bf16.msra.mxu0 %v508
  %666 = vmatprep.subr.bf16.mxu0 0
  %667 = vmatpush1.bf16.msra.mxu0 %v509
  %668 = vmatprep.subr.bf16.mxu0 0
  %669 = vmatpush1.bf16.msra.mxu0 %v510
  %670 = vmatprep.subr.bf16.mxu0 0
  %671 = vmatpush1.bf16.msra.mxu0 %v511
  %672 = vmatprep.mubr.bf16.mxu0 %v191
  %673 = vmatmul.mubr.bf16.gmra.mrb[0].mxu0 %v190
  %v674 = vpop.f32.mrb[0].mxu0
  %v675 = vadd.f32 0.0, %v674
  %v676 = vpop.f32.mrb[0].mxu0
  %v677 = vpop.f32.mrb[0].mxu0
  %v678 = vpop.f32.mrb[0].mxu0
  %679 = vdwg.mxu0
  %680 = vmatprep.subr.bf16.mxu0 0
  %681 = vmatpush1.bf16.msra.mxu0 %v512
  %682 = vmatprep.subr.bf16.mxu0 0
  %683 = vmatpush1.bf16.msra.mxu0 %v513
  %684 = vmatprep.subr.bf16.mxu0 0
  %685 = vmatpush1.bf16.msra.mxu0 %v514
  %686 = vmatprep.subr.bf16.mxu0 0
  %687 = vmatpush1.bf16.msra.mxu0 %v515
  %688 = vmatprep.subr.bf16.mxu0 0
  %689 = vmatpush1.bf16.msra.mxu0 %v516
  %690 = vmatprep.subr.bf16.mxu0 0
  %691 = vmatpush1.bf16.msra.mxu0 %v517
  %692 = vmatprep.subr.bf16.mxu0 0
  %693 = vmatpush1.bf16.msra.mxu0 %v518
  %694 = vmatprep.subr.bf16.mxu0 0
  %695 = vmatpush1.bf16.msra.mxu0 %v519
  %696 = vmatprep.subr.bf16.mxu0 0
  %697 = vmatpush1.bf16.msra.mxu0 %v520
  %698 = vmatprep.subr.bf16.mxu0 0
  %699 = vmatpush1.bf16.msra.mxu0 %v521
  %700 = vmatprep.subr.bf16.mxu0 0
  %701 = vmatpush1.bf16.msra.mxu0 %v522
  %702 = vmatprep.subr.bf16.mxu0 0
  %703 = vmatpush1.bf16.msra.mxu0 %v523
  %704 = vmatprep.subr.bf16.mxu0 0
  %705 = vmatpush1.bf16.msra.mxu0 %v524
  %706 = vmatprep.subr.bf16.mxu0 0
  %707 = vmatpush1.bf16.msra.mxu0 %v525
  %708 = vmatprep.subr.bf16.mxu0 0
  %709 = vmatpush1.bf16.msra.mxu0 %v526
  %710 = vmatprep.subr.bf16.mxu0 0
  %711 = vmatpush1.bf16.msra.mxu0 %v527
  %712 = vmatprep.mubr.bf16.mxu0 %v193
  %713 = vmatmul.mubr.bf16.gmra.mrb[0].mxu0 %v192
  %v714 = vpop.f32.mrb[0].mxu0
  %v715 = vadd.f32 %v675, %v714
  %v716 = vpop.f32.mrb[0].mxu0
  %v717 = vpop.f32.mrb[0].mxu0
  %v718 = vpop.f32.mrb[0].mxu0
  %719 = vdwg.mxu0
  %720 = vmatprep.subr.bf16.mxu0 0
  %721 = vmatpush1.bf16.msra.mxu0 %v528
  %722 = vmatprep.subr.bf16.mxu0 0
  %723 = vmatpush1.bf16.msra.mxu0 %v529
  %724 = vmatprep.subr.bf16.mxu0 0
  %725 = vmatpush1.bf16.msra.mxu0 %v530
  %726 = vmatprep.subr.bf16.mxu0 0
  %727 = vmatpush1.bf16.msra.mxu0 %v531
  %728 = vmatprep.subr.bf16.mxu0 0
  %729 = vmatpush1.bf16.msra.mxu0 %v532
  %730 = vmatprep.subr.bf16.mxu0 0
  %731 = vmatpush1.bf16.msra.mxu0 %v533
  %732 = vmatprep.subr.bf16.mxu0 0
  %733 = vmatpush1.bf16.msra.mxu0 %v534
  %734 = vmatprep.subr.bf16.mxu0 0
  %735 = vmatpush1.bf16.msra.mxu0 %v535
  %736 = vmatprep.subr.bf16.mxu0 0
  %737 = vmatpush1.bf16.msra.mxu0 %v536
  %738 = vmatprep.subr.bf16.mxu0 0
  %739 = vmatpush1.bf16.msra.mxu0 %v537
  %740 = vmatprep.subr.bf16.mxu0 0
  %741 = vmatpush1.bf16.msra.mxu0 %v538
  %742 = vmatprep.subr.bf16.mxu0 0
  %743 = vmatpush1.bf16.msra.mxu0 %v539
  %744 = vmatprep.subr.bf16.mxu0 0
  %745 = vmatpush1.bf16.msra.mxu0 %v540
  %746 = vmatprep.subr.bf16.mxu0 0
  %747 = vmatpush1.bf16.msra.mxu0 %v541
  %748 = vmatprep.subr.bf16.mxu0 0
  %749 = vmatpush1.bf16.msra.mxu0 %v542
  %750 = vmatprep.subr.bf16.mxu0 0
  %751 = vmatpush1.bf16.msra.mxu0 %v543
  %752 = vmatprep.mubr.bf16.mxu0 %v195
  %753 = vmatmul.mubr.bf16.gmra.mrb[0].mxu0 %v194
  %v754 = vpop.f32.mrb[0].mxu0
  %v755 = vadd.f32 %v715, %v754
  %v756 = vpop.f32.mrb[0].mxu0
  %v757 = vpop.f32.mrb[0].mxu0
  %v758 = vpop.f32.mrb[0].mxu0
  %759 = vdwg.mxu0
  %760 = vmatprep.subr.bf16.mxu0 0
  %761 = vmatpush1.bf16.msra.mxu0 %v544
  %762 = vmatprep.subr.bf16.mxu0 0
  %763 = vmatpush1.bf16.msra.mxu0 %v545
  %764 = vmatprep.subr.bf16.mxu0 0
  %765 = vmatpush1.bf16.msra.mxu0 %v546
  %766 = vmatprep.subr.bf16.mxu0 0
  %767 = vmatpush1.bf16.msra.mxu0 %v547
  %768 = vmatprep.subr.bf16.mxu0 0
  %769 = vmatpush1.bf16.msra.mxu0 %v548
  %770 = vmatprep.subr.bf16.mxu0 0
  %771 = vmatpush1.bf16.msra.mxu0 %v549
  %772 = vmatprep.subr.bf16.mxu0 0
  %773 = vmatpush1.bf16.msra.mxu0 %v550
  %774 = vmatprep.subr.bf16.mxu0 0
  %775 = vmatpush1.bf16.msra.mxu0 %v551
  %776 = vmatprep.subr.bf16.mxu0 0
  %777 = vmatpush1.bf16.msra.mxu0 %v552
  %778 = vmatprep.subr.bf16.mxu0 0
  %779 = vmatpush1.bf16.msra.mxu0 %v553
  %780 = vmatprep.subr.bf16.mxu0 0
  %781 = vmatpush1.bf16.msra.mxu0 %v554
  %782 = vmatprep.subr.bf16.mxu0 0
  %783 = vmatpush1.bf16.msra.mxu0 %v555
  %784 = vmatprep.subr.bf16.mxu0 0
  %785 = vmatpush1.bf16.msra.mxu0 %v556
  %786 = vmatprep.subr.bf16.mxu0 0
  %787 = vmatpush1.bf16.msra.mxu0 %v557
  %788 = vmatprep.subr.bf16.mxu0 0
  %789 = vmatpush1.bf16.msra.mxu0 %v558
  %790 = vmatprep.subr.bf16.mxu0 0
  %791 = vmatpush1.bf16.msra.mxu0 %v559
  %792 = vmatprep.mubr.bf16.mxu0 %v197
  %793 = vmatmul.mubr.bf16.gmra.mrb[0].mxu0 %v196
  %v794 = vpop.f32.mrb[0].mxu0
  %v795 = vadd.f32 %v755, %v794
  %v796 = vpop.f32.mrb[0].mxu0
  %v797 = vpop.f32.mrb[0].mxu0
  %v798 = vpop.f32.mrb[0].mxu0
  %799 = vdwg.mxu0
  %800 = vmatprep.subr.bf16.mxu0 0
  %801 = vmatpush1.bf16.msra.mxu0 %v560
  %802 = vmatprep.subr.bf16.mxu0 0
  %803 = vmatpush1.bf16.msra.mxu0 %v561
  %804 = vmatprep.subr.bf16.mxu0 0
  %805 = vmatpush1.bf16.msra.mxu0 %v562
  %806 = vmatprep.subr.bf16.mxu0 0
  %807 = vmatpush1.bf16.msra.mxu0 %v563
  %808 = vmatprep.subr.bf16.mxu0 0
  %809 = vmatpush1.bf16.msra.mxu0 %v564
  %810 = vmatprep.subr.bf16.mxu0 0
  %811 = vmatpush1.bf16.msra.mxu0 %v565
  %812 = vmatprep.subr.bf16.mxu0 0
  %813 = vmatpush1.bf16.msra.mxu0 %v566
  %814 = vmatprep.subr.bf16.mxu0 0
  %815 = vmatpush1.bf16.msra.mxu0 %v567
  %816 = vmatprep.subr.bf16.mxu0 0
  %817 = vmatpush1.bf16.msra.mxu0 0
  %818 = vmatprep.subr.bf16.mxu0 0
  %819 = vmatpush1.bf16.msra.mxu0 0
  %820 = vmatprep.subr.bf16.mxu0 0
  %821 = vmatpush1.bf16.msra.mxu0 0
  %822 = vmatprep.subr.bf16.mxu0 0
  %823 = vmatpush1.bf16.msra.mxu0 0
  %824 = vmatprep.subr.bf16.mxu0 0
  %825 = vmatpush1.bf16.msra.mxu0 0
  %826 = vmatprep.subr.bf16.mxu0 0
  %827 = vmatpush1.bf16.msra.mxu0 0
  %828 = vmatprep.subr.bf16.mxu0 0
  %829 = vmatpush1.bf16.msra.mxu0 0
  %830 = vmatprep.subr.bf16.mxu0 0
  %831 = vmatpush1.bf16.msra.mxu0 0
  %832 = vmatprep.mubr.bf16.mxu0 0
  %833 = vmatmul.mubr.bf16.gmra.mrb[0].mxu0 %v198
  %v834 = vpop.f32.mrb[0].mxu0
  %v835 = vadd.f32 %v795, %v834
  %v836 = vpop.f32.mrb[0].mxu0
  %v837 = vpop.f32.mrb[0].mxu0
  %v838 = vpop.f32.mrb[0].mxu0
  %839 = vdwg.mxu0
  %v840 = vrot.slane %v835, 4
  %v841 = vadd.f32 %v835, %v840
  %v842 = vrot.slane %v841, 2
  %v843 = vadd.f32 %v841, %v842
  %v844 = vrot.slane %v843, 1
  %v845 = vadd.f32 %v843, %v844
  %v846 = vmul.f32 %v845, 0.125
  %v847 = vmul.f32 %v835, %v835
  %v848 = vrot.slane %v847, 4
  %v849 = vadd.f32 %v847, %v848
  %v850 = vrot.slane %v849, 2
  %v851 = vadd.f32 %v849, %v850
  %v852 = vrot.slane %v851, 1
  %v853 = vadd.f32 %v851, %v852
  %v854 = vmul.f32 %v853, 0.125
  %v855 = vmul.f32 %v846, %v846
  %v856 = vsub.f32 %v854, %v855
  %v857 = vsub.f32 %v835, %v846
  %v858 = vadd.f32 %v856, 1e-05
  %v859 = vrsqrt.pop %v858
  %v860 = vmul.f32 %v857, %v859
  %v861 = vld [vmem:[%s2] sm:$0x1]
  %v863 = vlaneseq
  %v864 = vshrl.u32 %v863, 7
  %v865 = vsub.s32 0, %v864
  %v866 = vrot.slane %v861, %v865
  %v868 = vmul.f32 %v860, %v866
  %v869 = vld [vmem:[%s3] sm:$0x1]
  %v871 = vlaneseq
  %v872 = vshrl.u32 %v871, 7
  %v873 = vsub.s32 0, %v872
  %v874 = vrot.slane %v869, %v873
  %v876 = vadd.f32 %v868, %v874
  %v877 = vld [vmem:[%s4] sm:$0xf]
  %v878 = vld [vmem:[%s5] sm:$0xf]
  %v879 = vld [vmem:[%s5 + $0x4] sm:$0xf]
  %v880 = vld [vmem:[%s5 + $0x8] sm:$0xf]
  %v881 = vld [vmem:[%s5 + $0xc] sm:$0xf]
  %v882 = vld [vmem:[%s5 + $0x10] sm:$0xf]
  %v883 = vld [vmem:[%s5 + $0x14] sm:$0xf]
  %v884 = vld [vmem:[%s5 + $0x18] sm:$0xf]
  %v885 = vld [vmem:[%s5 + $0x1c] sm:$0xf]
  %v886 = vld [vmem:[%s5 + $0x20] sm:$0xf]
  %v887 = vld [vmem:[%s5 + $0x24] sm:$0xf]
  %v888 = vld [vmem:[%s5 + $0x28] sm:$0xf]
  %v889 = vld [vmem:[%s5 + $0x2c] sm:$0xf]
  %v890 = vld [vmem:[%s5 + $0x30] sm:$0xf]
  %v891 = vld [vmem:[%s5 + $0x34] sm:$0xf]
  %v892 = vld [vmem:[%s5 + $0x38] sm:$0xf]
  %v893 = vld [vmem:[%s5 + $0x3c] sm:$0xf]
  %v894 = vld [vmem:[%s6] sm:$0x1]
  %v896 = vlaneseq
  %v897 = vshrl.u32 %v896, 7
  %v898 = vsub.s32 0, %v897
  %v899 = vrot.slane %v894, %v898
  %v917 = vunpack.c.l.b16 %v878
  %v918 = vunpack.c.l.b16 %v879
  %v919 = vunpack.c.l.b16 %v880
  %v920 = vunpack.c.l.b16 %v881
  %v921 = vunpack.c.l.b16 %v882
  %v922 = vunpack.c.l.b16 %v883
  %v923 = vunpack.c.l.b16 %v884
  %v924 = vunpack.c.l.b16 %v885
  %v925 = vunpack.c.l.b16 %v886
  %v926 = vunpack.c.l.b16 %v887
  %v927 = vunpack.c.l.b16 %v888
  %v928 = vunpack.c.l.b16 %v889
  %v929 = vunpack.c.l.b16 %v890
  %v930 = vunpack.c.l.b16 %v891
  %v931 = vunpack.c.l.b16 %v892
  %v932 = vunpack.c.l.b16 %v893
  %v933 = vpack.c.b16 %v918, %v917
  %v934 = vpack.c.b16 %v920, %v919
  %v935 = vpack.c.b16 %v922, %v921
  %v936 = vpack.c.b16 %v924, %v923
  %v937 = vpack.c.b16 %v926, %v925
  %v938 = vpack.c.b16 %v928, %v927
  %v939 = vpack.c.b16 %v930, %v929
  %v940 = vpack.c.b16 %v932, %v931
  %949 = vmatprep.subr.bf16.mxu0 0
  %950 = vmatpush1.bf16.msra.mxu0 %v933
  %951 = vmatprep.subr.bf16.mxu0 0
  %952 = vmatpush1.bf16.msra.mxu0 %v934
  %953 = vmatprep.subr.bf16.mxu0 0
  %954 = vmatpush1.bf16.msra.mxu0 %v935
  %955 = vmatprep.subr.bf16.mxu0 0
  %956 = vmatpush1.bf16.msra.mxu0 %v936
  %957 = vmatprep.subr.bf16.mxu0 0
  %958 = vmatpush1.bf16.msra.mxu0 %v937
  %959 = vmatprep.subr.bf16.mxu0 0
  %960 = vmatpush1.bf16.msra.mxu0 %v938
  %961 = vmatprep.subr.bf16.mxu0 0
  %962 = vmatpush1.bf16.msra.mxu0 %v939
  %963 = vmatprep.subr.bf16.mxu0 0
  %964 = vmatpush1.bf16.msra.mxu0 %v940
  %965 = vmatprep.subr.bf16.mxu0 0
  %966 = vmatpush1.bf16.msra.mxu0 0
  %967 = vmatprep.subr.bf16.mxu0 0
  %968 = vmatpush1.bf16.msra.mxu0 0
  %969 = vmatprep.subr.bf16.mxu0 0
  %970 = vmatpush1.bf16.msra.mxu0 0
  %971 = vmatprep.subr.bf16.mxu0 0
  %972 = vmatpush1.bf16.msra.mxu0 0
  %973 = vmatprep.subr.bf16.mxu0 0
  %974 = vmatpush1.bf16.msra.mxu0 0
  %975 = vmatprep.subr.bf16.mxu0 0
  %976 = vmatpush1.bf16.msra.mxu0 0
  %977 = vmatprep.subr.bf16.mxu0 0
  %978 = vmatpush1.bf16.msra.mxu0 0
  %979 = vmatprep.subr.bf16.mxu0 0
  %980 = vmatpush1.bf16.msra.mxu0 0
  %981 = vmatprep.mubr.bf16.mxu0 0
  %982 = vmatmul.mubr.bf16.gmra.mrb[0].mxu0 %v877
  %v983 = vpop.f32.mrb[0].mxu0
  %v984 = vadd.f32 %v899, %v983
  %v985 = vpop.f32.mrb[0].mxu0
  %v986 = vpop.f32.mrb[0].mxu0
  %v987 = vpop.f32.mrb[0].mxu0
  %988 = vdwg.mxu0
  %v989 = vadd.f32 %v876, %v984
  %v990 = vmax.f32 %v989, 0.0
  %v991 = vpack.c.bf16 %v990, %v990
  %992 = vst [vmem:[%s7] sm:$0xf] %v991
  // Predicated region
  $region30: #{resnet_forward.12} parent=0 // pred_check
    _
  $region31: #{resnet_forward.12} parent=0 // pred_check_branch
    %994 = sbr.rel (0) target = $region33
  $region32: #{resnet_forward.12} parent=0 // pred_region
    _
  $region33: #{resnet_forward.12} parent=0 // pred_fallthru
    _
  // Predicated region
  $region34: #{resnet_forward.12} parent=0 // pred_check
    _
  $region35: #{resnet_forward.12} parent=0 // pred_check_branch
    %996 = sbr.rel (0) target = $region37
  $region36: #{resnet_forward.12} parent=0 // pred_region
    _
  $region37: #{resnet_forward.12} parent=0 // pred_fallthru
    _

</llo_original>
